<compile_context>
chip_gen: v6e
topology: v6e:2x2x1
jax: 0.10.0
libtpu: 0.0.40
codegen_flags: <defaults>
</compile_context>

<pallas_src>
import functools
import math
from typing import NamedTuple

import jax
import jax.numpy as jnp
from jax.experimental import pallas as pl
from jax.experimental.pallas import tpu as pltpu


def _round_up(x, m):
    return ((x + m - 1) // m) * m


class _Cfg(NamedTuple):
    chunk: int
    rank: int
    num_embs: int
    emb_size: int
    d0: int
    d1: int
    dbias: int
    d0_pad: int
    d1_pad: int
    dbias_pad: int
    td0: int
    td1: int
    t: int
    use_bf16: bool


def _lora_hypnet_kernel(ids_ref,       # scalar prefetch: (B_pad,) int32 in SMEM
                        emb_tbl_ref,   # (C, E)      resident VMEM
                        wcat_ref,      # (E, T)      resident VMEM (bias | W2 | W1 blocks)
                        bcat_ref,      # (1, T) f32  resident VMEM
                        w_out_ref,     # (CHUNK, tD0, tD1) f32 output tile
                        b_out_ref,     # (CHUNK, DBIAS_pad) f32 output (per chunk)
                        emb_sc,        # (CHUNK, E) scratch
                        f_sc,          # (CHUNK, T) f32 scratch (fused projection)
                        *, cfg):
    chunk, rank = cfg.chunk, cfg.rank
    off2 = cfg.dbias_pad                        # start of w2 rank-major blocks
    off1 = cfg.dbias_pad + rank * cfg.d1_pad    # start of w1 rank-major blocks

    c = pl.program_id(0)
    i0 = pl.program_id(1)
    i1 = pl.program_id(2)

    # ---- once per batch chunk: gather embeddings + single fused projection ----
    @pl.when((i0 == 0) & (i1 == 0))
    def _():
        base = c * chunk
        for j in range(chunk):                                  # static unroll (chunk small)
            idx = ids_ref[base + j]                             # scalar read from SMEM
            emb_sc[pl.ds(j, 1), :] = emb_tbl_ref[pl.ds(idx, 1), :]
        f = jnp.dot(emb_sc[...], wcat_ref[...],
                    preferred_element_type=jnp.float32) + bcat_ref[...]
        f_sc[...] = f
        # bias output block is resident across all (i0, i1) tiles; write it once.
        b_out_ref[...] = f[:, :cfg.dbias_pad].astype(b_out_ref.dtype)

    # ---- every (i0, i1) tile: low-rank contraction on the MXU ----
    a_parts, c_parts = [], []
    for r in range(rank):                                       # static unroll over rank
        a_off = pl.multiple_of(off1 + r * cfg.d0_pad + i0 * cfg.td0, 128)
        c_off = pl.multiple_of(off2 + r * cfg.d1_pad + i1 * cfg.td1, 128)
        a_parts.append(f_sc[:, pl.ds(a_off, cfg.td0)][:, :, None])   # (chunk, td0, 1)
        c_parts.append(f_sc[:, pl.ds(c_off, cfg.td1)][:, None, :])   # (chunk, 1, td1)
    lhs = jnp.concatenate(a_parts, axis=2)                      # (chunk, td0, rank)
    rhs = jnp.concatenate(c_parts, axis=1)                      # (chunk, rank, td1)
    if cfg.use_bf16:
        lhs = lhs.astype(jnp.bfloat16)
        rhs = rhs.astype(jnp.bfloat16)
    w_tile = jnp.einsum("bdr,bre->bde", lhs, rhs,
                        preferred_element_type=jnp.float32)     # MXU batched matmul, K=rank
    w_out_ref[...] = w_tile.astype(w_out_ref.dtype)


def pack_lora_hypnet_params(params, *, param_shapes, rank, chunk=8,
                            use_bf16=False, max_tile_d0=256, max_tile_d1=512):
    """One-time host-side restructuring of the hypernet params (cache the result)."""
    assert chunk % 8 == 0
    assert max_tile_d0 % 128 == 0 and max_tile_d1 % 128 == 0
    d0, d1 = param_shapes[0]
    dbias = param_shapes[1][0]

    f32 = jnp.float32
    emb = jnp.asarray(params["emb"], f32)
    num_embs, e = emb.shape

    td0 = min(_round_up(d0, 128), max_tile_d0)
    td1 = min(_round_up(d1, 128), max_tile_d1)
    d0_pad = _round_up(d0, td0)
    d1_pad = _round_up(d1, td1)
    dbias_pad = _round_up(dbias, 128)
    t = dbias_pad + rank * d1_pad + rank * d0_pad

    Wb = jnp.asarray(params["Wb"], f32)
    bb = jnp.asarray(params["bb"], f32)
    W1 = jnp.asarray(params["W1"], f32)
    b1 = jnp.asarray(params["b1"], f32)
    W2 = jnp.asarray(params["W2"], f32)
    b2 = jnp.asarray(params["b2"], f32)

    # bias block: (E, dbias_pad)
    wb_cols = jnp.zeros((e, dbias_pad), f32).at[:, :dbias].set(Wb.T)
    bb_cols = jnp.zeros((1, dbias_pad), f32).at[:, :dbias].set(bb.reshape(1, dbias))

    def rank_major(w, bvec, d, d_pad):
        # w: (d*rank, E), PyTorch flat index d_idx*rank + r  ->  (E, rank*d_pad),
        # rank-major blocks, each padded to a 128-lane multiple.
        cols = w.T.reshape(e, d, rank).transpose(0, 2, 1)                 # (E, R, d)
        cols = jnp.pad(cols, ((0, 0), (0, 0), (0, d_pad - d))).reshape(e, rank * d_pad)
        bcols = bvec.reshape(d, rank).T                                   # (R, d)
        bcols = jnp.pad(bcols, ((0, 0), (0, d_pad - d))).reshape(1, rank * d_pad)
        return cols, bcols

    w2_cols, b2_cols = rank_major(W2, b2, d1, d1_pad)
    w1_cols, b1_cols = rank_major(W1, b1, d0, d0_pad)

    wcat = jnp.concatenate([wb_cols, w2_cols, w1_cols], axis=1)           # (E, T)
    bcat = jnp.concatenate([bb_cols, b2_cols, b1_cols], axis=1)           # (1, T)
    assert wcat.shape == (e, t) and bcat.shape == (1, t)

    op_dtype = jnp.bfloat16 if use_bf16 else jnp.float32
    cfg = _Cfg(chunk=chunk, rank=rank, num_embs=num_embs, emb_size=e,
               d0=d0, d1=d1, dbias=dbias, d0_pad=d0_pad, d1_pad=d1_pad,
               dbias_pad=dbias_pad, td0=td0, td1=td1, t=t, use_bf16=use_bf16)
    return {"emb": emb.astype(op_dtype), "wcat": wcat.astype(op_dtype),
            "bcat": bcat, "cfg": cfg}


@functools.partial(jax.jit, static_argnames=("cfg",))
def _lora_hypnet_apply(ids, emb_tbl, wcat, bcat, *, cfg):
    b = ids.shape[0]
    num_chunks = -(-b // cfg.chunk)
    b_pad = num_chunks * cfg.chunk
    # Clamp ids (dynamic VMEM slices have no runtime OOB check on TPU) and pad batch.
    ids_pad = jnp.zeros((b_pad,), jnp.int32).at[:b].set(
        jnp.clip(ids.astype(jnp.int32), 0, cfg.num_embs - 1))

    n_d0 = cfg.d0_pad // cfg.td0
    n_d1 = cfg.d1_pad // cfg.td1

    op_itemsize = 2 if cfg.use_bf16 else 4
    vmem_need = (
        (cfg.num_embs * cfg.emb_size + cfg.emb_size * cfg.t) * op_itemsize   # resident ops
        + cfg.t * 4                                                          # bcat
        + cfg.chunk * (cfg.emb_size * op_itemsize + cfg.t * 4)               # scratches
        + 2 * cfg.chunk * (cfg.td0 * cfg.td1 + cfg.dbias_pad) * 4)           # out dbl-buf
    vmem_limit = int(min(max(2 * vmem_need, 32 * 1024 * 1024), 64 * 1024 * 1024))

    kernel = functools.partial(_lora_hypnet_kernel, cfg=cfg)

    grid_spec = pltpu.PrefetchScalarGridSpec(
        num_scalar_prefetch=1,
        grid=(num_chunks, n_d0, n_d1),
        in_specs=[
            # Grid-invariant operands: whole-array VMEM refs, single-buffered.
            pl.BlockSpec(memory_space=pltpu.MemorySpace.VMEM),   # embedding table
            pl.BlockSpec(memory_space=pltpu.MemorySpace.VMEM),   # fused weight slab
            pl.BlockSpec(memory_space=pltpu.MemorySpace.VMEM),   # fused bias row
        ],
        out_specs=[
            pl.BlockSpec((cfg.chunk, cfg.td0, cfg.td1),
                         lambda c, i0, i1, ids_p: (c, i0, i1)),
            pl.BlockSpec((cfg.chunk, cfg.dbias_pad),
                         lambda c, i0, i1, ids_p: (c, 0)),
        ],
        scratch_shapes=[
            pltpu.VMEM((cfg.chunk, cfg.emb_size), emb_tbl.dtype),
            pltpu.VMEM((cfg.chunk, cfg.t), jnp.float32),
        ],
    )

    weights_pad, biases_pad = pl.pallas_call(
        kernel,
        out_shape=(jax.ShapeDtypeStruct((b_pad, cfg.d0_pad, cfg.d1_pad), jnp.float32),
                   jax.ShapeDtypeStruct((b_pad, cfg.dbias_pad), jnp.float32)),
        grid_spec=grid_spec,
        compiler_params=pltpu.CompilerParams(
            # Batch chunks are independent; D-tile axes must stay sequential on the
            # core owning the chunk because they reuse the per-chunk f scratch.
            dimension_semantics=("parallel", "arbitrary", "arbitrary"),
            vmem_limit_bytes=vmem_limit),
    )(ids_pad, emb_tbl, wcat, bcat)

    # Slice off lane / batch padding (layout plumbing; fold into consumer if possible).
    return weights_pad[:b, :cfg.d0, :cfg.d1], biases_pad[:b, :cfg.dbias]


def lora_hypnet_forward(cond_id, packed):
    """Returns stacked (weights (B, D0, D1), biases (B, Dbias)) — the array form of
    the per-cond [weight, bias] lists the PyTorch module returns."""
    if isinstance(cond_id, int):
        cond_id = [cond_id]
    ids = jnp.asarray(cond_id, jnp.int32)
    return _lora_hypnet_apply(ids, packed["emb"], packed["wcat"], packed["bcat"],
                              cfg=packed["cfg"])


if __name__ == "__main__":
    # Small shapes consistent with the module: target layer weight (16, 32), bias (16,)
    param_shapes = [(16, 32), (16,)]
    cond_emb_size = 8
    num_cond_embs = 6
    rank = 4

    key = jax.random.PRNGKey(0)
    k_emb, k_b, k_1, k_2 = jax.random.split(key, 4)

    def linear_init(k, out_f, in_f):
        kw, kb = jax.random.split(k)
        bound = 1.0 / math.sqrt(in_f)
        w = jax.random.uniform(kw, (out_f, in_f), jnp.float32, -bound, bound)
        bvec = jax.random.uniform(kb, (out_f,), jnp.float32, -bound, bound)
        return w, bvec

    Wb, bb = linear_init(k_b, param_shapes[1][0], cond_emb_size)
    W1, b1 = linear_init(k_1, param_shapes[0][0] * rank, cond_emb_size)
    W2, b2 = linear_init(k_2, param_shapes[0][1] * rank, cond_emb_size)
    params = dict(
        emb=jax.random.normal(k_emb, (num_cond_embs, cond_emb_size), jnp.float32),
        Wb=Wb, bb=bb, W1=W1, b1=b1, W2=W2, b2=b2,
    )

    # Pack once (cacheable), then call the jitted forward.
    packed = pack_lora_hypnet_params(params, param_shapes=param_shapes, rank=rank)

    cond_id = [0, 3, 5]
    weights, biases = lora_hypnet_forward(cond_id, packed)
    jax.block_until_ready((weights, biases))

    # Pure-JAX reference mirroring the PyTorch forward (per-cond: bias, w1 @ w2.T).
    ids = jnp.asarray(cond_id, jnp.int32)
    embs = params["emb"][ids]
    bias_ref = embs @ params["Wb"].T + params["bb"]
    f1 = embs @ params["W1"].T + params["b1"]
    f2 = embs @ params["W2"].T + params["b2"]
    w1 = f1.reshape(len(cond_id), param_shapes[0][0], rank)
    w2 = f2.reshape(len(cond_id), param_shapes[0][1], rank)
    weight_ref = jnp.einsum("bdr,ber->bde", w1, w2)

    assert weights.shape == weight_ref.shape and biases.shape == bias_ref.shape
    assert float(jnp.max(jnp.abs(weights - weight_ref))) < 1e-3
    assert float(jnp.max(jnp.abs(biases - bias_ref))) < 1e-3
    print("KERNEL_OK")
</pallas_src>

<mosaic_0001>
module attributes {stable_mosaic.version = 11 : i64} {
  func.func @_lora_hypnet_kernel(%arg0: i32, %arg1: i32, %arg2: i32, %arg3: memref<8xi32, #tpu.memory_space<smem>>, %arg4: memref<6x8xf32, #tpu.memory_space<vmem>>, %arg5: memref<8x1152xf32, #tpu.memory_space<vmem>>, %arg6: memref<1x1152xf32, #tpu.memory_space<vmem>>, %arg7: memref<8x128x128xf32, #tpu.memory_space<vmem>>, %arg8: memref<8x128xf32, #tpu.memory_space<vmem>>, %arg9: memref<8x8xf32, #tpu.memory_space<vmem>>, %arg10: memref<8x1152xf32, #tpu.memory_space<vmem>>) attributes {dimension_semantics = [#tpu.dimension_semantics<parallel>, #tpu.dimension_semantics<arbitrary>, #tpu.dimension_semantics<arbitrary>], iteration_bounds = array<i64: 1, 1, 1>, scalar_prefetch = 1 : i64, scratch_operands = 2 : i64, tpu.core_type = #tpu.core_type<tc>, window_params = [{pipeline_mode = #tpu.pipeline_mode<synchronous>, transform_indices = @transform_0, window_bounds = array<i64: 6, 8>}, {pipeline_mode = #tpu.pipeline_mode<synchronous>, transform_indices = @transform_1, window_bounds = array<i64: 8, 1152>}, {pipeline_mode = #tpu.pipeline_mode<synchronous>, transform_indices = @transform_2, window_bounds = array<i64: 1, 1152>}, {transform_indices = @transform_3, window_bounds = array<i64: 8, 128, 128>}, {transform_indices = @transform_4, window_bounds = array<i64: 8, 128>}]} {
    %c0_i32 = arith.constant 0 : i32
    %0 = arith.cmpi eq, %arg1, %c0_i32 : i32
    %c0_i32_0 = arith.constant 0 : i32
    %1 = arith.cmpi eq, %arg2, %c0_i32_0 : i32
    %2 = arith.andi %0, %1 : i1
    %3 = arith.extui %2 : i1 to i32
    %c0_i32_1 = arith.constant 0 : i32
    %4 = arith.cmpi ne, %3, %c0_i32_1 : i32
    scf.if %4 {
      %c8_i32 = arith.constant 8 : i32
      %57 = arith.muli %arg0, %c8_i32 : i32
      %c0_i32_20 = arith.constant 0 : i32
      %58 = arith.addi %57, %c0_i32_20 : i32
      %59 = arith.index_cast %58 : i32 to index
      %60 = memref.load %arg3[%59] : memref<8xi32, #tpu.memory_space<smem>>
      %61 = arith.index_cast %60 : i32 to index
      %c0_21 = arith.constant 0 : index
      %62 = vector.load %arg4[%61, %c0_21] : memref<6x8xf32, #tpu.memory_space<vmem>>, vector<1x8xf32>
      %c0_22 = arith.constant 0 : index
      %c0_23 = arith.constant 0 : index
      %63 = vector.load %arg9[%c0_22, %c0_23] : memref<8x8xf32, #tpu.memory_space<vmem>>, vector<1x8xf32>
      tpu.vector_store %arg9[%c0_22, %c0_23], %62 {strides = array<i32>} : memref<8x8xf32, #tpu.memory_space<vmem>>, vector<1x8xf32>,
      %c1_i32 = arith.constant 1 : i32
      %64 = arith.addi %57, %c1_i32 : i32
      %65 = arith.index_cast %64 : i32 to index
      %66 = memref.load %arg3[%65] : memref<8xi32, #tpu.memory_space<smem>>
      %67 = arith.index_cast %66 : i32 to index
      %c0_24 = arith.constant 0 : index
      %68 = vector.load %arg4[%67, %c0_24] : memref<6x8xf32, #tpu.memory_space<vmem>>, vector<1x8xf32>
      %c1 = arith.constant 1 : index
      %c0_25 = arith.constant 0 : index
      %69 = vector.load %arg9[%c1, %c0_25] : memref<8x8xf32, #tpu.memory_space<vmem>>, vector<1x8xf32>
      tpu.vector_store %arg9[%c1, %c0_25], %68 {strides = array<i32>} : memref<8x8xf32, #tpu.memory_space<vmem>>, vector<1x8xf32>,
      %c2_i32 = arith.constant 2 : i32
      %70 = arith.addi %57, %c2_i32 : i32
      %71 = arith.index_cast %70 : i32 to index
      %72 = memref.load %arg3[%71] : memref<8xi32, #tpu.memory_space<smem>>
      %73 = arith.index_cast %72 : i32 to index
      %c0_26 = arith.constant 0 : index
      %74 = vector.load %arg4[%73, %c0_26] : memref<6x8xf32, #tpu.memory_space<vmem>>, vector<1x8xf32>
      %c2 = arith.constant 2 : index
      %c0_27 = arith.constant 0 : index
      %75 = vector.load %arg9[%c2, %c0_27] : memref<8x8xf32, #tpu.memory_space<vmem>>, vector<1x8xf32>
      tpu.vector_store %arg9[%c2, %c0_27], %74 {strides = array<i32>} : memref<8x8xf32, #tpu.memory_space<vmem>>, vector<1x8xf32>,
      %c3_i32 = arith.constant 3 : i32
      %76 = arith.addi %57, %c3_i32 : i32
      %77 = arith.index_cast %76 : i32 to index
      %78 = memref.load %arg3[%77] : memref<8xi32, #tpu.memory_space<smem>>
      %79 = arith.index_cast %78 : i32 to index
      %c0_28 = arith.constant 0 : index
      %80 = vector.load %arg4[%79, %c0_28] : memref<6x8xf32, #tpu.memory_space<vmem>>, vector<1x8xf32>
      %c3 = arith.constant 3 : index
      %c0_29 = arith.constant 0 : index
      %81 = vector.load %arg9[%c3, %c0_29] : memref<8x8xf32, #tpu.memory_space<vmem>>, vector<1x8xf32>
      tpu.vector_store %arg9[%c3, %c0_29], %80 {strides = array<i32>} : memref<8x8xf32, #tpu.memory_space<vmem>>, vector<1x8xf32>,
      %c4_i32 = arith.constant 4 : i32
      %82 = arith.addi %57, %c4_i32 : i32
      %83 = arith.index_cast %82 : i32 to index
      %84 = memref.load %arg3[%83] : memref<8xi32, #tpu.memory_space<smem>>
      %85 = arith.index_cast %84 : i32 to index
      %c0_30 = arith.constant 0 : index
      %86 = vector.load %arg4[%85, %c0_30] : memref<6x8xf32, #tpu.memory_space<vmem>>, vector<1x8xf32>
      %c4 = arith.constant 4 : index
      %c0_31 = arith.constant 0 : index
      %87 = vector.load %arg9[%c4, %c0_31] : memref<8x8xf32, #tpu.memory_space<vmem>>, vector<1x8xf32>
      tpu.vector_store %arg9[%c4, %c0_31], %86 {strides = array<i32>} : memref<8x8xf32, #tpu.memory_space<vmem>>, vector<1x8xf32>,
      %c5_i32 = arith.constant 5 : i32
      %88 = arith.addi %57, %c5_i32 : i32
      %89 = arith.index_cast %88 : i32 to index
      %90 = memref.load %arg3[%89] : memref<8xi32, #tpu.memory_space<smem>>
      %91 = arith.index_cast %90 : i32 to index
      %c0_32 = arith.constant 0 : index
      %92 = vector.load %arg4[%91, %c0_32] : memref<6x8xf32, #tpu.memory_space<vmem>>, vector<1x8xf32>
      %c5 = arith.constant 5 : index
      %c0_33 = arith.constant 0 : index
      %93 = vector.load %arg9[%c5, %c0_33] : memref<8x8xf32, #tpu.memory_space<vmem>>, vector<1x8xf32>
      tpu.vector_store %arg9[%c5, %c0_33], %92 {strides = array<i32>} : memref<8x8xf32, #tpu.memory_space<vmem>>, vector<1x8xf32>,
      %c6_i32 = arith.constant 6 : i32
      %94 = arith.addi %57, %c6_i32 : i32
      %95 = arith.index_cast %94 : i32 to index
      %96 = memref.load %arg3[%95] : memref<8xi32, #tpu.memory_space<smem>>
      %97 = arith.index_cast %96 : i32 to index
      %c0_34 = arith.constant 0 : index
      %98 = vector.load %arg4[%97, %c0_34] : memref<6x8xf32, #tpu.memory_space<vmem>>, vector<1x8xf32>
      %c6 = arith.constant 6 : index
      %c0_35 = arith.constant 0 : index
      %99 = vector.load %arg9[%c6, %c0_35] : memref<8x8xf32, #tpu.memory_space<vmem>>, vector<1x8xf32>
      tpu.vector_store %arg9[%c6, %c0_35], %98 {strides = array<i32>} : memref<8x8xf32, #tpu.memory_space<vmem>>, vector<1x8xf32>,
      %c7_i32 = arith.constant 7 : i32
      %100 = arith.addi %57, %c7_i32 : i32
      %101 = arith.index_cast %100 : i32 to index
      %102 = memref.load %arg3[%101] : memref<8xi32, #tpu.memory_space<smem>>
      %103 = arith.index_cast %102 : i32 to index
      %c0_36 = arith.constant 0 : index
      %104 = vector.load %arg4[%103, %c0_36] : memref<6x8xf32, #tpu.memory_space<vmem>>, vector<1x8xf32>
      %c7 = arith.constant 7 : index
      %c0_37 = arith.constant 0 : index
      %105 = vector.load %arg9[%c7, %c0_37] : memref<8x8xf32, #tpu.memory_space<vmem>>, vector<1x8xf32>
      tpu.vector_store %arg9[%c7, %c0_37], %104 {strides = array<i32>} : memref<8x8xf32, #tpu.memory_space<vmem>>, vector<1x8xf32>,
      %c0_38 = arith.constant 0 : index
      %c0_39 = arith.constant 0 : index
      %106 = vector.load %arg9[%c0_38, %c0_39] : memref<8x8xf32, #tpu.memory_space<vmem>>, vector<8x8xf32>
      %c0_40 = arith.constant 0 : index
      %c0_41 = arith.constant 0 : index
      %107 = vector.load %arg5[%c0_40, %c0_41] : memref<8x1152xf32, #tpu.memory_space<vmem>>, vector<8x1152xf32>
      %cst_42 = arith.constant dense<0.000000e+00> : vector<8x1152xf32>
      %108 = tpu.matmul %106, %107, %cst_42 {dimension_numbers = #tpu.dot_dimension_numbers<[1], [0], [0], [1], [0, 0, 1, 1], [], []>} : vector<8x8xf32>, vector<8x1152xf32>, vector<8x1152xf32> -> vector<8x1152xf32>
      %c0_43 = arith.constant 0 : index
      %c0_44 = arith.constant 0 : index
      %109 = vector.load %arg6[%c0_43, %c0_44] : memref<1x1152xf32, #tpu.memory_space<vmem>>, vector<1x1152xf32>
      %110 = vector.broadcast %109 : vector<1x1152xf32> to vector<8x1152xf32>
      %111 = arith.addf %108, %110 : vector<8x1152xf32>
      %c0_45 = arith.constant 0 : index
      %c0_46 = arith.constant 0 : index
      %112 = vector.load %arg10[%c0_45, %c0_46] : memref<8x1152xf32, #tpu.memory_space<vmem>>, vector<8x1152xf32>
      tpu.vector_store %arg10[%c0_45, %c0_46], %111 {strides = array<i32>} : memref<8x1152xf32, #tpu.memory_space<vmem>>, vector<8x1152xf32>,
      %113 = vector.extract_strided_slice %111 {offsets = [0, 0], sizes = [8, 128], strides = [1, 1]} : vector<8x1152xf32> to vector<8x128xf32>
      %c0_47 = arith.constant 0 : index
      %c0_48 = arith.constant 0 : index
      %114 = vector.load %arg8[%c0_47, %c0_48] : memref<8x128xf32, #tpu.memory_space<vmem>>, vector<8x128xf32>
      tpu.vector_store %arg8[%c0_47, %c0_48], %113 {strides = array<i32>} : memref<8x128xf32, #tpu.memory_space<vmem>>, vector<8x128xf32>,
    } else {
    }
    %c128_i32 = arith.constant 128 : i32
    %5 = arith.muli %arg1, %c128_i32 : i32
    %c640_i32 = arith.constant 640 : i32
    %6 = arith.addi %c640_i32, %5 : i32
    %7 = tpu.assume_multiple %6, 128 : i32
    %c128_i32_2 = arith.constant 128 : i32
    %8 = arith.muli %arg2, %c128_i32_2 : i32
    %c128_i32_3 = arith.constant 128 : i32
    %9 = arith.addi %c128_i32_3, %8 : i32
    %10 = tpu.assume_multiple %9, 128 : i32
    %c0 = arith.constant 0 : index
    %11 = arith.index_cast %7 : i32 to index
    %12 = vector.load %arg10[%c0, %11] : memref<8x1152xf32, #tpu.memory_space<vmem>>, vector<8x128xf32>
    %13 = vector.shape_cast %12 : vector<8x128xf32> to vector<8x128x1xf32>
    %c0_4 = arith.constant 0 : index
    %14 = arith.index_cast %10 : i32 to index
    %15 = vector.load %arg10[%c0_4, %14] : memref<8x1152xf32, #tpu.memory_space<vmem>>, vector<8x128xf32>
    %16 = vector.shape_cast %15 : vector<8x128xf32> to vector<8x1x128xf32>
    %c128_i32_5 = arith.constant 128 : i32
    %17 = arith.muli %arg1, %c128_i32_5 : i32
    %c768_i32 = arith.constant 768 : i32
    %18 = arith.addi %c768_i32, %17 : i32
    %19 = tpu.assume_multiple %18, 128 : i32
    %c128_i32_6 = arith.constant 128 : i32
    %20 = arith.muli %arg2, %c128_i32_6 : i32
    %c256_i32 = arith.constant 256 : i32
    %21 = arith.addi %c256_i32, %20 : i32
    %22 = tpu.assume_multiple %21, 128 : i32
    %c0_7 = arith.constant 0 : index
    %23 = arith.index_cast %19 : i32 to index
    %24 = vector.load %arg10[%c0_7, %23] : memref<8x1152xf32, #tpu.memory_space<vmem>>, vector<8x128xf32>
    %25 = vector.shape_cast %24 : vector<8x128xf32> to vector<8x128x1xf32>
    %c0_8 = arith.constant 0 : index
    %26 = arith.index_cast %22 : i32 to index
    %27 = vector.load %arg10[%c0_8, %26] : memref<8x1152xf32, #tpu.memory_space<vmem>>, vector<8x128xf32>
    %28 = vector.shape_cast %27 : vector<8x128xf32> to vector<8x1x128xf32>
    %c128_i32_9 = arith.constant 128 : i32
    %29 = arith.muli %arg1, %c128_i32_9 : i32
    %c896_i32 = arith.constant 896 : i32
    %30 = arith.addi %c896_i32, %29 : i32
    %31 = tpu.assume_multiple %30, 128 : i32
    %c128_i32_10 = arith.constant 128 : i32
    %32 = arith.muli %arg2, %c128_i32_10 : i32
    %c384_i32 = arith.constant 384 : i32
    %33 = arith.addi %c384_i32, %32 : i32
    %34 = tpu.assume_multiple %33, 128 : i32
    %c0_11 = arith.constant 0 : index
    %35 = arith.index_cast %31 : i32 to index
    %36 = vector.load %arg10[%c0_11, %35] : memref<8x1152xf32, #tpu.memory_space<vmem>>, vector<8x128xf32>
    %37 = vector.shape_cast %36 : vector<8x128xf32> to vector<8x128x1xf32>
    %c0_12 = arith.constant 0 : index
    %38 = arith.index_cast %34 : i32 to index
    %39 = vector.load %arg10[%c0_12, %38] : memref<8x1152xf32, #tpu.memory_space<vmem>>, vector<8x128xf32>
    %40 = vector.shape_cast %39 : vector<8x128xf32> to vector<8x1x128xf32>
    %c128_i32_13 = arith.constant 128 : i32
    %41 = arith.muli %arg1, %c128_i32_13 : i32
    %c1024_i32 = arith.constant 1024 : i32
    %42 = arith.addi %c1024_i32, %41 : i32
    %43 = tpu.assume_multiple %42, 128 : i32
    %c128_i32_14 = arith.constant 128 : i32
    %44 = arith.muli %arg2, %c128_i32_14 : i32
    %c512_i32 = arith.constant 512 : i32
    %45 = arith.addi %c512_i32, %44 : i32
    %46 = tpu.assume_multiple %45, 128 : i32
    %c0_15 = arith.constant 0 : index
    %47 = arith.index_cast %43 : i32 to index
    %48 = vector.load %arg10[%c0_15, %47] : memref<8x1152xf32, #tpu.memory_space<vmem>>, vector<8x128xf32>
    %49 = vector.shape_cast %48 : vector<8x128xf32> to vector<8x128x1xf32>
    %c0_16 = arith.constant 0 : index
    %50 = arith.index_cast %46 : i32 to index
    %51 = vector.load %arg10[%c0_16, %50] : memref<8x1152xf32, #tpu.memory_space<vmem>>, vector<8x128xf32>
    %52 = vector.shape_cast %51 : vector<8x128xf32> to vector<8x1x128xf32>
    %53 = tpu.concatenate %13, %25, %37, %49 in 2 : vector<8x128x1xf32>, vector<8x128x1xf32>, vector<8x128x1xf32>, vector<8x128x1xf32> -> vector<8x128x4xf32>
    %54 = tpu.concatenate %16, %28, %40, %52 in 1 : vector<8x1x128xf32>, vector<8x1x128xf32>, vector<8x1x128xf32>, vector<8x1x128xf32> -> vector<8x4x128xf32>
    "tpu.trace_start"() <{level = 10 : i32, message = "bdr,bre->bde"}> : () -> ()
    %cst = arith.constant dense<0.000000e+00> : vector<8x128x128xf32>
    %55 = tpu.matmul %53, %54, %cst {dimension_numbers = #tpu.dot_dimension_numbers<[2], [1], [1], [2], [0, 0, 0, 1, 1, 2], [0], [0]>} : vector<8x128x4xf32>, vector<8x4x128xf32>, vector<8x128x128xf32> -> vector<8x128x128xf32>
    "tpu.trace_stop"() : () -> ()
    %c0_17 = arith.constant 0 : index
    %c0_18 = arith.constant 0 : index
    %c0_19 = arith.constant 0 : index
    %56 = vector.load %arg7[%c0_17, %c0_18, %c0_19] : memref<8x128x128xf32, #tpu.memory_space<vmem>>, vector<8x128x128xf32>
    tpu.vector_store %arg7[%c0_17, %c0_18, %c0_19], %55 {strides = array<i32>} : memref<8x128x128xf32, #tpu.memory_space<vmem>>, vector<8x128x128xf32>,
    return
  }
  func.func @transform_0(%arg0: i32, %arg1: i32, %arg2: i32, %arg3: memref<8xi32, #tpu.memory_space<smem>>) -> (i32, i32) {
    %c0_i32 = arith.constant 0 : i32
    %c0_i32_0 = arith.constant 0 : i32
    %c0_i32_1 = arith.constant 0 : i32
    return %c0_i32, %c0_i32_0 : i32, i32
  }
  func.func @transform_1(%arg0: i32, %arg1: i32, %arg2: i32, %arg3: memref<8xi32, #tpu.memory_space<smem>>) -> (i32, i32) {
    %c0_i32 = arith.constant 0 : i32
    %c0_i32_0 = arith.constant 0 : i32
    %c0_i32_1 = arith.constant 0 : i32
    return %c0_i32, %c0_i32_0 : i32, i32
  }
  func.func @transform_2(%arg0: i32, %arg1: i32, %arg2: i32, %arg3: memref<8xi32, #tpu.memory_space<smem>>) -> (i32, i32) {
    %c0_i32 = arith.constant 0 : i32
    %c0_i32_0 = arith.constant 0 : i32
    %c0_i32_1 = arith.constant 0 : i32
    return %c0_i32, %c0_i32_0 : i32, i32
  }
  func.func @transform_3(%arg0: i32, %arg1: i32, %arg2: i32, %arg3: memref<8xi32, #tpu.memory_space<smem>>) -> (i32, i32, i32) {
    %c0_i32 = arith.constant 0 : i32
    return %arg0, %arg1, %arg2 : i32, i32, i32
  }
  func.func @transform_4(%arg0: i32, %arg1: i32, %arg2: i32, %arg3: memref<8xi32, #tpu.memory_space<smem>>) -> (i32, i32) {
    %c0_i32 = arith.constant 0 : i32
    %c0_i32_0 = arith.constant 0 : i32
    return %arg0, %c0_i32 : i32, i32
  }
}

</mosaic_0001>

<llo_original>
// kernel: _lora_hypnet_apply.1
$region0: #{_lora_hypnet_apply.1}
  #allocation0 [shape = 'u32[]', space=smem, size = 0x4, offset = 0x4, fixed_abs, tag = 'smem constant byte address 0x4 - core index']
  #allocation1 [shape = 'u32[144,128]{1,0:T(1,128)}', space=vmem, size = 0x12000, scoped, tag = 'internal scratch']
  #allocation2 [shape = 'f32[8,8]{1,0:T(8,128)}', space=vmem, size = 0x1000, scoped, tag = 'scratch operand']
  #allocation3 [shape = 'f32[8,1152]{1,0:T(8,128)}', space=vmem, size = 0x9000, scoped, tag = 'scratch operand']
  #allocation4 [shape = 's32[1]{0}', space=sflag, size = 0x4, scoped, tag = 'scoped memory for _lora_hypnet_apply.1']
  #allocation5 [shape = 'u8[512]{0}', space=smem, size = 0x200, scoped, tag = 'prefetched SMEM operand 0']
  %s0 = inlined_call_operand.vmem [shape: s32[8], index: 0, kind: input, shape index: {}]
  %s1 = inlined_call_operand.hbm [shape: f32[6,8], index: 1, kind: input, shape index: {}]
  %s2 = inlined_call_operand.hbm [shape: f32[8,1152], index: 2, kind: input, shape index: {}]
  %s3 = inlined_call_operand.vmem [shape: f32[1,1152], index: 3, kind: input, shape index: {}]
  %s4 = inlined_call_operand.vmem [shape: f32[8,128,128], index: 4, kind: output, shape index: {0}]
  %s5 = inlined_call_operand.vmem [shape: f32[8,128], index: 5, kind: output, shape index: {1}]
  %6 = xla_tuple %s4, %s5
  %s7 = sld [smem:[#allocation0]]
  $region42: #{_lora_hypnet_apply.1} parent=0
    _
  %s9 = ssub.s32 1, %s7
  %s10 = scalar_select 0, %s9, %s7
  %s11 = sshll.u32 %s0, 4
  %s12 = int_to_ptr.vmem [resolvable:$true] %s11
  %14 = dma.vmem_to_smem %s12, 16, [#allocation5], [#allocation4]
  %15 = dma.done [#allocation4], 16
  %16 = sfence
  $region1: #{_lora_hypnet_apply.1} parent=0
    #allocation6 [shape = 'u8[4096]{0}', space=vmem, size = 0x1000, scoped, tag = 'input window, operand 1, single buffered']
    #allocation7 [shape = 's32[1]{0}', space=sflag, size = 0x4, scoped, tag = 'scoped memory for _lora_hypnet_apply.1']
    #allocation8 [shape = 'u8[36864]{0}', space=vmem, size = 0x9000, scoped, tag = 'input window, operand 2, single buffered']
    #allocation9 [shape = 's32[1]{0}', space=sflag, size = 0x4, scoped, tag = 'scoped memory for _lora_hypnet_apply.1']
    %17 = vsyncpa [#allocation7], 0
    %18 = vsyncpa [#allocation9], 0
    // Predicated region
    $region2: #{_lora_hypnet_apply.1} parent=1 // pred_check
      _
    $region3: #{_lora_hypnet_apply.1} parent=1 // pred_check_branch
      %20 = sbr.rel (0) target = $region5
    $region4: #{_lora_hypnet_apply.1} parent=1 // pred_region
      %s22 = ssub.s32 128, 128
      %23 = vsyncadd [#allocation7], %s22
      %s25 = sshll.u32 [#allocation6], 4
      %s26 = int_to_ptr.vmem [resolvable:$true] %s25
      %28 = dma.hbm_to_vmem [thread:$0]  %s1, 128, %s26, [#allocation7]
    $region5: #{_lora_hypnet_apply.1} parent=1 // pred_fallthru
      _
    // Predicated region
    $region6: #{_lora_hypnet_apply.1} parent=1 // pred_check
      _
    $region7: #{_lora_hypnet_apply.1} parent=1 // pred_check_branch
      %30 = sbr.rel (0) target = $region9
    $region8: #{_lora_hypnet_apply.1} parent=1 // pred_region
      %s32 = ssub.s32 1152, 1152
      %33 = vsyncadd [#allocation9], %s32
      %s35 = sshll.u32 [#allocation8], 4
      %s36 = int_to_ptr.vmem [resolvable:$true] %s35
      %38 = dma.hbm_to_vmem [thread:$0]  %s2, 1152, %s36, [#allocation9]
    $region9: #{_lora_hypnet_apply.1} parent=1 // pred_fallthru
      _
    // Predicated region
    $region10: #{_lora_hypnet_apply.1} parent=1 // pred_check
      _
    $region11: #{_lora_hypnet_apply.1} parent=1 // pred_check_branch
      %40 = sbr.rel (0) target = $region13
    $region12: #{_lora_hypnet_apply.1} parent=1 // pred_region
      _
    $region13: #{_lora_hypnet_apply.1} parent=1 // pred_fallthru
      _
    // Predicated region
    $region14: #{_lora_hypnet_apply.1} parent=1 // pred_check
      _
    $region15: #{_lora_hypnet_apply.1} parent=1 // pred_check_branch
      %42 = sbr.rel (0) target = $region17
    $region16: #{_lora_hypnet_apply.1} parent=1 // pred_region
      %43 = dma.done [#allocation7], 128
    $region17: #{_lora_hypnet_apply.1} parent=1 // pred_fallthru
      _
    // Predicated region
    $region18: #{_lora_hypnet_apply.1} parent=1 // pred_check
      _
    $region19: #{_lora_hypnet_apply.1} parent=1 // pred_check_branch
      %45 = sbr.rel (0) target = $region21
    $region20: #{_lora_hypnet_apply.1} parent=1 // pred_region
      %46 = dma.done [#allocation9], 1152
    $region21: #{_lora_hypnet_apply.1} parent=1 // pred_fallthru
      _
    %p47 = scmp.eq.s32.totalorder 0, 0
    %p48 = scmp.eq.s32.totalorder 0, 0
    %p49 = pnand %p47, %p48
    %p50 = pneg %p49
    // Predicated region
    $region22: #{_lora_hypnet_apply.1} parent=1 // pred_check
      _
    $region23: #{_lora_hypnet_apply.1} parent=1 // pred_check_branch
      %52 = sbr.rel (%p49) target = $region25
    $region24: #{_lora_hypnet_apply.1} parent=1 // pred_region
      %s53 = smul.u32 0, 8
      %s54 = sld [smem:[#allocation5 + %s53]]
      %s55 = scalar_lea.vmem [#allocation6], %s54
      %v56 = vld [vmem:[%s55] sm:$0x1]
      %vm57 = vcmask 57344
      %58 = vst.msk [vmem:[#allocation2] sm:$0x1] %vm57, %v56
      %s59 = sadd.s32 %s53, 1
      %s60 = sld [smem:[#allocation5 + %s59]]
      %s61 = scalar_lea.vmem [#allocation6], %s60
      %v62 = vld [vmem:[%s61] sm:$0x1]
      %63 = vst.msk [vmem:[#allocation2 + $0x1] sm:$0x1] %vm57, %v62
      %s64 = sadd.s32 %s53, 2
      %s65 = sld [smem:[#allocation5 + %s64]]
      %s66 = scalar_lea.vmem [#allocation6], %s65
      %v67 = vld [vmem:[%s66] sm:$0x1]
      %68 = vst.msk [vmem:[#allocation2 + $0x2] sm:$0x1] %vm57, %v67
      %s69 = sadd.s32 %s53, 3
      %s70 = sld [smem:[#allocation5 + %s69]]
      %s71 = scalar_lea.vmem [#allocation6], %s70
      %v72 = vld [vmem:[%s71] sm:$0x1]
      %73 = vst.msk [vmem:[#allocation2 + $0x3] sm:$0x1] %vm57, %v72
      %s74 = sadd.s32 %s53, 4
      %s75 = sld [smem:[#allocation5 + %s74]]
      %s76 = scalar_lea.vmem [#allocation6], %s75
      %v77 = vld [vmem:[%s76] sm:$0x1]
      %78 = vst.msk [vmem:[#allocation2 + $0x4] sm:$0x1] %vm57, %v77
      %s79 = sadd.s32 %s53, 5
      %s80 = sld [smem:[#allocation5 + %s79]]
      %s81 = scalar_lea.vmem [#allocation6], %s80
      %v82 = vld [vmem:[%s81] sm:$0x1]
      %83 = vst.msk [vmem:[#allocation2 + $0x5] sm:$0x1] %vm57, %v82
      %s84 = sadd.s32 %s53, 6
      %s85 = sld [smem:[#allocation5 + %s84]]
      %s86 = scalar_lea.vmem [#allocation6], %s85
      %v87 = vld [vmem:[%s86] sm:$0x1]
      %88 = vst.msk [vmem:[#allocation2 + $0x6] sm:$0x1] %vm57, %v87
      %s89 = sadd.s32 %s53, 7
      %s90 = sld [smem:[#allocation5 + %s89]]
      %s91 = scalar_lea.vmem [#allocation6], %s90
      %v92 = vld [vmem:[%s91] sm:$0x1]
      %93 = vst.msk [vmem:[#allocation2 + $0x7] sm:$0x1] %vm57, %v92
      %v94 = vld [vmem:[#allocation2] sm:$0xff]
      %v95 = vld [vmem:[#allocation8] sm:$0xff]
      %v96 = vld [vmem:[#allocation8 + $0x8] sm:$0xff]
      %v97 = vld [vmem:[#allocation8 + $0x10] sm:$0xff]
      %v98 = vld [vmem:[#allocation8 + $0x18] sm:$0xff]
      %v99 = vld [vmem:[#allocation8 + $0x20] sm:$0xff]
      %v100 = vld [vmem:[#allocation8 + $0x28] sm:$0xff]
      %v101 = vld [vmem:[#allocation8 + $0x30] sm:$0xff]
      %v102 = vld [vmem:[#allocation8 + $0x38] sm:$0xff]
      %v103 = vld [vmem:[#allocation8 + $0x40] sm:$0xff]
      %v104 = vld [vmem:[%s3] sm:$0xff]
      %v105 = vld [vmem:[%s3 + $0x8] sm:$0x1]
      %v108 = vlaneseq
      %v109 = vshrl.u32 %v108, 7
      %v110 = vsub.s32 0, %v109
      %v111 = vrot.slane %v104, %v110
      %v112 = vlaneseq
      %v113 = vshrl.u32 %v112, 7
      %v114 = vsub.s32 1, %v113
      %v115 = vrot.slane %v104, %v114
      %v116 = vlaneseq
      %v117 = vshrl.u32 %v116, 7
      %v118 = vsub.s32 2, %v117
      %v119 = vrot.slane %v104, %v118
      %v120 = vlaneseq
      %v121 = vshrl.u32 %v120, 7
      %v122 = vsub.s32 3, %v121
      %v123 = vrot.slane %v104, %v122
      %v124 = vlaneseq
      %v125 = vshrl.u32 %v124, 7
      %v126 = vsub.s32 4, %v125
      %v127 = vrot.slane %v104, %v126
      %v128 = vlaneseq
      %v129 = vshrl.u32 %v128, 7
      %v130 = vsub.s32 5, %v129
      %v131 = vrot.slane %v104, %v130
      %v132 = vlaneseq
      %v133 = vshrl.u32 %v132, 7
      %v134 = vsub.s32 6, %v133
      %v135 = vrot.slane %v104, %v134
      %v136 = vlaneseq
      %v137 = vshrl.u32 %v136, 7
      %v138 = vsub.s32 7, %v137
      %v139 = vrot.slane %v104, %v138
      %v140 = vlaneseq
      %v141 = vshrl.u32 %v140, 7
      %v142 = vsub.s32 0, %v141
      %v143 = vrot.slane %v105, %v142
      %vm153 = vcmask 64512
      %v155 = vsel %vm153, %v94, 0
      %157 = vmatprep.subr.mxu0 0.0
      %158 = vmatpush1.msra.mxu0 0.0
      %159 = vmatprep.subr.mxu0 0.0
      %160 = vmatpush1.msra.mxu0 0.0
      %161 = vmatprep.subr.mxu0 0.0
      %162 = vmatpush1.msra.mxu0 0.0
      %163 = vmatprep.subr.mxu0 0.0
      %164 = vmatpush1.msra.mxu0 0.0
      %165 = vmatprep.subr.mxu0 0.0
      %166 = vmatpush1.msra.mxu0 0.0
      %167 = vmatprep.subr.mxu0 0.0
      %168 = vmatpush1.msra.mxu0 0.0
      %169 = vmatprep.subr.mxu0 0.0
      %170 = vmatpush1.msra.mxu0 0.0
      %171 = vmatprep.subr.mxu0 0.0
      %172 = vmatpush1.msra.mxu0 0.0
      %173 = vmatprep.subr.mxu0 0.0
      %174 = vmatpush1.msra.mxu0 0.0
      %175 = vmatprep.subr.mxu0 0.0
      %176 = vmatpush1.msra.mxu0 0.0
      %177 = vmatprep.subr.mxu0 0.0
      %178 = vmatpush1.msra.mxu0 0.0
      %179 = vmatprep.subr.mxu0 0.0
      %180 = vmatpush1.msra.mxu0 0.0
      %181 = vmatprep.subr.mxu0 0.0
      %182 = vmatpush1.msra.mxu0 0.0
      %183 = vmatprep.subr.mxu0 0.0
      %184 = vmatpush1.msra.mxu0 0.0
      %185 = vmatprep.subr.mxu0 0.0
      %186 = vmatpush1.msra.mxu0 0.0
      %187 = vmatprep.subr.mxu0 %v96
      %188 = vmatpush1.msra.mxu0 %v95
      %189 = vmatprep.subr.mxu0 0.0
      %190 = vmatpush2.msra.mxu0 0.0
      %191 = vmatprep.subr.mxu0 0.0
      %192 = vmatpush2.msra.mxu0 0.0
      %193 = vmatprep.subr.mxu0 0.0
      %194 = vmatpush2.msra.mxu0 0.0
      %195 = vmatprep.subr.mxu0 0.0
      %196 = vmatpush2.msra.mxu0 0.0
      %197 = vmatprep.subr.mxu0 0.0
      %198 = vmatpush2.msra.mxu0 0.0
      %199 = vmatprep.subr.mxu0 0.0
      %200 = vmatpush2.msra.mxu0 0.0
      %201 = vmatprep.subr.mxu0 0.0
      %202 = vmatpush2.msra.mxu0 0.0
      %203 = vmatprep.subr.mxu0 0.0
      %204 = vmatpush2.msra.mxu0 0.0
      %205 = vmatprep.subr.mxu0 0.0
      %206 = vmatpush2.msra.mxu0 0.0
      %207 = vmatprep.subr.mxu0 0.0
      %208 = vmatpush2.msra.mxu0 0.0
      %209 = vmatprep.subr.mxu0 0.0
      %210 = vmatpush2.msra.mxu0 0.0
      %211 = vmatprep.subr.mxu0 0.0
      %212 = vmatpush2.msra.mxu0 0.0
      %213 = vmatprep.subr.mxu0 0.0
      %214 = vmatpush2.msra.mxu0 0.0
      %215 = vmatprep.subr.mxu0 0.0
      %216 = vmatpush2.msra.mxu0 0.0
      %217 = vmatprep.subr.mxu0 0.0
      %218 = vmatpush2.msra.mxu0 0.0
      %219 = vmatprep.subr.mxu0 0.0
      %220 = vmatpush2.msra.mxu0 0.0
      %221 = vmatprep.mubr.f32.mxu0 0.0
      %222 = vmatmul.mubr.f32.gmra.mxu0 %v155
      %v223 = vpop.f32.mrf.mxu0
      %v224 = vadd.f32 %v111, %v223
      %v225 = vpop.f32.mrf.mxu0
      %v226 = vadd.f32 %v115, %v225
      %227 = vdwg.mxu0
      %228 = vmatprep.subr.mxu0 0.0
      %229 = vmatpush1.msra.mxu0 0.0
      %230 = vmatprep.subr.mxu0 0.0
      %231 = vmatpush1.msra.mxu0 0.0
      %232 = vmatprep.subr.mxu0 0.0
      %233 = vmatpush1.msra.mxu0 0.0
      %234 = vmatprep.subr.mxu0 0.0
      %235 = vmatpush1.msra.mxu0 0.0
      %236 = vmatprep.subr.mxu0 0.0
      %237 = vmatpush1.msra.mxu0 0.0
      %238 = vmatprep.subr.mxu0 0.0
      %239 = vmatpush1.msra.mxu0 0.0
      %240 = vmatprep.subr.mxu0 0.0
      %241 = vmatpush1.msra.mxu0 0.0
      %242 = vmatprep.subr.mxu0 0.0
      %243 = vmatpush1.msra.mxu0 0.0
      %244 = vmatprep.subr.mxu0 0.0
      %245 = vmatpush1.msra.mxu0 0.0
      %246 = vmatprep.subr.mxu0 0.0
      %247 = vmatpush1.msra.mxu0 0.0
      %248 = vmatprep.subr.mxu0 0.0
      %249 = vmatpush1.msra.mxu0 0.0
      %250 = vmatprep.subr.mxu0 0.0
      %251 = vmatpush1.msra.mxu0 0.0
      %252 = vmatprep.subr.mxu0 0.0
      %253 = vmatpush1.msra.mxu0 0.0
      %254 = vmatprep.subr.mxu0 0.0
      %255 = vmatpush1.msra.mxu0 0.0
      %256 = vmatprep.subr.mxu0 0.0
      %257 = vmatpush1.msra.mxu0 0.0
      %258 = vmatprep.subr.mxu0 %v98
      %259 = vmatpush1.msra.mxu0 %v97
      %260 = vmatprep.subr.mxu0 0.0
      %261 = vmatpush2.msra.mxu0 0.0
      %262 = vmatprep.subr.mxu0 0.0
      %263 = vmatpush2.msra.mxu0 0.0
      %264 = vmatprep.subr.mxu0 0.0
      %265 = vmatpush2.msra.mxu0 0.0
      %266 = vmatprep.subr.mxu0 0.0
      %267 = vmatpush2.msra.mxu0 0.0
      %268 = vmatprep.subr.mxu0 0.0
      %269 = vmatpush2.msra.mxu0 0.0
      %270 = vmatprep.subr.mxu0 0.0
      %271 = vmatpush2.msra.mxu0 0.0
      %272 = vmatprep.subr.mxu0 0.0
      %273 = vmatpush2.msra.mxu0 0.0
      %274 = vmatprep.subr.mxu0 0.0
      %275 = vmatpush2.msra.mxu0 0.0
      %276 = vmatprep.subr.mxu0 0.0
      %277 = vmatpush2.msra.mxu0 0.0
      %278 = vmatprep.subr.mxu0 0.0
      %279 = vmatpush2.msra.mxu0 0.0
      %280 = vmatprep.subr.mxu0 0.0
      %281 = vmatpush2.msra.mxu0 0.0
      %282 = vmatprep.subr.mxu0 0.0
      %283 = vmatpush2.msra.mxu0 0.0
      %284 = vmatprep.subr.mxu0 0.0
      %285 = vmatpush2.msra.mxu0 0.0
      %286 = vmatprep.subr.mxu0 0.0
      %287 = vmatpush2.msra.mxu0 0.0
      %288 = vmatprep.subr.mxu0 0.0
      %289 = vmatpush2.msra.mxu0 0.0
      %290 = vmatprep.subr.mxu0 0.0
      %291 = vmatpush2.msra.mxu0 0.0
      %292 = vmatprep.mubr.f32.mxu0 0.0
      %293 = vmatmul.mubr.f32.gmra.mxu0 %v155
      %v294 = vpop.f32.mrf.mxu0
      %v295 = vadd.f32 %v119, %v294
      %v296 = vpop.f32.mrf.mxu0
      %v297 = vadd.f32 %v123, %v296
      %298 = vdwg.mxu0
      %299 = vmatprep.subr.mxu0 0.0
      %300 = vmatpush1.msra.mxu0 0.0
      %301 = vmatprep.subr.mxu0 0.0
      %302 = vmatpush1.msra.mxu0 0.0
      %303 = vmatprep.subr.mxu0 0.0
      %304 = vmatpush1.msra.mxu0 0.0
      %305 = vmatprep.subr.mxu0 0.0
      %306 = vmatpush1.msra.mxu0 0.0
      %307 = vmatprep.subr.mxu0 0.0
      %308 = vmatpush1.msra.mxu0 0.0
      %309 = vmatprep.subr.mxu0 0.0
      %310 = vmatpush1.msra.mxu0 0.0
      %311 = vmatprep.subr.mxu0 0.0
      %312 = vmatpush1.msra.mxu0 0.0
      %313 = vmatprep.subr.mxu0 0.0
      %314 = vmatpush1.msra.mxu0 0.0
      %315 = vmatprep.subr.mxu0 0.0
      %316 = vmatpush1.msra.mxu0 0.0
      %317 = vmatprep.subr.mxu0 0.0
      %318 = vmatpush1.msra.mxu0 0.0
      %319 = vmatprep.subr.mxu0 0.0
      %320 = vmatpush1.msra.mxu0 0.0
      %321 = vmatprep.subr.mxu0 0.0
      %322 = vmatpush1.msra.mxu0 0.0
      %323 = vmatprep.subr.mxu0 0.0
      %324 = vmatpush1.msra.mxu0 0.0
      %325 = vmatprep.subr.mxu0 0.0
      %326 = vmatpush1.msra.mxu0 0.0
      %327 = vmatprep.subr.mxu0 0.0
      %328 = vmatpush1.msra.mxu0 0.0
      %329 = vmatprep.subr.mxu0 %v100
      %330 = vmatpush1.msra.mxu0 %v99
      %331 = vmatprep.subr.mxu0 0.0
      %332 = vmatpush2.msra.mxu0 0.0
      %333 = vmatprep.subr.mxu0 0.0
      %334 = vmatpush2.msra.mxu0 0.0
      %335 = vmatprep.subr.mxu0 0.0
      %336 = vmatpush2.msra.mxu0 0.0
      %337 = vmatprep.subr.mxu0 0.0
      %338 = vmatpush2.msra.mxu0 0.0
      %339 = vmatprep.subr.mxu0 0.0
      %340 = vmatpush2.msra.mxu0 0.0
      %341 = vmatprep.subr.mxu0 0.0
      %342 = vmatpush2.msra.mxu0 0.0
      %343 = vmatprep.subr.mxu0 0.0
      %344 = vmatpush2.msra.mxu0 0.0
      %345 = vmatprep.subr.mxu0 0.0
      %346 = vmatpush2.msra.mxu0 0.0
      %347 = vmatprep.subr.mxu0 0.0
      %348 = vmatpush2.msra.mxu0 0.0
      %349 = vmatprep.subr.mxu0 0.0
      %350 = vmatpush2.msra.mxu0 0.0
      %351 = vmatprep.subr.mxu0 0.0
      %352 = vmatpush2.msra.mxu0 0.0
      %353 = vmatprep.subr.mxu0 0.0
      %354 = vmatpush2.msra.mxu0 0.0
      %355 = vmatprep.subr.mxu0 0.0
      %356 = vmatpush2.msra.mxu0 0.0
      %357 = vmatprep.subr.mxu0 0.0
      %358 = vmatpush2.msra.mxu0 0.0
      %359 = vmatprep.subr.mxu0 0.0
      %360 = vmatpush2.msra.mxu0 0.0
      %361 = vmatprep.subr.mxu0 0.0
      %362 = vmatpush2.msra.mxu0 0.0
      %363 = vmatprep.mubr.f32.mxu0 0.0
      %364 = vmatmul.mubr.f32.gmra.mxu0 %v155
      %v365 = vpop.f32.mrf.mxu0
      %v366 = vadd.f32 %v127, %v365
      %v367 = vpop.f32.mrf.mxu0
      %v368 = vadd.f32 %v131, %v367
      %369 = vdwg.mxu0
      %370 = vmatprep.subr.mxu0 0.0
      %371 = vmatpush1.msra.mxu0 0.0
      %372 = vmatprep.subr.mxu0 0.0
      %373 = vmatpush1.msra.mxu0 0.0
      %374 = vmatprep.subr.mxu0 0.0
      %375 = vmatpush1.msra.mxu0 0.0
      %376 = vmatprep.subr.mxu0 0.0
      %377 = vmatpush1.msra.mxu0 0.0
      %378 = vmatprep.subr.mxu0 0.0
      %379 = vmatpush1.msra.mxu0 0.0
      %380 = vmatprep.subr.mxu0 0.0
      %381 = vmatpush1.msra.mxu0 0.0
      %382 = vmatprep.subr.mxu0 0.0
      %383 = vmatpush1.msra.mxu0 0.0
      %384 = vmatprep.subr.mxu0 0.0
      %385 = vmatpush1.msra.mxu0 0.0
      %386 = vmatprep.subr.mxu0 0.0
      %387 = vmatpush1.msra.mxu0 0.0
      %388 = vmatprep.subr.mxu0 0.0
      %389 = vmatpush1.msra.mxu0 0.0
      %390 = vmatprep.subr.mxu0 0.0
      %391 = vmatpush1.msra.mxu0 0.0
      %392 = vmatprep.subr.mxu0 0.0
      %393 = vmatpush1.msra.mxu0 0.0
      %394 = vmatprep.subr.mxu0 0.0
      %395 = vmatpush1.msra.mxu0 0.0
      %396 = vmatprep.subr.mxu0 0.0
      %397 = vmatpush1.msra.mxu0 0.0
      %398 = vmatprep.subr.mxu0 0.0
      %399 = vmatpush1.msra.mxu0 0.0
      %400 = vmatprep.subr.mxu0 %v102
      %401 = vmatpush1.msra.mxu0 %v101
      %402 = vmatprep.subr.mxu0 0.0
      %403 = vmatpush2.msra.mxu0 0.0
      %404 = vmatprep.subr.mxu0 0.0
      %405 = vmatpush2.msra.mxu0 0.0
      %406 = vmatprep.subr.mxu0 0.0
      %407 = vmatpush2.msra.mxu0 0.0
      %408 = vmatprep.subr.mxu0 0.0
      %409 = vmatpush2.msra.mxu0 0.0
      %410 = vmatprep.subr.mxu0 0.0
      %411 = vmatpush2.msra.mxu0 0.0
      %412 = vmatprep.subr.mxu0 0.0
      %413 = vmatpush2.msra.mxu0 0.0
      %414 = vmatprep.subr.mxu0 0.0
      %415 = vmatpush2.msra.mxu0 0.0
      %416 = vmatprep.subr.mxu0 0.0
      %417 = vmatpush2.msra.mxu0 0.0
      %418 = vmatprep.subr.mxu0 0.0
      %419 = vmatpush2.msra.mxu0 0.0
      %420 = vmatprep.subr.mxu0 0.0
      %421 = vmatpush2.msra.mxu0 0.0
      %422 = vmatprep.subr.mxu0 0.0
      %423 = vmatpush2.msra.mxu0 0.0
      %424 = vmatprep.subr.mxu0 0.0
      %425 = vmatpush2.msra.mxu0 0.0
      %426 = vmatprep.subr.mxu0 0.0
      %427 = vmatpush2.msra.mxu0 0.0
      %428 = vmatprep.subr.mxu0 0.0
      %429 = vmatpush2.msra.mxu0 0.0
      %430 = vmatprep.subr.mxu0 0.0
      %431 = vmatpush2.msra.mxu0 0.0
      %432 = vmatprep.subr.mxu0 0.0
      %433 = vmatpush2.msra.mxu0 0.0
      %434 = vmatprep.mubr.f32.mxu0 0.0
      %435 = vmatmul.mubr.f32.gmra.mxu0 %v155
      %v436 = vpop.f32.mrf.mxu0
      %v437 = vadd.f32 %v135, %v436
      %v438 = vpop.f32.mrf.mxu0
      %v439 = vadd.f32 %v139, %v438
      %440 = vdwg.mxu0
      %441 = vmatprep.subr.mxu0 0.0
      %442 = vmatpush1.msra.mxu0 0.0
      %443 = vmatprep.subr.mxu0 0.0
      %444 = vmatpush1.msra.mxu0 0.0
      %445 = vmatprep.subr.mxu0 0.0
      %446 = vmatpush1.msra.mxu0 0.0
      %447 = vmatprep.subr.mxu0 0.0
      %448 = vmatpush1.msra.mxu0 0.0
      %449 = vmatprep.subr.mxu0 0.0
      %450 = vmatpush1.msra.mxu0 0.0
      %451 = vmatprep.subr.mxu0 0.0
      %452 = vmatpush1.msra.mxu0 0.0
      %453 = vmatprep.subr.mxu0 0.0
      %454 = vmatpush1.msra.mxu0 0.0
      %455 = vmatprep.subr.mxu0 0.0
      %456 = vmatpush1.msra.mxu0 0.0
      %457 = vmatprep.subr.mxu0 0.0
      %458 = vmatpush1.msra.mxu0 0.0
      %459 = vmatprep.subr.mxu0 0.0
      %460 = vmatpush1.msra.mxu0 0.0
      %461 = vmatprep.subr.mxu0 0.0
      %462 = vmatpush1.msra.mxu0 0.0
      %463 = vmatprep.subr.mxu0 0.0
      %464 = vmatpush1.msra.mxu0 0.0
      %465 = vmatprep.subr.mxu0 0.0
      %466 = vmatpush1.msra.mxu0 0.0
      %467 = vmatprep.subr.mxu0 0.0
      %468 = vmatpush1.msra.mxu0 0.0
      %469 = vmatprep.subr.mxu0 0.0
      %470 = vmatpush1.msra.mxu0 0.0
      %471 = vmatprep.subr.mxu0 0.0
      %472 = vmatpush1.msra.mxu0 %v103
      %473 = vmatprep.subr.mxu0 0.0
      %474 = vmatpush2.msra.mxu0 0.0
      %475 = vmatprep.subr.mxu0 0.0
      %476 = vmatpush2.msra.mxu0 0.0
      %477 = vmatprep.subr.mxu0 0.0
      %478 = vmatpush2.msra.mxu0 0.0
      %479 = vmatprep.subr.mxu0 0.0
      %480 = vmatpush2.msra.mxu0 0.0
      %481 = vmatprep.subr.mxu0 0.0
      %482 = vmatpush2.msra.mxu0 0.0
      %483 = vmatprep.subr.mxu0 0.0
      %484 = vmatpush2.msra.mxu0 0.0
      %485 = vmatprep.subr.mxu0 0.0
      %486 = vmatpush2.msra.mxu0 0.0
      %487 = vmatprep.subr.mxu0 0.0
      %488 = vmatpush2.msra.mxu0 0.0
      %489 = vmatprep.subr.mxu0 0.0
      %490 = vmatpush2.msra.mxu0 0.0
      %491 = vmatprep.subr.mxu0 0.0
      %492 = vmatpush2.msra.mxu0 0.0
      %493 = vmatprep.subr.mxu0 0.0
      %494 = vmatpush2.msra.mxu0 0.0
      %495 = vmatprep.subr.mxu0 0.0
      %496 = vmatpush2.msra.mxu0 0.0
      %497 = vmatprep.subr.mxu0 0.0
      %498 = vmatpush2.msra.mxu0 0.0
      %499 = vmatprep.subr.mxu0 0.0
      %500 = vmatpush2.msra.mxu0 0.0
      %501 = vmatprep.subr.mxu0 0.0
      %502 = vmatpush2.msra.mxu0 0.0
      %503 = vmatprep.subr.mxu0 0.0
      %504 = vmatpush2.msra.mxu0 0.0
      %505 = vmatprep.mubr.f32.mxu0 0.0
      %506 = vmatmul.mubr.f32.gmra.mxu0 %v155
      %v507 = vpop.f32.mrf.mxu0
      %v508 = vadd.f32 %v143, %v507
      %v509 = vpop.f32.mrf.mxu0
      %510 = vdwg.mxu0
      %511 = vst [vmem:[#allocation3] sm:$0xff] %v224
      %512 = vst [vmem:[#allocation3 + $0x8] sm:$0xff] %v226
      %513 = vst [vmem:[#allocation3 + $0x10] sm:$0xff] %v295
      %514 = vst [vmem:[#allocation3 + $0x18] sm:$0xff] %v297
      %515 = vst [vmem:[#allocation3 + $0x20] sm:$0xff] %v366
      %516 = vst [vmem:[#allocation3 + $0x28] sm:$0xff] %v368
      %517 = vst [vmem:[#allocation3 + $0x30] sm:$0xff] %v437
      %518 = vst [vmem:[#allocation3 + $0x38] sm:$0xff] %v439
      %519 = vst [vmem:[#allocation3 + $0x40] sm:$0xff] %v508
      %520 = vst [vmem:[%s5] sm:$0xff] %v224
    $region25: #{_lora_hypnet_apply.1} parent=1 // pred_fallthru
      _
    %s521 = smul.u32 0, 128
    %s522 = sadd.s32 %s521, 640
    %s523 = smul.u32 0, 128
    %s524 = sadd.s32 %s523, 128
    %s525 = sshra.s32 %s522, 7
    %s526 = sand.u32 %s522, 127
    %s527 = smul.addr %s525, 8
    %s528 = scalar_lea.vmem [#allocation3], %s527
    %v529 = vld [vmem:[%s528] sm:$0xff]
    %v530 = vlaneseq
    %v531 = vshrl.u32 %v530, 7
    %v532 = vsub.s32 0, %v531
    %v533 = vrot.slane %v529, %v532
    %535 = vbcast.lane.b32.xlu0 %v533, 256
    %v536 = vpop.permute.xlu0 %535
    %s538 = sor.u32 256, 8
    %539 = vbcast.lane.b32.xlu0 %v533, %s538
    %v540 = vpop.permute.xlu0 %539
    %s542 = sor.u32 256, 16
    %543 = vbcast.lane.b32.xlu0 %v533, %s542
    %v544 = vpop.permute.xlu0 %543
    %s546 = sor.u32 256, 24
    %547 = vbcast.lane.b32.xlu0 %v533, %s546
    %v548 = vpop.permute.xlu0 %547
    %s550 = sor.u32 256, 32
    %551 = vbcast.lane.b32.xlu0 %v533, %s550
    %v552 = vpop.permute.xlu0 %551
    %s554 = sor.u32 256, 40
    %555 = vbcast.lane.b32.xlu0 %v533, %s554
    %v556 = vpop.permute.xlu0 %555
    %s558 = sor.u32 256, 48
    %559 = vbcast.lane.b32.xlu0 %v533, %s558
    %v560 = vpop.permute.xlu0 %559
    %s562 = sor.u32 256, 56
    %563 = vbcast.lane.b32.xlu0 %v533, %s562
    %v564 = vpop.permute.xlu0 %563
    %s566 = sor.u32 256, 64
    %567 = vbcast.lane.b32.xlu0 %v533, %s566
    %v568 = vpop.permute.xlu0 %567
    %s570 = sor.u32 256, 72
    %571 = vbcast.lane.b32.xlu0 %v533, %s570
    %v572 = vpop.permute.xlu0 %571
    %s574 = sor.u32 256, 80
    %575 = vbcast.lane.b32.xlu0 %v533, %s574
    %v576 = vpop.permute.xlu0 %575
    %s578 = sor.u32 256, 88
    %579 = vbcast.lane.b32.xlu0 %v533, %s578
    %v580 = vpop.permute.xlu0 %579
    %s582 = sor.u32 256, 96
    %583 = vbcast.lane.b32.xlu0 %v533, %s582
    %v584 = vpop.permute.xlu0 %583
    %s586 = sor.u32 256, 104
    %587 = vbcast.lane.b32.xlu0 %v533, %s586
    %v588 = vpop.permute.xlu0 %587
    %s590 = sor.u32 256, 112
    %591 = vbcast.lane.b32.xlu0 %v533, %s590
    %v592 = vpop.permute.xlu0 %591
    %s594 = sor.u32 256, 120
    %595 = vbcast.lane.b32.xlu0 %v533, %s594
    %v596 = vpop.permute.xlu0 %595
    %v597 = vlaneseq
    %v598 = vshrl.u32 %v597, 7
    %v599 = vsub.s32 1, %v598
    %v600 = vrot.slane %v529, %v599
    %602 = vbcast.lane.b32.xlu0 %v600, 256
    %v603 = vpop.permute.xlu0 %602
    %s605 = sor.u32 256, 8
    %606 = vbcast.lane.b32.xlu0 %v600, %s605
    %v607 = vpop.permute.xlu0 %606
    %s609 = sor.u32 256, 16
    %610 = vbcast.lane.b32.xlu0 %v600, %s609
    %v611 = vpop.permute.xlu0 %610
    %s613 = sor.u32 256, 24
    %614 = vbcast.lane.b32.xlu0 %v600, %s613
    %v615 = vpop.permute.xlu0 %614
    %s617 = sor.u32 256, 32
    %618 = vbcast.lane.b32.xlu0 %v600, %s617
    %v619 = vpop.permute.xlu0 %618
    %s621 = sor.u32 256, 40
    %622 = vbcast.lane.b32.xlu0 %v600, %s621
    %v623 = vpop.permute.xlu0 %622
    %s625 = sor.u32 256, 48
    %626 = vbcast.lane.b32.xlu0 %v600, %s625
    %v627 = vpop.permute.xlu0 %626
    %s629 = sor.u32 256, 56
    %630 = vbcast.lane.b32.xlu0 %v600, %s629
    %v631 = vpop.permute.xlu0 %630
    %s633 = sor.u32 256, 64
    %634 = vbcast.lane.b32.xlu0 %v600, %s633
    %v635 = vpop.permute.xlu0 %634
    %s637 = sor.u32 256, 72
    %638 = vbcast.lane.b32.xlu0 %v600, %s637
    %v639 = vpop.permute.xlu0 %638
    %s641 = sor.u32 256, 80
    %642 = vbcast.lane.b32.xlu0 %v600, %s641
    %v643 = vpop.permute.xlu0 %642
    %s645 = sor.u32 256, 88
    %646 = vbcast.lane.b32.xlu0 %v600, %s645
    %v647 = vpop.permute.xlu0 %646
    %s649 = sor.u32 256, 96
    %650 = vbcast.lane.b32.xlu0 %v600, %s649
    %v651 = vpop.permute.xlu0 %650
    %s653 = sor.u32 256, 104
    %654 = vbcast.lane.b32.xlu0 %v600, %s653
    %v655 = vpop.permute.xlu0 %654
    %s657 = sor.u32 256, 112
    %658 = vbcast.lane.b32.xlu0 %v600, %s657
    %v659 = vpop.permute.xlu0 %658
    %s661 = sor.u32 256, 120
    %662 = vbcast.lane.b32.xlu0 %v600, %s661
    %v663 = vpop.permute.xlu0 %662
    %v664 = vlaneseq
    %v665 = vshrl.u32 %v664, 7
    %v666 = vsub.s32 2, %v665
    %v667 = vrot.slane %v529, %v666
    %669 = vbcast.lane.b32.xlu0 %v667, 256
    %v670 = vpop.permute.xlu0 %669
    %s672 = sor.u32 256, 8
    %673 = vbcast.lane.b32.xlu0 %v667, %s672
    %v674 = vpop.permute.xlu0 %673
    %s676 = sor.u32 256, 16
    %677 = vbcast.lane.b32.xlu0 %v667, %s676
    %v678 = vpop.permute.xlu0 %677
    %s680 = sor.u32 256, 24
    %681 = vbcast.lane.b32.xlu0 %v667, %s680
    %v682 = vpop.permute.xlu0 %681
    %s684 = sor.u32 256, 32
    %685 = vbcast.lane.b32.xlu0 %v667, %s684
    %v686 = vpop.permute.xlu0 %685
    %s688 = sor.u32 256, 40
    %689 = vbcast.lane.b32.xlu0 %v667, %s688
    %v690 = vpop.permute.xlu0 %689
    %s692 = sor.u32 256, 48
    %693 = vbcast.lane.b32.xlu0 %v667, %s692
    %v694 = vpop.permute.xlu0 %693
    %s696 = sor.u32 256, 56
    %697 = vbcast.lane.b32.xlu0 %v667, %s696
    %v698 = vpop.permute.xlu0 %697
    %s700 = sor.u32 256, 64
    %701 = vbcast.lane.b32.xlu0 %v667, %s700
    %v702 = vpop.permute.xlu0 %701
    %s704 = sor.u32 256, 72
    %705 = vbcast.lane.b32.xlu0 %v667, %s704
    %v706 = vpop.permute.xlu0 %705
    %s708 = sor.u32 256, 80
    %709 = vbcast.lane.b32.xlu0 %v667, %s708
    %v710 = vpop.permute.xlu0 %709
    %s712 = sor.u32 256, 88
    %713 = vbcast.lane.b32.xlu0 %v667, %s712
    %v714 = vpop.permute.xlu0 %713
    %s716 = sor.u32 256, 96
    %717 = vbcast.lane.b32.xlu0 %v667, %s716
    %v718 = vpop.permute.xlu0 %717
    %s720 = sor.u32 256, 104
    %721 = vbcast.lane.b32.xlu0 %v667, %s720
    %v722 = vpop.permute.xlu0 %721
    %s724 = sor.u32 256, 112
    %725 = vbcast.lane.b32.xlu0 %v667, %s724
    %v726 = vpop.permute.xlu0 %725
    %s728 = sor.u32 256, 120
    %729 = vbcast.lane.b32.xlu0 %v667, %s728
    %v730 = vpop.permute.xlu0 %729
    %v731 = vlaneseq
    %v732 = vshrl.u32 %v731, 7
    %v733 = vsub.s32 3, %v732
    %v734 = vrot.slane %v529, %v733
    %736 = vbcast.lane.b32.xlu0 %v734, 256
    %v737 = vpop.permute.xlu0 %736
    %s739 = sor.u32 256, 8
    %740 = vbcast.lane.b32.xlu0 %v734, %s739
    %v741 = vpop.permute.xlu0 %740
    %s743 = sor.u32 256, 16
    %744 = vbcast.lane.b32.xlu0 %v734, %s743
    %v745 = vpop.permute.xlu0 %744
    %s747 = sor.u32 256, 24
    %748 = vbcast.lane.b32.xlu0 %v734, %s747
    %v749 = vpop.permute.xlu0 %748
    %s751 = sor.u32 256, 32
    %752 = vbcast.lane.b32.xlu0 %v734, %s751
    %v753 = vpop.permute.xlu0 %752
    %s755 = sor.u32 256, 40
    %756 = vbcast.lane.b32.xlu0 %v734, %s755
    %v757 = vpop.permute.xlu0 %756
    %s759 = sor.u32 256, 48
    %760 = vbcast.lane.b32.xlu0 %v734, %s759
    %v761 = vpop.permute.xlu0 %760
    %s763 = sor.u32 256, 56
    %764 = vbcast.lane.b32.xlu0 %v734, %s763
    %v765 = vpop.permute.xlu0 %764
    %s767 = sor.u32 256, 64
    %768 = vbcast.lane.b32.xlu0 %v734, %s767
    %v769 = vpop.permute.xlu0 %768
    %s771 = sor.u32 256, 72
    %772 = vbcast.lane.b32.xlu0 %v734, %s771
    %v773 = vpop.permute.xlu0 %772
    %s775 = sor.u32 256, 80
    %776 = vbcast.lane.b32.xlu0 %v734, %s775
    %v777 = vpop.permute.xlu0 %776
    %s779 = sor.u32 256, 88
    %780 = vbcast.lane.b32.xlu0 %v734, %s779
    %v781 = vpop.permute.xlu0 %780
    %s783 = sor.u32 256, 96
    %784 = vbcast.lane.b32.xlu0 %v734, %s783
    %v785 = vpop.permute.xlu0 %784
    %s787 = sor.u32 256, 104
    %788 = vbcast.lane.b32.xlu0 %v734, %s787
    %v789 = vpop.permute.xlu0 %788
    %s791 = sor.u32 256, 112
    %792 = vbcast.lane.b32.xlu0 %v734, %s791
    %v793 = vpop.permute.xlu0 %792
    %s795 = sor.u32 256, 120
    %796 = vbcast.lane.b32.xlu0 %v734, %s795
    %v797 = vpop.permute.xlu0 %796
    %v798 = vlaneseq
    %v799 = vshrl.u32 %v798, 7
    %v800 = vsub.s32 4, %v799
    %v801 = vrot.slane %v529, %v800
    %803 = vbcast.lane.b32.xlu0 %v801, 256
    %v804 = vpop.permute.xlu0 %803
    %s806 = sor.u32 256, 8
    %807 = vbcast.lane.b32.xlu0 %v801, %s806
    %v808 = vpop.permute.xlu0 %807
    %s810 = sor.u32 256, 16
    %811 = vbcast.lane.b32.xlu0 %v801, %s810
    %v812 = vpop.permute.xlu0 %811
    %s814 = sor.u32 256, 24
    %815 = vbcast.lane.b32.xlu0 %v801, %s814
    %v816 = vpop.permute.xlu0 %815
    %s818 = sor.u32 256, 32
    %819 = vbcast.lane.b32.xlu0 %v801, %s818
    %v820 = vpop.permute.xlu0 %819
    %s822 = sor.u32 256, 40
    %823 = vbcast.lane.b32.xlu0 %v801, %s822
    %v824 = vpop.permute.xlu0 %823
    %s826 = sor.u32 256, 48
    %827 = vbcast.lane.b32.xlu0 %v801, %s826
    %v828 = vpop.permute.xlu0 %827
    %s830 = sor.u32 256, 56
    %831 = vbcast.lane.b32.xlu0 %v801, %s830
    %v832 = vpop.permute.xlu0 %831
    %s834 = sor.u32 256, 64
    %835 = vbcast.lane.b32.xlu0 %v801, %s834
    %v836 = vpop.permute.xlu0 %835
    %s838 = sor.u32 256, 72
    %839 = vbcast.lane.b32.xlu0 %v801, %s838
    %v840 = vpop.permute.xlu0 %839
    %s842 = sor.u32 256, 80
    %843 = vbcast.lane.b32.xlu0 %v801, %s842
    %v844 = vpop.permute.xlu0 %843
    %s846 = sor.u32 256, 88
    %847 = vbcast.lane.b32.xlu0 %v801, %s846
    %v848 = vpop.permute.xlu0 %847
    %s850 = sor.u32 256, 96
    %851 = vbcast.lane.b32.xlu0 %v801, %s850
    %v852 = vpop.permute.xlu0 %851
    %s854 = sor.u32 256, 104
    %855 = vbcast.lane.b32.xlu0 %v801, %s854
    %v856 = vpop.permute.xlu0 %855
    %s858 = sor.u32 256, 112
    %859 = vbcast.lane.b32.xlu0 %v801, %s858
    %v860 = vpop.permute.xlu0 %859
    %s862 = sor.u32 256, 120
    %863 = vbcast.lane.b32.xlu0 %v801, %s862
    %v864 = vpop.permute.xlu0 %863
    %v865 = vlaneseq
    %v866 = vshrl.u32 %v865, 7
    %v867 = vsub.s32 5, %v866
    %v868 = vrot.slane %v529, %v867
    %870 = vbcast.lane.b32.xlu0 %v868, 256
    %v871 = vpop.permute.xlu0 %870
    %s873 = sor.u32 256, 8
    %874 = vbcast.lane.b32.xlu0 %v868, %s873
    %v875 = vpop.permute.xlu0 %874
    %s877 = sor.u32 256, 16
    %878 = vbcast.lane.b32.xlu0 %v868, %s877
    %v879 = vpop.permute.xlu0 %878
    %s881 = sor.u32 256, 24
    %882 = vbcast.lane.b32.xlu0 %v868, %s881
    %v883 = vpop.permute.xlu0 %882
    %s885 = sor.u32 256, 32
    %886 = vbcast.lane.b32.xlu0 %v868, %s885
    %v887 = vpop.permute.xlu0 %886
    %s889 = sor.u32 256, 40
    %890 = vbcast.lane.b32.xlu0 %v868, %s889
    %v891 = vpop.permute.xlu0 %890
    %s893 = sor.u32 256, 48
    %894 = vbcast.lane.b32.xlu0 %v868, %s893
    %v895 = vpop.permute.xlu0 %894
    %s897 = sor.u32 256, 56
    %898 = vbcast.lane.b32.xlu0 %v868, %s897
    %v899 = vpop.permute.xlu0 %898
    %s901 = sor.u32 256, 64
    %902 = vbcast.lane.b32.xlu0 %v868, %s901
    %v903 = vpop.permute.xlu0 %902
    %s905 = sor.u32 256, 72
    %906 = vbcast.lane.b32.xlu0 %v868, %s905
    %v907 = vpop.permute.xlu0 %906
    %s909 = sor.u32 256, 80
    %910 = vbcast.lane.b32.xlu0 %v868, %s909
    %v911 = vpop.permute.xlu0 %910
    %s913 = sor.u32 256, 88
    %914 = vbcast.lane.b32.xlu0 %v868, %s913
    %v915 = vpop.permute.xlu0 %914
    %s917 = sor.u32 256, 96
    %918 = vbcast.lane.b32.xlu0 %v868, %s917
    %v919 = vpop.permute.xlu0 %918
    %s921 = sor.u32 256, 104
    %922 = vbcast.lane.b32.xlu0 %v868, %s921
    %v923 = vpop.permute.xlu0 %922
    %s925 = sor.u32 256, 112
    %926 = vbcast.lane.b32.xlu0 %v868, %s925
    %v927 = vpop.permute.xlu0 %926
    %s929 = sor.u32 256, 120
    %930 = vbcast.lane.b32.xlu0 %v868, %s929
    %v931 = vpop.permute.xlu0 %930
    %v932 = vlaneseq
    %v933 = vshrl.u32 %v932, 7
    %v934 = vsub.s32 6, %v933
    %v935 = vrot.slane %v529, %v934
    %937 = vbcast.lane.b32.xlu0 %v935, 256
    %v938 = vpop.permute.xlu0 %937
    %s940 = sor.u32 256, 8
    %941 = vbcast.lane.b32.xlu0 %v935, %s940
    %v942 = vpop.permute.xlu0 %941
    %s944 = sor.u32 256, 16
    %945 = vbcast.lane.b32.xlu0 %v935, %s944
    %v946 = vpop.permute.xlu0 %945
    %s948 = sor.u32 256, 24
    %949 = vbcast.lane.b32.xlu0 %v935, %s948
    %v950 = vpop.permute.xlu0 %949
    %s952 = sor.u32 256, 32
    %953 = vbcast.lane.b32.xlu0 %v935, %s952
    %v954 = vpop.permute.xlu0 %953
    %s956 = sor.u32 256, 40
    %957 = vbcast.lane.b32.xlu0 %v935, %s956
    %v958 = vpop.permute.xlu0 %957
    %s960 = sor.u32 256, 48
    %961 = vbcast.lane.b32.xlu0 %v935, %s960
    %v962 = vpop.permute.xlu0 %961
    %s964 = sor.u32 256, 56
    %965 = vbcast.lane.b32.xlu0 %v935, %s964
    %v966 = vpop.permute.xlu0 %965
    %s968 = sor.u32 256, 64
    %969 = vbcast.lane.b32.xlu0 %v935, %s968
    %v970 = vpop.permute.xlu0 %969
    %s972 = sor.u32 256, 72
    %973 = vbcast.lane.b32.xlu0 %v935, %s972
    %v974 = vpop.permute.xlu0 %973
    %s976 = sor.u32 256, 80
    %977 = vbcast.lane.b32.xlu0 %v935, %s976
    %v978 = vpop.permute.xlu0 %977
    %s980 = sor.u32 256, 88
    %981 = vbcast.lane.b32.xlu0 %v935, %s980
    %v982 = vpop.permute.xlu0 %981
    %s984 = sor.u32 256, 96
    %985 = vbcast.lane.b32.xlu0 %v935, %s984
    %v986 = vpop.permute.xlu0 %985
    %s988 = sor.u32 256, 104
    %989 = vbcast.lane.b32.xlu0 %v935, %s988
    %v990 = vpop.permute.xlu0 %989
    %s992 = sor.u32 256, 112
    %993 = vbcast.lane.b32.xlu0 %v935, %s992
    %v994 = vpop.permute.xlu0 %993
    %s996 = sor.u32 256, 120
    %997 = vbcast.lane.b32.xlu0 %v935, %s996
    %v998 = vpop.permute.xlu0 %997
    %v999 = vlaneseq
    %v1000 = vshrl.u32 %v999, 7
    %v1001 = vsub.s32 7, %v1000
    %v1002 = vrot.slane %v529, %v1001
    %1004 = vbcast.lane.b32.xlu0 %v1002, 256
    %v1005 = vpop.permute.xlu0 %1004
    %s1007 = sor.u32 256, 8
    %1008 = vbcast.lane.b32.xlu0 %v1002, %s1007
    %v1009 = vpop.permute.xlu0 %1008
    %s1011 = sor.u32 256, 16
    %1012 = vbcast.lane.b32.xlu0 %v1002, %s1011
    %v1013 = vpop.permute.xlu0 %1012
    %s1015 = sor.u32 256, 24
    %1016 = vbcast.lane.b32.xlu0 %v1002, %s1015
    %v1017 = vpop.permute.xlu0 %1016
    %s1019 = sor.u32 256, 32
    %1020 = vbcast.lane.b32.xlu0 %v1002, %s1019
    %v1021 = vpop.permute.xlu0 %1020
    %s1023 = sor.u32 256, 40
    %1024 = vbcast.lane.b32.xlu0 %v1002, %s1023
    %v1025 = vpop.permute.xlu0 %1024
    %s1027 = sor.u32 256, 48
    %1028 = vbcast.lane.b32.xlu0 %v1002, %s1027
    %v1029 = vpop.permute.xlu0 %1028
    %s1031 = sor.u32 256, 56
    %1032 = vbcast.lane.b32.xlu0 %v1002, %s1031
    %v1033 = vpop.permute.xlu0 %1032
    %s1035 = sor.u32 256, 64
    %1036 = vbcast.lane.b32.xlu0 %v1002, %s1035
    %v1037 = vpop.permute.xlu0 %1036
    %s1039 = sor.u32 256, 72
    %1040 = vbcast.lane.b32.xlu0 %v1002, %s1039
    %v1041 = vpop.permute.xlu0 %1040
    %s1043 = sor.u32 256, 80
    %1044 = vbcast.lane.b32.xlu0 %v1002, %s1043
    %v1045 = vpop.permute.xlu0 %1044
    %s1047 = sor.u32 256, 88
    %1048 = vbcast.lane.b32.xlu0 %v1002, %s1047
    %v1049 = vpop.permute.xlu0 %1048
    %s1051 = sor.u32 256, 96
    %1052 = vbcast.lane.b32.xlu0 %v1002, %s1051
    %v1053 = vpop.permute.xlu0 %1052
    %s1055 = sor.u32 256, 104
    %1056 = vbcast.lane.b32.xlu0 %v1002, %s1055
    %v1057 = vpop.permute.xlu0 %1056
    %s1059 = sor.u32 256, 112
    %1060 = vbcast.lane.b32.xlu0 %v1002, %s1059
    %v1061 = vpop.permute.xlu0 %1060
    %s1063 = sor.u32 256, 120
    %1064 = vbcast.lane.b32.xlu0 %v1002, %s1063
    %v1065 = vpop.permute.xlu0 %1064
    %s1066 = sshra.s32 %s524, 7
    %s1067 = sand.u32 %s524, 127
    %s1068 = smul.addr %s1066, 8
    %s1069 = scalar_lea.vmem [#allocation3], %s1068
    %v1070 = vld [vmem:[%s1069] sm:$0xff]
    %v1072 = vcombine.high %v1070, %v1070
    %v1074 = vunpack.c.l.s4 1966171168
    %v1075 = vunpack.c.0.s8 %v1074
    %v1076 = vlaneseq
    %v1077 = vshrl.u32 %v1076, 7
    %v1078 = vsub.s32 %v1075, %v1077
    %v1079 = vrot.slane %v1070, %v1078
    %v1081 = vunpack.c.l.s4 1966171168
    %v1082 = vunpack.c.0.s8 %v1081
    %v1083 = vlaneseq
    %v1084 = vshrl.u32 %v1083, 7
    %v1085 = vsub.s32 %v1082, %v1084
    %v1086 = vrot.slane %v1072, %v1085
    %v1087 = vcombine.high %v1079, %v1079
    %v1088 = vcombine.high %v1086, %v1086
    %v1090 = vunpack.c.l.s4 1966171168
    %v1091 = vunpack.c.0.s8 %v1090
    %v1092 = vlaneseq
    %v1093 = vshrl.u32 %v1092, 7
    %v1094 = vsub.s32 %v1091, %v1093
    %v1095 = vrot.slane %v1079, %v1094
    %v1097 = vunpack.c.l.s4 1966171168
    %v1098 = vunpack.c.0.s8 %v1097
    %v1099 = vlaneseq
    %v1100 = vshrl.u32 %v1099, 7
    %v1101 = vsub.s32 %v1098, %v1100
    %v1102 = vrot.slane %v1086, %v1101
    %v1104 = vunpack.c.l.s4 1966171168
    %v1105 = vunpack.c.0.s8 %v1104
    %v1106 = vlaneseq
    %v1107 = vshrl.u32 %v1106, 7
    %v1108 = vsub.s32 %v1105, %v1107
    %v1109 = vrot.slane %v1087, %v1108
    %v1111 = vunpack.c.l.s4 1966171168
    %v1112 = vunpack.c.0.s8 %v1111
    %v1113 = vlaneseq
    %v1114 = vshrl.u32 %v1113, 7
    %v1115 = vsub.s32 %v1112, %v1114
    %v1116 = vrot.slane %v1088, %v1115
    %v1117 = vcombine.high %v1095, %v1095
    %v1118 = vcombine.high %v1102, %v1102
    %v1119 = vcombine.high %v1109, %v1109
    %v1120 = vcombine.high %v1116, %v1116
    %s1129 = sadd.s32 %s521, 768
    %s1130 = sadd.s32 %s523, 256
    %s1131 = sshra.s32 %s1129, 7
    %s1132 = sand.u32 %s1129, 127
    %s1133 = smul.addr %s1131, 8
    %s1134 = scalar_lea.vmem [#allocation3], %s1133
    %v1135 = vld [vmem:[%s1134] sm:$0xff]
    %v1136 = vlaneseq
    %v1137 = vshrl.u32 %v1136, 7
    %v1138 = vsub.s32 0, %v1137
    %v1139 = vrot.slane %v1135, %v1138
    %1141 = vbcast.lane.b32.xlu0 %v1139, 256
    %v1142 = vpop.permute.xlu0 %1141
    %s1144 = sor.u32 256, 8
    %1145 = vbcast.lane.b32.xlu0 %v1139, %s1144
    %v1146 = vpop.permute.xlu0 %1145
    %s1148 = sor.u32 256, 16
    %1149 = vbcast.lane.b32.xlu0 %v1139, %s1148
    %v1150 = vpop.permute.xlu0 %1149
    %s1152 = sor.u32 256, 24
    %1153 = vbcast.lane.b32.xlu0 %v1139, %s1152
    %v1154 = vpop.permute.xlu0 %1153
    %s1156 = sor.u32 256, 32
    %1157 = vbcast.lane.b32.xlu0 %v1139, %s1156
    %v1158 = vpop.permute.xlu0 %1157
    %s1160 = sor.u32 256, 40
    %1161 = vbcast.lane.b32.xlu0 %v1139, %s1160
    %v1162 = vpop.permute.xlu0 %1161
    %s1164 = sor.u32 256, 48
    %1165 = vbcast.lane.b32.xlu0 %v1139, %s1164
    %v1166 = vpop.permute.xlu0 %1165
    %s1168 = sor.u32 256, 56
    %1169 = vbcast.lane.b32.xlu0 %v1139, %s1168
    %v1170 = vpop.permute.xlu0 %1169
    %s1172 = sor.u32 256, 64
    %1173 = vbcast.lane.b32.xlu0 %v1139, %s1172
    %v1174 = vpop.permute.xlu0 %1173
    %s1176 = sor.u32 256, 72
    %1177 = vbcast.lane.b32.xlu0 %v1139, %s1176
    %v1178 = vpop.permute.xlu0 %1177
    %s1180 = sor.u32 256, 80
    %1181 = vbcast.lane.b32.xlu0 %v1139, %s1180
    %v1182 = vpop.permute.xlu0 %1181
    %s1184 = sor.u32 256, 88
    %1185 = vbcast.lane.b32.xlu0 %v1139, %s1184
    %v1186 = vpop.permute.xlu0 %1185
    %s1188 = sor.u32 256, 96
    %1189 = vbcast.lane.b32.xlu0 %v1139, %s1188
    %v1190 = vpop.permute.xlu0 %1189
    %s1192 = sor.u32 256, 104
    %1193 = vbcast.lane.b32.xlu0 %v1139, %s1192
    %v1194 = vpop.permute.xlu0 %1193
    %s1196 = sor.u32 256, 112
    %1197 = vbcast.lane.b32.xlu0 %v1139, %s1196
    %v1198 = vpop.permute.xlu0 %1197
    %s1200 = sor.u32 256, 120
    %1201 = vbcast.lane.b32.xlu0 %v1139, %s1200
    %v1202 = vpop.permute.xlu0 %1201
    %v1203 = vlaneseq
    %v1204 = vshrl.u32 %v1203, 7
    %v1205 = vsub.s32 1, %v1204
    %v1206 = vrot.slane %v1135, %v1205
    %1208 = vbcast.lane.b32.xlu0 %v1206, 256
    %v1209 = vpop.permute.xlu0 %1208
    %s1211 = sor.u32 256, 8
    %1212 = vbcast.lane.b32.xlu0 %v1206, %s1211
    %v1213 = vpop.permute.xlu0 %1212
    %s1215 = sor.u32 256, 16
    %1216 = vbcast.lane.b32.xlu0 %v1206, %s1215
    %v1217 = vpop.permute.xlu0 %1216
    %s1219 = sor.u32 256, 24
    %1220 = vbcast.lane.b32.xlu0 %v1206, %s1219
    %v1221 = vpop.permute.xlu0 %1220
    %s1223 = sor.u32 256, 32
    %1224 = vbcast.lane.b32.xlu0 %v1206, %s1223
    %v1225 = vpop.permute.xlu0 %1224
    %s1227 = sor.u32 256, 40
    %1228 = vbcast.lane.b32.xlu0 %v1206, %s1227
    %v1229 = vpop.permute.xlu0 %1228
    %s1231 = sor.u32 256, 48
    %1232 = vbcast.lane.b32.xlu0 %v1206, %s1231
    %v1233 = vpop.permute.xlu0 %1232
    %s1235 = sor.u32 256, 56
    %1236 = vbcast.lane.b32.xlu0 %v1206, %s1235
    %v1237 = vpop.permute.xlu0 %1236
    %s1239 = sor.u32 256, 64
    %1240 = vbcast.lane.b32.xlu0 %v1206, %s1239
    %v1241 = vpop.permute.xlu0 %1240
    %s1243 = sor.u32 256, 72
    %1244 = vbcast.lane.b32.xlu0 %v1206, %s1243
    %v1245 = vpop.permute.xlu0 %1244
    %s1247 = sor.u32 256, 80
    %1248 = vbcast.lane.b32.xlu0 %v1206, %s1247
    %v1249 = vpop.permute.xlu0 %1248
    %s1251 = sor.u32 256, 88
    %1252 = vbcast.lane.b32.xlu0 %v1206, %s1251
    %v1253 = vpop.permute.xlu0 %1252
    %s1255 = sor.u32 256, 96
    %1256 = vbcast.lane.b32.xlu0 %v1206, %s1255
    %v1257 = vpop.permute.xlu0 %1256
    %s1259 = sor.u32 256, 104
    %1260 = vbcast.lane.b32.xlu0 %v1206, %s1259
    %v1261 = vpop.permute.xlu0 %1260
    %s1263 = sor.u32 256, 112
    %1264 = vbcast.lane.b32.xlu0 %v1206, %s1263
    %v1265 = vpop.permute.xlu0 %1264
    %s1267 = sor.u32 256, 120
    %1268 = vbcast.lane.b32.xlu0 %v1206, %s1267
    %v1269 = vpop.permute.xlu0 %1268
    %v1270 = vlaneseq
    %v1271 = vshrl.u32 %v1270, 7
    %v1272 = vsub.s32 2, %v1271
    %v1273 = vrot.slane %v1135, %v1272
    %1275 = vbcast.lane.b32.xlu0 %v1273, 256
    %v1276 = vpop.permute.xlu0 %1275
    %s1278 = sor.u32 256, 8
    %1279 = vbcast.lane.b32.xlu0 %v1273, %s1278
    %v1280 = vpop.permute.xlu0 %1279
    %s1282 = sor.u32 256, 16
    %1283 = vbcast.lane.b32.xlu0 %v1273, %s1282
    %v1284 = vpop.permute.xlu0 %1283
    %s1286 = sor.u32 256, 24
    %1287 = vbcast.lane.b32.xlu0 %v1273, %s1286
    %v1288 = vpop.permute.xlu0 %1287
    %s1290 = sor.u32 256, 32
    %1291 = vbcast.lane.b32.xlu0 %v1273, %s1290
    %v1292 = vpop.permute.xlu0 %1291
    %s1294 = sor.u32 256, 40
    %1295 = vbcast.lane.b32.xlu0 %v1273, %s1294
    %v1296 = vpop.permute.xlu0 %1295
    %s1298 = sor.u32 256, 48
    %1299 = vbcast.lane.b32.xlu0 %v1273, %s1298
    %v1300 = vpop.permute.xlu0 %1299
    %s1302 = sor.u32 256, 56
    %1303 = vbcast.lane.b32.xlu0 %v1273, %s1302
    %v1304 = vpop.permute.xlu0 %1303
    %s1306 = sor.u32 256, 64
    %1307 = vbcast.lane.b32.xlu0 %v1273, %s1306
    %v1308 = vpop.permute.xlu0 %1307
    %s1310 = sor.u32 256, 72
    %1311 = vbcast.lane.b32.xlu0 %v1273, %s1310
    %v1312 = vpop.permute.xlu0 %1311
    %s1314 = sor.u32 256, 80
    %1315 = vbcast.lane.b32.xlu0 %v1273, %s1314
    %v1316 = vpop.permute.xlu0 %1315
    %s1318 = sor.u32 256, 88
    %1319 = vbcast.lane.b32.xlu0 %v1273, %s1318
    %v1320 = vpop.permute.xlu0 %1319
    %s1322 = sor.u32 256, 96
    %1323 = vbcast.lane.b32.xlu0 %v1273, %s1322
    %v1324 = vpop.permute.xlu0 %1323
    %s1326 = sor.u32 256, 104
    %1327 = vbcast.lane.b32.xlu0 %v1273, %s1326
    %v1328 = vpop.permute.xlu0 %1327
    %s1330 = sor.u32 256, 112
    %1331 = vbcast.lane.b32.xlu0 %v1273, %s1330
    %v1332 = vpop.permute.xlu0 %1331
    %s1334 = sor.u32 256, 120
    %1335 = vbcast.lane.b32.xlu0 %v1273, %s1334
    %v1336 = vpop.permute.xlu0 %1335
    %v1337 = vlaneseq
    %v1338 = vshrl.u32 %v1337, 7
    %v1339 = vsub.s32 3, %v1338
    %v1340 = vrot.slane %v1135, %v1339
    %1342 = vbcast.lane.b32.xlu0 %v1340, 256
    %v1343 = vpop.permute.xlu0 %1342
    %s1345 = sor.u32 256, 8
    %1346 = vbcast.lane.b32.xlu0 %v1340, %s1345
    %v1347 = vpop.permute.xlu0 %1346
    %s1349 = sor.u32 256, 16
    %1350 = vbcast.lane.b32.xlu0 %v1340, %s1349
    %v1351 = vpop.permute.xlu0 %1350
    %s1353 = sor.u32 256, 24
    %1354 = vbcast.lane.b32.xlu0 %v1340, %s1353
    %v1355 = vpop.permute.xlu0 %1354
    %s1357 = sor.u32 256, 32
    %1358 = vbcast.lane.b32.xlu0 %v1340, %s1357
    %v1359 = vpop.permute.xlu0 %1358
    %s1361 = sor.u32 256, 40
    %1362 = vbcast.lane.b32.xlu0 %v1340, %s1361
    %v1363 = vpop.permute.xlu0 %1362
    %s1365 = sor.u32 256, 48
    %1366 = vbcast.lane.b32.xlu0 %v1340, %s1365
    %v1367 = vpop.permute.xlu0 %1366
    %s1369 = sor.u32 256, 56
    %1370 = vbcast.lane.b32.xlu0 %v1340, %s1369
    %v1371 = vpop.permute.xlu0 %1370
    %s1373 = sor.u32 256, 64
    %1374 = vbcast.lane.b32.xlu0 %v1340, %s1373
    %v1375 = vpop.permute.xlu0 %1374
    %s1377 = sor.u32 256, 72
    %1378 = vbcast.lane.b32.xlu0 %v1340, %s1377
    %v1379 = vpop.permute.xlu0 %1378
    %s1381 = sor.u32 256, 80
    %1382 = vbcast.lane.b32.xlu0 %v1340, %s1381
    %v1383 = vpop.permute.xlu0 %1382
    %s1385 = sor.u32 256, 88
    %1386 = vbcast.lane.b32.xlu0 %v1340, %s1385
    %v1387 = vpop.permute.xlu0 %1386
    %s1389 = sor.u32 256, 96
    %1390 = vbcast.lane.b32.xlu0 %v1340, %s1389
    %v1391 = vpop.permute.xlu0 %1390
    %s1393 = sor.u32 256, 104
    %1394 = vbcast.lane.b32.xlu0 %v1340, %s1393
    %v1395 = vpop.permute.xlu0 %1394
    %s1397 = sor.u32 256, 112
    %1398 = vbcast.lane.b32.xlu0 %v1340, %s1397
    %v1399 = vpop.permute.xlu0 %1398
    %s1401 = sor.u32 256, 120
    %1402 = vbcast.lane.b32.xlu0 %v1340, %s1401
    %v1403 = vpop.permute.xlu0 %1402
    %v1404 = vlaneseq
    %v1405 = vshrl.u32 %v1404, 7
    %v1406 = vsub.s32 4, %v1405
    %v1407 = vrot.slane %v1135, %v1406
    %1409 = vbcast.lane.b32.xlu0 %v1407, 256
    %v1410 = vpop.permute.xlu0 %1409
    %s1412 = sor.u32 256, 8
    %1413 = vbcast.lane.b32.xlu0 %v1407, %s1412
    %v1414 = vpop.permute.xlu0 %1413
    %s1416 = sor.u32 256, 16
    %1417 = vbcast.lane.b32.xlu0 %v1407, %s1416
    %v1418 = vpop.permute.xlu0 %1417
    %s1420 = sor.u32 256, 24
    %1421 = vbcast.lane.b32.xlu0 %v1407, %s1420
    %v1422 = vpop.permute.xlu0 %1421
    %s1424 = sor.u32 256, 32
    %1425 = vbcast.lane.b32.xlu0 %v1407, %s1424
    %v1426 = vpop.permute.xlu0 %1425
    %s1428 = sor.u32 256, 40
    %1429 = vbcast.lane.b32.xlu0 %v1407, %s1428
    %v1430 = vpop.permute.xlu0 %1429
    %s1432 = sor.u32 256, 48
    %1433 = vbcast.lane.b32.xlu0 %v1407, %s1432
    %v1434 = vpop.permute.xlu0 %1433
    %s1436 = sor.u32 256, 56
    %1437 = vbcast.lane.b32.xlu0 %v1407, %s1436
    %v1438 = vpop.permute.xlu0 %1437
    %s1440 = sor.u32 256, 64
    %1441 = vbcast.lane.b32.xlu0 %v1407, %s1440
    %v1442 = vpop.permute.xlu0 %1441
    %s1444 = sor.u32 256, 72
    %1445 = vbcast.lane.b32.xlu0 %v1407, %s1444
    %v1446 = vpop.permute.xlu0 %1445
    %s1448 = sor.u32 256, 80
    %1449 = vbcast.lane.b32.xlu0 %v1407, %s1448
    %v1450 = vpop.permute.xlu0 %1449
    %s1452 = sor.u32 256, 88
    %1453 = vbcast.lane.b32.xlu0 %v1407, %s1452
    %v1454 = vpop.permute.xlu0 %1453
    %s1456 = sor.u32 256, 96
    %1457 = vbcast.lane.b32.xlu0 %v1407, %s1456
    %v1458 = vpop.permute.xlu0 %1457
    %s1460 = sor.u32 256, 104
    %1461 = vbcast.lane.b32.xlu0 %v1407, %s1460
    %v1462 = vpop.permute.xlu0 %1461
    %s1464 = sor.u32 256, 112
    %1465 = vbcast.lane.b32.xlu0 %v1407, %s1464
    %v1466 = vpop.permute.xlu0 %1465
    %s1468 = sor.u32 256, 120
    %1469 = vbcast.lane.b32.xlu0 %v1407, %s1468
    %v1470 = vpop.permute.xlu0 %1469
    %v1471 = vlaneseq
    %v1472 = vshrl.u32 %v1471, 7
    %v1473 = vsub.s32 5, %v1472
    %v1474 = vrot.slane %v1135, %v1473
    %1476 = vbcast.lane.b32.xlu0 %v1474, 256
    %v1477 = vpop.permute.xlu0 %1476
    %s1479 = sor.u32 256, 8
    %1480 = vbcast.lane.b32.xlu0 %v1474, %s1479
    %v1481 = vpop.permute.xlu0 %1480
    %s1483 = sor.u32 256, 16
    %1484 = vbcast.lane.b32.xlu0 %v1474, %s1483
    %v1485 = vpop.permute.xlu0 %1484
    %s1487 = sor.u32 256, 24
    %1488 = vbcast.lane.b32.xlu0 %v1474, %s1487
    %v1489 = vpop.permute.xlu0 %1488
    %s1491 = sor.u32 256, 32
    %1492 = vbcast.lane.b32.xlu0 %v1474, %s1491
    %v1493 = vpop.permute.xlu0 %1492
    %s1495 = sor.u32 256, 40
    %1496 = vbcast.lane.b32.xlu0 %v1474, %s1495
    %v1497 = vpop.permute.xlu0 %1496
    %s1499 = sor.u32 256, 48
    %1500 = vbcast.lane.b32.xlu0 %v1474, %s1499
    %v1501 = vpop.permute.xlu0 %1500
    %s1503 = sor.u32 256, 56
    %1504 = vbcast.lane.b32.xlu0 %v1474, %s1503
    %v1505 = vpop.permute.xlu0 %1504
    %s1507 = sor.u32 256, 64
    %1508 = vbcast.lane.b32.xlu0 %v1474, %s1507
    %v1509 = vpop.permute.xlu0 %1508
    %s1511 = sor.u32 256, 72
    %1512 = vbcast.lane.b32.xlu0 %v1474, %s1511
    %v1513 = vpop.permute.xlu0 %1512
    %s1515 = sor.u32 256, 80
    %1516 = vbcast.lane.b32.xlu0 %v1474, %s1515
    %v1517 = vpop.permute.xlu0 %1516
    %s1519 = sor.u32 256, 88
    %1520 = vbcast.lane.b32.xlu0 %v1474, %s1519
    %v1521 = vpop.permute.xlu0 %1520
    %s1523 = sor.u32 256, 96
    %1524 = vbcast.lane.b32.xlu0 %v1474, %s1523
    %v1525 = vpop.permute.xlu0 %1524
    %s1527 = sor.u32 256, 104
    %1528 = vbcast.lane.b32.xlu0 %v1474, %s1527
    %v1529 = vpop.permute.xlu0 %1528
    %s1531 = sor.u32 256, 112
    %1532 = vbcast.lane.b32.xlu0 %v1474, %s1531
    %v1533 = vpop.permute.xlu0 %1532
    %s1535 = sor.u32 256, 120
    %1536 = vbcast.lane.b32.xlu0 %v1474, %s1535
    %v1537 = vpop.permute.xlu0 %1536
    %v1538 = vlaneseq
    %v1539 = vshrl.u32 %v1538, 7
    %v1540 = vsub.s32 6, %v1539
    %v1541 = vrot.slane %v1135, %v1540
    %1543 = vbcast.lane.b32.xlu0 %v1541, 256
    %v1544 = vpop.permute.xlu0 %1543
    %s1546 = sor.u32 256, 8
    %1547 = vbcast.lane.b32.xlu0 %v1541, %s1546
    %v1548 = vpop.permute.xlu0 %1547
    %s1550 = sor.u32 256, 16
    %1551 = vbcast.lane.b32.xlu0 %v1541, %s1550
    %v1552 = vpop.permute.xlu0 %1551
    %s1554 = sor.u32 256, 24
    %1555 = vbcast.lane.b32.xlu0 %v1541, %s1554
    %v1556 = vpop.permute.xlu0 %1555
    %s1558 = sor.u32 256, 32
    %1559 = vbcast.lane.b32.xlu0 %v1541, %s1558
    %v1560 = vpop.permute.xlu0 %1559
    %s1562 = sor.u32 256, 40
    %1563 = vbcast.lane.b32.xlu0 %v1541, %s1562
    %v1564 = vpop.permute.xlu0 %1563
    %s1566 = sor.u32 256, 48
    %1567 = vbcast.lane.b32.xlu0 %v1541, %s1566
    %v1568 = vpop.permute.xlu0 %1567
    %s1570 = sor.u32 256, 56
    %1571 = vbcast.lane.b32.xlu0 %v1541, %s1570
    %v1572 = vpop.permute.xlu0 %1571
    %s1574 = sor.u32 256, 64
    %1575 = vbcast.lane.b32.xlu0 %v1541, %s1574
    %v1576 = vpop.permute.xlu0 %1575
    %s1578 = sor.u32 256, 72
    %1579 = vbcast.lane.b32.xlu0 %v1541, %s1578
    %v1580 = vpop.permute.xlu0 %1579
    %s1582 = sor.u32 256, 80
    %1583 = vbcast.lane.b32.xlu0 %v1541, %s1582
    %v1584 = vpop.permute.xlu0 %1583
    %s1586 = sor.u32 256, 88
    %1587 = vbcast.lane.b32.xlu0 %v1541, %s1586
    %v1588 = vpop.permute.xlu0 %1587
    %s1590 = sor.u32 256, 96
    %1591 = vbcast.lane.b32.xlu0 %v1541, %s1590
    %v1592 = vpop.permute.xlu0 %1591
    %s1594 = sor.u32 256, 104
    %1595 = vbcast.lane.b32.xlu0 %v1541, %s1594
    %v1596 = vpop.permute.xlu0 %1595
    %s1598 = sor.u32 256, 112
    %1599 = vbcast.lane.b32.xlu0 %v1541, %s1598
    %v1600 = vpop.permute.xlu0 %1599
    %s1602 = sor.u32 256, 120
    %1603 = vbcast.lane.b32.xlu0 %v1541, %s1602
    %v1604 = vpop.permute.xlu0 %1603
    %v1605 = vlaneseq
    %v1606 = vshrl.u32 %v1605, 7
    %v1607 = vsub.s32 7, %v1606
    %v1608 = vrot.slane %v1135, %v1607
    %1610 = vbcast.lane.b32.xlu0 %v1608, 256
    %v1611 = vpop.permute.xlu0 %1610
    %s1613 = sor.u32 256, 8
    %1614 = vbcast.lane.b32.xlu0 %v1608, %s1613
    %v1615 = vpop.permute.xlu0 %1614
    %s1617 = sor.u32 256, 16
    %1618 = vbcast.lane.b32.xlu0 %v1608, %s1617
    %v1619 = vpop.permute.xlu0 %1618
    %s1621 = sor.u32 256, 24
    %1622 = vbcast.lane.b32.xlu0 %v1608, %s1621
    %v1623 = vpop.permute.xlu0 %1622
    %s1625 = sor.u32 256, 32
    %1626 = vbcast.lane.b32.xlu0 %v1608, %s1625
    %v1627 = vpop.permute.xlu0 %1626
    %s1629 = sor.u32 256, 40
    %1630 = vbcast.lane.b32.xlu0 %v1608, %s1629
    %v1631 = vpop.permute.xlu0 %1630
    %s1633 = sor.u32 256, 48
    %1634 = vbcast.lane.b32.xlu0 %v1608, %s1633
    %v1635 = vpop.permute.xlu0 %1634
    %s1637 = sor.u32 256, 56
    %1638 = vbcast.lane.b32.xlu0 %v1608, %s1637
    %v1639 = vpop.permute.xlu0 %1638
    %s1641 = sor.u32 256, 64
    %1642 = vbcast.lane.b32.xlu0 %v1608, %s1641
    %v1643 = vpop.permute.xlu0 %1642
    %s1645 = sor.u32 256, 72
    %1646 = vbcast.lane.b32.xlu0 %v1608, %s1645
    %v1647 = vpop.permute.xlu0 %1646
    %s1649 = sor.u32 256, 80
    %1650 = vbcast.lane.b32.xlu0 %v1608, %s1649
    %v1651 = vpop.permute.xlu0 %1650
    %s1653 = sor.u32 256, 88
    %1654 = vbcast.lane.b32.xlu0 %v1608, %s1653
    %v1655 = vpop.permute.xlu0 %1654
    %s1657 = sor.u32 256, 96
    %1658 = vbcast.lane.b32.xlu0 %v1608, %s1657
    %v1659 = vpop.permute.xlu0 %1658
    %s1661 = sor.u32 256, 104
    %1662 = vbcast.lane.b32.xlu0 %v1608, %s1661
    %v1663 = vpop.permute.xlu0 %1662
    %s1665 = sor.u32 256, 112
    %1666 = vbcast.lane.b32.xlu0 %v1608, %s1665
    %v1667 = vpop.permute.xlu0 %1666
    %s1669 = sor.u32 256, 120
    %1670 = vbcast.lane.b32.xlu0 %v1608, %s1669
    %v1671 = vpop.permute.xlu0 %1670
    %s1672 = sshra.s32 %s1130, 7
    %s1673 = sand.u32 %s1130, 127
    %s1674 = smul.addr %s1672, 8
    %s1675 = scalar_lea.vmem [#allocation3], %s1674
    %v1676 = vld [vmem:[%s1675] sm:$0xff]
    %v1678 = vcombine.high %v1676, %v1676
    %v1680 = vunpack.c.l.s4 1966171168
    %v1681 = vunpack.c.0.s8 %v1680
    %v1682 = vlaneseq
    %v1683 = vshrl.u32 %v1682, 7
    %v1684 = vsub.s32 %v1681, %v1683
    %v1685 = vrot.slane %v1676, %v1684
    %v1687 = vunpack.c.l.s4 1966171168
    %v1688 = vunpack.c.0.s8 %v1687
    %v1689 = vlaneseq
    %v1690 = vshrl.u32 %v1689, 7
    %v1691 = vsub.s32 %v1688, %v1690
    %v1692 = vrot.slane %v1678, %v1691
    %v1693 = vcombine.high %v1685, %v1685
    %v1694 = vcombine.high %v1692, %v1692
    %v1696 = vunpack.c.l.s4 1966171168
    %v1697 = vunpack.c.0.s8 %v1696
    %v1698 = vlaneseq
    %v1699 = vshrl.u32 %v1698, 7
    %v1700 = vsub.s32 %v1697, %v1699
    %v1701 = vrot.slane %v1685, %v1700
    %v1703 = vunpack.c.l.s4 1966171168
    %v1704 = vunpack.c.0.s8 %v1703
    %v1705 = vlaneseq
    %v1706 = vshrl.u32 %v1705, 7
    %v1707 = vsub.s32 %v1704, %v1706
    %v1708 = vrot.slane %v1692, %v1707
    %v1710 = vunpack.c.l.s4 1966171168
    %v1711 = vunpack.c.0.s8 %v1710
    %v1712 = vlaneseq
    %v1713 = vshrl.u32 %v1712, 7
    %v1714 = vsub.s32 %v1711, %v1713
    %v1715 = vrot.slane %v1693, %v1714
    %v1717 = vunpack.c.l.s4 1966171168
    %v1718 = vunpack.c.0.s8 %v1717
    %v1719 = vlaneseq
    %v1720 = vshrl.u32 %v1719, 7
    %v1721 = vsub.s32 %v1718, %v1720
    %v1722 = vrot.slane %v1694, %v1721
    %v1723 = vcombine.high %v1701, %v1701
    %v1724 = vcombine.high %v1708, %v1708
    %v1725 = vcombine.high %v1715, %v1715
    %v1726 = vcombine.high %v1722, %v1722
    %s1727 = sadd.s32 %s521, 896
    %s1728 = sadd.s32 %s523, 384
    %s1729 = sshra.s32 %s1727, 7
    %s1730 = sand.u32 %s1727, 127
    %s1731 = smul.addr %s1729, 8
    %s1732 = scalar_lea.vmem [#allocation3], %s1731
    %v1733 = vld [vmem:[%s1732] sm:$0xff]
    %v1734 = vlaneseq
    %v1735 = vshrl.u32 %v1734, 7
    %v1736 = vsub.s32 0, %v1735
    %v1737 = vrot.slane %v1733, %v1736
    %1739 = vbcast.lane.b32.xlu0 %v1737, 256
    %v1740 = vpop.permute.xlu0 %1739
    %s1742 = sor.u32 256, 8
    %1743 = vbcast.lane.b32.xlu0 %v1737, %s1742
    %v1744 = vpop.permute.xlu0 %1743
    %s1746 = sor.u32 256, 16
    %1747 = vbcast.lane.b32.xlu0 %v1737, %s1746
    %v1748 = vpop.permute.xlu0 %1747
    %s1750 = sor.u32 256, 24
    %1751 = vbcast.lane.b32.xlu0 %v1737, %s1750
    %v1752 = vpop.permute.xlu0 %1751
    %s1754 = sor.u32 256, 32
    %1755 = vbcast.lane.b32.xlu0 %v1737, %s1754
    %v1756 = vpop.permute.xlu0 %1755
    %s1758 = sor.u32 256, 40
    %1759 = vbcast.lane.b32.xlu0 %v1737, %s1758
    %v1760 = vpop.permute.xlu0 %1759
    %s1762 = sor.u32 256, 48
    %1763 = vbcast.lane.b32.xlu0 %v1737, %s1762
    %v1764 = vpop.permute.xlu0 %1763
    %s1766 = sor.u32 256, 56
    %1767 = vbcast.lane.b32.xlu0 %v1737, %s1766
    %v1768 = vpop.permute.xlu0 %1767
    %s1770 = sor.u32 256, 64
    %1771 = vbcast.lane.b32.xlu0 %v1737, %s1770
    %v1772 = vpop.permute.xlu0 %1771
    %s1774 = sor.u32 256, 72
    %1775 = vbcast.lane.b32.xlu0 %v1737, %s1774
    %v1776 = vpop.permute.xlu0 %1775
    %s1778 = sor.u32 256, 80
    %1779 = vbcast.lane.b32.xlu0 %v1737, %s1778
    %v1780 = vpop.permute.xlu0 %1779
    %s1782 = sor.u32 256, 88
    %1783 = vbcast.lane.b32.xlu0 %v1737, %s1782
    %v1784 = vpop.permute.xlu0 %1783
    %s1786 = sor.u32 256, 96
    %1787 = vbcast.lane.b32.xlu0 %v1737, %s1786
    %v1788 = vpop.permute.xlu0 %1787
    %s1790 = sor.u32 256, 104
    %1791 = vbcast.lane.b32.xlu0 %v1737, %s1790
    %v1792 = vpop.permute.xlu0 %1791
    %s1794 = sor.u32 256, 112
    %1795 = vbcast.lane.b32.xlu0 %v1737, %s1794
    %v1796 = vpop.permute.xlu0 %1795
    %s1798 = sor.u32 256, 120
    %1799 = vbcast.lane.b32.xlu0 %v1737, %s1798
    %v1800 = vpop.permute.xlu0 %1799
    %v1801 = vlaneseq
    %v1802 = vshrl.u32 %v1801, 7
    %v1803 = vsub.s32 1, %v1802
    %v1804 = vrot.slane %v1733, %v1803
    %1806 = vbcast.lane.b32.xlu0 %v1804, 256
    %v1807 = vpop.permute.xlu0 %1806
    %s1809 = sor.u32 256, 8
    %1810 = vbcast.lane.b32.xlu0 %v1804, %s1809
    %v1811 = vpop.permute.xlu0 %1810
    %s1813 = sor.u32 256, 16
    %1814 = vbcast.lane.b32.xlu0 %v1804, %s1813
    %v1815 = vpop.permute.xlu0 %1814
    %s1817 = sor.u32 256, 24
    %1818 = vbcast.lane.b32.xlu0 %v1804, %s1817
    %v1819 = vpop.permute.xlu0 %1818
    %s1821 = sor.u32 256, 32
    %1822 = vbcast.lane.b32.xlu0 %v1804, %s1821
    %v1823 = vpop.permute.xlu0 %1822
    %s1825 = sor.u32 256, 40
    %1826 = vbcast.lane.b32.xlu0 %v1804, %s1825
    %v1827 = vpop.permute.xlu0 %1826
    %s1829 = sor.u32 256, 48
    %1830 = vbcast.lane.b32.xlu0 %v1804, %s1829
    %v1831 = vpop.permute.xlu0 %1830
    %s1833 = sor.u32 256, 56
    %1834 = vbcast.lane.b32.xlu0 %v1804, %s1833
    %v1835 = vpop.permute.xlu0 %1834
    %s1837 = sor.u32 256, 64
    %1838 = vbcast.lane.b32.xlu0 %v1804, %s1837
    %v1839 = vpop.permute.xlu0 %1838
    %s1841 = sor.u32 256, 72
    %1842 = vbcast.lane.b32.xlu0 %v1804, %s1841
    %v1843 = vpop.permute.xlu0 %1842
    %s1845 = sor.u32 256, 80
    %1846 = vbcast.lane.b32.xlu0 %v1804, %s1845
    %v1847 = vpop.permute.xlu0 %1846
    %s1849 = sor.u32 256, 88
    %1850 = vbcast.lane.b32.xlu0 %v1804, %s1849
    %v1851 = vpop.permute.xlu0 %1850
    %s1853 = sor.u32 256, 96
    %1854 = vbcast.lane.b32.xlu0 %v1804, %s1853
    %v1855 = vpop.permute.xlu0 %1854
    %s1857 = sor.u32 256, 104
    %1858 = vbcast.lane.b32.xlu0 %v1804, %s1857
    %v1859 = vpop.permute.xlu0 %1858
    %s1861 = sor.u32 256, 112
    %1862 = vbcast.lane.b32.xlu0 %v1804, %s1861
    %v1863 = vpop.permute.xlu0 %1862
    %s1865 = sor.u32 256, 120
    %1866 = vbcast.lane.b32.xlu0 %v1804, %s1865
    %v1867 = vpop.permute.xlu0 %1866
    %v1868 = vlaneseq
    %v1869 = vshrl.u32 %v1868, 7
    %v1870 = vsub.s32 2, %v1869
    %v1871 = vrot.slane %v1733, %v1870
    %1873 = vbcast.lane.b32.xlu0 %v1871, 256
    %v1874 = vpop.permute.xlu0 %1873
    %s1876 = sor.u32 256, 8
    %1877 = vbcast.lane.b32.xlu0 %v1871, %s1876
    %v1878 = vpop.permute.xlu0 %1877
    %s1880 = sor.u32 256, 16
    %1881 = vbcast.lane.b32.xlu0 %v1871, %s1880
    %v1882 = vpop.permute.xlu0 %1881
    %s1884 = sor.u32 256, 24
    %1885 = vbcast.lane.b32.xlu0 %v1871, %s1884
    %v1886 = vpop.permute.xlu0 %1885
    %s1888 = sor.u32 256, 32
    %1889 = vbcast.lane.b32.xlu0 %v1871, %s1888
    %v1890 = vpop.permute.xlu0 %1889
    %s1892 = sor.u32 256, 40
    %1893 = vbcast.lane.b32.xlu0 %v1871, %s1892
    %v1894 = vpop.permute.xlu0 %1893
    %s1896 = sor.u32 256, 48
    %1897 = vbcast.lane.b32.xlu0 %v1871, %s1896
    %v1898 = vpop.permute.xlu0 %1897
    %s1900 = sor.u32 256, 56
    %1901 = vbcast.lane.b32.xlu0 %v1871, %s1900
    %v1902 = vpop.permute.xlu0 %1901
    %s1904 = sor.u32 256, 64
    %1905 = vbcast.lane.b32.xlu0 %v1871, %s1904
    %v1906 = vpop.permute.xlu0 %1905
    %s1908 = sor.u32 256, 72
    %1909 = vbcast.lane.b32.xlu0 %v1871, %s1908
    %v1910 = vpop.permute.xlu0 %1909
    %s1912 = sor.u32 256, 80
    %1913 = vbcast.lane.b32.xlu0 %v1871, %s1912
    %v1914 = vpop.permute.xlu0 %1913
    %s1916 = sor.u32 256, 88
    %1917 = vbcast.lane.b32.xlu0 %v1871, %s1916
    %v1918 = vpop.permute.xlu0 %1917
    %s1920 = sor.u32 256, 96
    %1921 = vbcast.lane.b32.xlu0 %v1871, %s1920
    %v1922 = vpop.permute.xlu0 %1921
    %s1924 = sor.u32 256, 104
    %1925 = vbcast.lane.b32.xlu0 %v1871, %s1924
    %v1926 = vpop.permute.xlu0 %1925
    %s1928 = sor.u32 256, 112
    %1929 = vbcast.lane.b32.xlu0 %v1871, %s1928
    %v1930 = vpop.permute.xlu0 %1929
    %s1932 = sor.u32 256, 120
    %1933 = vbcast.lane.b32.xlu0 %v1871, %s1932
    %v1934 = vpop.permute.xlu0 %1933
    %v1935 = vlaneseq
    %v1936 = vshrl.u32 %v1935, 7
    %v1937 = vsub.s32 3, %v1936
    %v1938 = vrot.slane %v1733, %v1937
    %1940 = vbcast.lane.b32.xlu0 %v1938, 256
    %v1941 = vpop.permute.xlu0 %1940
    %s1943 = sor.u32 256, 8
    %1944 = vbcast.lane.b32.xlu0 %v1938, %s1943
    %v1945 = vpop.permute.xlu0 %1944
    %s1947 = sor.u32 256, 16
    %1948 = vbcast.lane.b32.xlu0 %v1938, %s1947
    %v1949 = vpop.permute.xlu0 %1948
    %s1951 = sor.u32 256, 24
    %1952 = vbcast.lane.b32.xlu0 %v1938, %s1951
    %v1953 = vpop.permute.xlu0 %1952
    %s1955 = sor.u32 256, 32
    %1956 = vbcast.lane.b32.xlu0 %v1938, %s1955
    %v1957 = vpop.permute.xlu0 %1956
    %s1959 = sor.u32 256, 40
    %1960 = vbcast.lane.b32.xlu0 %v1938, %s1959
    %v1961 = vpop.permute.xlu0 %1960
    %s1963 = sor.u32 256, 48
    %1964 = vbcast.lane.b32.xlu0 %v1938, %s1963
    %v1965 = vpop.permute.xlu0 %1964
    %s1967 = sor.u32 256, 56
    %1968 = vbcast.lane.b32.xlu0 %v1938, %s1967
    %v1969 = vpop.permute.xlu0 %1968
    %s1971 = sor.u32 256, 64
    %1972 = vbcast.lane.b32.xlu0 %v1938, %s1971
    %v1973 = vpop.permute.xlu0 %1972
    %s1975 = sor.u32 256, 72
    %1976 = vbcast.lane.b32.xlu0 %v1938, %s1975
    %v1977 = vpop.permute.xlu0 %1976
    %s1979 = sor.u32 256, 80
    %1980 = vbcast.lane.b32.xlu0 %v1938, %s1979
    %v1981 = vpop.permute.xlu0 %1980
    %s1983 = sor.u32 256, 88
    %1984 = vbcast.lane.b32.xlu0 %v1938, %s1983
    %v1985 = vpop.permute.xlu0 %1984
    %s1987 = sor.u32 256, 96
    %1988 = vbcast.lane.b32.xlu0 %v1938, %s1987
    %v1989 = vpop.permute.xlu0 %1988
    %s1991 = sor.u32 256, 104
    %1992 = vbcast.lane.b32.xlu0 %v1938, %s1991
    %v1993 = vpop.permute.xlu0 %1992
    %s1995 = sor.u32 256, 112
    %1996 = vbcast.lane.b32.xlu0 %v1938, %s1995
    %v1997 = vpop.permute.xlu0 %1996
    %s1999 = sor.u32 256, 120
    %2000 = vbcast.lane.b32.xlu0 %v1938, %s1999
    %v2001 = vpop.permute.xlu0 %2000
    %v2002 = vlaneseq
    %v2003 = vshrl.u32 %v2002, 7
    %v2004 = vsub.s32 4, %v2003
    %v2005 = vrot.slane %v1733, %v2004
    %2007 = vbcast.lane.b32.xlu0 %v2005, 256
    %v2008 = vpop.permute.xlu0 %2007
    %s2010 = sor.u32 256, 8
    %2011 = vbcast.lane.b32.xlu0 %v2005, %s2010
    %v2012 = vpop.permute.xlu0 %2011
    %s2014 = sor.u32 256, 16
    %2015 = vbcast.lane.b32.xlu0 %v2005, %s2014
    %v2016 = vpop.permute.xlu0 %2015
    %s2018 = sor.u32 256, 24
    %2019 = vbcast.lane.b32.xlu0 %v2005, %s2018
    %v2020 = vpop.permute.xlu0 %2019
    %s2022 = sor.u32 256, 32
    %2023 = vbcast.lane.b32.xlu0 %v2005, %s2022
    %v2024 = vpop.permute.xlu0 %2023
    %s2026 = sor.u32 256, 40
    %2027 = vbcast.lane.b32.xlu0 %v2005, %s2026
    %v2028 = vpop.permute.xlu0 %2027
    %s2030 = sor.u32 256, 48
    %2031 = vbcast.lane.b32.xlu0 %v2005, %s2030
    %v2032 = vpop.permute.xlu0 %2031
    %s2034 = sor.u32 256, 56
    %2035 = vbcast.lane.b32.xlu0 %v2005, %s2034
    %v2036 = vpop.permute.xlu0 %2035
    %s2038 = sor.u32 256, 64
    %2039 = vbcast.lane.b32.xlu0 %v2005, %s2038
    %v2040 = vpop.permute.xlu0 %2039
    %s2042 = sor.u32 256, 72
    %2043 = vbcast.lane.b32.xlu0 %v2005, %s2042
    %v2044 = vpop.permute.xlu0 %2043
    %s2046 = sor.u32 256, 80
    %2047 = vbcast.lane.b32.xlu0 %v2005, %s2046
    %v2048 = vpop.permute.xlu0 %2047
    %s2050 = sor.u32 256, 88
    %2051 = vbcast.lane.b32.xlu0 %v2005, %s2050
    %v2052 = vpop.permute.xlu0 %2051
    %s2054 = sor.u32 256, 96
    %2055 = vbcast.lane.b32.xlu0 %v2005, %s2054
    %v2056 = vpop.permute.xlu0 %2055
    %s2058 = sor.u32 256, 104
    %2059 = vbcast.lane.b32.xlu0 %v2005, %s2058
    %v2060 = vpop.permute.xlu0 %2059
    %s2062 = sor.u32 256, 112
    %2063 = vbcast.lane.b32.xlu0 %v2005, %s2062
    %v2064 = vpop.permute.xlu0 %2063
    %s2066 = sor.u32 256, 120
    %2067 = vbcast.lane.b32.xlu0 %v2005, %s2066
    %v2068 = vpop.permute.xlu0 %2067
    %v2069 = vlaneseq
    %v2070 = vshrl.u32 %v2069, 7
    %v2071 = vsub.s32 5, %v2070
    %v2072 = vrot.slane %v1733, %v2071
    %2074 = vbcast.lane.b32.xlu0 %v2072, 256
    %v2075 = vpop.permute.xlu0 %2074
    %s2077 = sor.u32 256, 8
    %2078 = vbcast.lane.b32.xlu0 %v2072, %s2077
    %v2079 = vpop.permute.xlu0 %2078
    %s2081 = sor.u32 256, 16
    %2082 = vbcast.lane.b32.xlu0 %v2072, %s2081
    %v2083 = vpop.permute.xlu0 %2082
    %s2085 = sor.u32 256, 24
    %2086 = vbcast.lane.b32.xlu0 %v2072, %s2085
    %v2087 = vpop.permute.xlu0 %2086
    %s2089 = sor.u32 256, 32
    %2090 = vbcast.lane.b32.xlu0 %v2072, %s2089
    %v2091 = vpop.permute.xlu0 %2090
    %s2093 = sor.u32 256, 40
    %2094 = vbcast.lane.b32.xlu0 %v2072, %s2093
    %v2095 = vpop.permute.xlu0 %2094
    %s2097 = sor.u32 256, 48
    %2098 = vbcast.lane.b32.xlu0 %v2072, %s2097
    %v2099 = vpop.permute.xlu0 %2098
    %s2101 = sor.u32 256, 56
    %2102 = vbcast.lane.b32.xlu0 %v2072, %s2101
    %v2103 = vpop.permute.xlu0 %2102
    %s2105 = sor.u32 256, 64
    %2106 = vbcast.lane.b32.xlu0 %v2072, %s2105
    %v2107 = vpop.permute.xlu0 %2106
    %s2109 = sor.u32 256, 72
    %2110 = vbcast.lane.b32.xlu0 %v2072, %s2109
    %v2111 = vpop.permute.xlu0 %2110
    %s2113 = sor.u32 256, 80
    %2114 = vbcast.lane.b32.xlu0 %v2072, %s2113
    %v2115 = vpop.permute.xlu0 %2114
    %s2117 = sor.u32 256, 88
    %2118 = vbcast.lane.b32.xlu0 %v2072, %s2117
    %v2119 = vpop.permute.xlu0 %2118
    %s2121 = sor.u32 256, 96
    %2122 = vbcast.lane.b32.xlu0 %v2072, %s2121
    %v2123 = vpop.permute.xlu0 %2122
    %s2125 = sor.u32 256, 104
    %2126 = vbcast.lane.b32.xlu0 %v2072, %s2125
    %v2127 = vpop.permute.xlu0 %2126
    %s2129 = sor.u32 256, 112
    %2130 = vbcast.lane.b32.xlu0 %v2072, %s2129
    %v2131 = vpop.permute.xlu0 %2130
    %s2133 = sor.u32 256, 120
    %2134 = vbcast.lane.b32.xlu0 %v2072, %s2133
    %v2135 = vpop.permute.xlu0 %2134
    %v2136 = vlaneseq
    %v2137 = vshrl.u32 %v2136, 7
    %v2138 = vsub.s32 6, %v2137
    %v2139 = vrot.slane %v1733, %v2138
    %2141 = vbcast.lane.b32.xlu0 %v2139, 256
    %v2142 = vpop.permute.xlu0 %2141
    %s2144 = sor.u32 256, 8
    %2145 = vbcast.lane.b32.xlu0 %v2139, %s2144
    %v2146 = vpop.permute.xlu0 %2145
    %s2148 = sor.u32 256, 16
    %2149 = vbcast.lane.b32.xlu0 %v2139, %s2148
    %v2150 = vpop.permute.xlu0 %2149
    %s2152 = sor.u32 256, 24
    %2153 = vbcast.lane.b32.xlu0 %v2139, %s2152
    %v2154 = vpop.permute.xlu0 %2153
    %s2156 = sor.u32 256, 32
    %2157 = vbcast.lane.b32.xlu0 %v2139, %s2156
    %v2158 = vpop.permute.xlu0 %2157
    %s2160 = sor.u32 256, 40
    %2161 = vbcast.lane.b32.xlu0 %v2139, %s2160
    %v2162 = vpop.permute.xlu0 %2161
    %s2164 = sor.u32 256, 48
    %2165 = vbcast.lane.b32.xlu0 %v2139, %s2164
    %v2166 = vpop.permute.xlu0 %2165
    %s2168 = sor.u32 256, 56
    %2169 = vbcast.lane.b32.xlu0 %v2139, %s2168
    %v2170 = vpop.permute.xlu0 %2169
    %s2172 = sor.u32 256, 64
    %2173 = vbcast.lane.b32.xlu0 %v2139, %s2172
    %v2174 = vpop.permute.xlu0 %2173
    %s2176 = sor.u32 256, 72
    %2177 = vbcast.lane.b32.xlu0 %v2139, %s2176
    %v2178 = vpop.permute.xlu0 %2177
    %s2180 = sor.u32 256, 80
    %2181 = vbcast.lane.b32.xlu0 %v2139, %s2180
    %v2182 = vpop.permute.xlu0 %2181
    %s2184 = sor.u32 256, 88
    %2185 = vbcast.lane.b32.xlu0 %v2139, %s2184
    %v2186 = vpop.permute.xlu0 %2185
    %s2188 = sor.u32 256, 96
    %2189 = vbcast.lane.b32.xlu0 %v2139, %s2188
    %v2190 = vpop.permute.xlu0 %2189
    %s2192 = sor.u32 256, 104
    %2193 = vbcast.lane.b32.xlu0 %v2139, %s2192
    %v2194 = vpop.permute.xlu0 %2193
    %s2196 = sor.u32 256, 112
    %2197 = vbcast.lane.b32.xlu0 %v2139, %s2196
    %v2198 = vpop.permute.xlu0 %2197
    %s2200 = sor.u32 256, 120
    %2201 = vbcast.lane.b32.xlu0 %v2139, %s2200
    %v2202 = vpop.permute.xlu0 %2201
    %v2203 = vlaneseq
    %v2204 = vshrl.u32 %v2203, 7
    %v2205 = vsub.s32 7, %v2204
    %v2206 = vrot.slane %v1733, %v2205
    %2208 = vbcast.lane.b32.xlu0 %v2206, 256
    %v2209 = vpop.permute.xlu0 %2208
    %s2211 = sor.u32 256, 8
    %2212 = vbcast.lane.b32.xlu0 %v2206, %s2211
    %v2213 = vpop.permute.xlu0 %2212
    %s2215 = sor.u32 256, 16
    %2216 = vbcast.lane.b32.xlu0 %v2206, %s2215
    %v2217 = vpop.permute.xlu0 %2216
    %s2219 = sor.u32 256, 24
    %2220 = vbcast.lane.b32.xlu0 %v2206, %s2219
    %v2221 = vpop.permute.xlu0 %2220
    %s2223 = sor.u32 256, 32
    %2224 = vbcast.lane.b32.xlu0 %v2206, %s2223
    %v2225 = vpop.permute.xlu0 %2224
    %s2227 = sor.u32 256, 40
    %2228 = vbcast.lane.b32.xlu0 %v2206, %s2227
    %v2229 = vpop.permute.xlu0 %2228
    %s2231 = sor.u32 256, 48
    %2232 = vbcast.lane.b32.xlu0 %v2206, %s2231
    %v2233 = vpop.permute.xlu0 %2232
    %s2235 = sor.u32 256, 56
    %2236 = vbcast.lane.b32.xlu0 %v2206, %s2235
    %v2237 = vpop.permute.xlu0 %2236
    %s2239 = sor.u32 256, 64
    %2240 = vbcast.lane.b32.xlu0 %v2206, %s2239
    %v2241 = vpop.permute.xlu0 %2240
    %s2243 = sor.u32 256, 72
    %2244 = vbcast.lane.b32.xlu0 %v2206, %s2243
    %v2245 = vpop.permute.xlu0 %2244
    %s2247 = sor.u32 256, 80
    %2248 = vbcast.lane.b32.xlu0 %v2206, %s2247
    %v2249 = vpop.permute.xlu0 %2248
    %s2251 = sor.u32 256, 88
    %2252 = vbcast.lane.b32.xlu0 %v2206, %s2251
    %v2253 = vpop.permute.xlu0 %2252
    %s2255 = sor.u32 256, 96
    %2256 = vbcast.lane.b32.xlu0 %v2206, %s2255
    %v2257 = vpop.permute.xlu0 %2256
    %s2259 = sor.u32 256, 104
    %2260 = vbcast.lane.b32.xlu0 %v2206, %s2259
    %v2261 = vpop.permute.xlu0 %2260
    %s2263 = sor.u32 256, 112
    %2264 = vbcast.lane.b32.xlu0 %v2206, %s2263
    %v2265 = vpop.permute.xlu0 %2264
    %s2267 = sor.u32 256, 120
    %2268 = vbcast.lane.b32.xlu0 %v2206, %s2267
    %v2269 = vpop.permute.xlu0 %2268
    %s2270 = sshra.s32 %s1728, 7
    %s2271 = sand.u32 %s1728, 127
    %s2272 = smul.addr %s2270, 8
    %s2273 = scalar_lea.vmem [#allocation3], %s2272
    %v2274 = vld [vmem:[%s2273] sm:$0xff]
    %v2276 = vcombine.high %v2274, %v2274
    %v2278 = vunpack.c.l.s4 1966171168
    %v2279 = vunpack.c.0.s8 %v2278
    %v2280 = vlaneseq
    %v2281 = vshrl.u32 %v2280, 7
    %v2282 = vsub.s32 %v2279, %v2281
    %v2283 = vrot.slane %v2274, %v2282
    %v2285 = vunpack.c.l.s4 1966171168
    %v2286 = vunpack.c.0.s8 %v2285
    %v2287 = vlaneseq
    %v2288 = vshrl.u32 %v2287, 7
    %v2289 = vsub.s32 %v2286, %v2288
    %v2290 = vrot.slane %v2276, %v2289
    %v2291 = vcombine.high %v2283, %v2283
    %v2292 = vcombine.high %v2290, %v2290
    %v2294 = vunpack.c.l.s4 1966171168
    %v2295 = vunpack.c.0.s8 %v2294
    %v2296 = vlaneseq
    %v2297 = vshrl.u32 %v2296, 7
    %v2298 = vsub.s32 %v2295, %v2297
    %v2299 = vrot.slane %v2283, %v2298
    %v2301 = vunpack.c.l.s4 1966171168
    %v2302 = vunpack.c.0.s8 %v2301
    %v2303 = vlaneseq
    %v2304 = vshrl.u32 %v2303, 7
    %v2305 = vsub.s32 %v2302, %v2304
    %v2306 = vrot.slane %v2290, %v2305
    %v2308 = vunpack.c.l.s4 1966171168
    %v2309 = vunpack.c.0.s8 %v2308
    %v2310 = vlaneseq
    %v2311 = vshrl.u32 %v2310, 7
    %v2312 = vsub.s32 %v2309, %v2311
    %v2313 = vrot.slane %v2291, %v2312
    %v2315 = vunpack.c.l.s4 1966171168
    %v2316 = vunpack.c.0.s8 %v2315
    %v2317 = vlaneseq
    %v2318 = vshrl.u32 %v2317, 7
    %v2319 = vsub.s32 %v2316, %v2318
    %v2320 = vrot.slane %v2292, %v2319
    %v2321 = vcombine.high %v2299, %v2299
    %v2322 = vcombine.high %v2306, %v2306
    %v2323 = vcombine.high %v2313, %v2313
    %v2324 = vcombine.high %v2320, %v2320
    %s2325 = sadd.s32 %s521, 1024
    %s2326 = sadd.s32 %s523, 512
    %s2327 = sshra.s32 %s2325, 7
    %s2328 = sand.u32 %s2325, 127
    %s2329 = smul.addr %s2327, 8
    %s2330 = scalar_lea.vmem [#allocation3], %s2329
    %v2331 = vld [vmem:[%s2330] sm:$0xff]
    %v2332 = vlaneseq
    %v2333 = vshrl.u32 %v2332, 7
    %v2334 = vsub.s32 0, %v2333
    %v2335 = vrot.slane %v2331, %v2334
    %2337 = vbcast.lane.b32.xlu0 %v2335, 256
    %v2338 = vpop.permute.xlu0 %2337
    %s2340 = sor.u32 256, 8
    %2341 = vbcast.lane.b32.xlu0 %v2335, %s2340
    %v2342 = vpop.permute.xlu0 %2341
    %s2344 = sor.u32 256, 16
    %2345 = vbcast.lane.b32.xlu0 %v2335, %s2344
    %v2346 = vpop.permute.xlu0 %2345
    %s2348 = sor.u32 256, 24
    %2349 = vbcast.lane.b32.xlu0 %v2335, %s2348
    %v2350 = vpop.permute.xlu0 %2349
    %s2352 = sor.u32 256, 32
    %2353 = vbcast.lane.b32.xlu0 %v2335, %s2352
    %v2354 = vpop.permute.xlu0 %2353
    %s2356 = sor.u32 256, 40
    %2357 = vbcast.lane.b32.xlu0 %v2335, %s2356
    %v2358 = vpop.permute.xlu0 %2357
    %s2360 = sor.u32 256, 48
    %2361 = vbcast.lane.b32.xlu0 %v2335, %s2360
    %v2362 = vpop.permute.xlu0 %2361
    %s2364 = sor.u32 256, 56
    %2365 = vbcast.lane.b32.xlu0 %v2335, %s2364
    %v2366 = vpop.permute.xlu0 %2365
    %s2368 = sor.u32 256, 64
    %2369 = vbcast.lane.b32.xlu0 %v2335, %s2368
    %v2370 = vpop.permute.xlu0 %2369
    %s2372 = sor.u32 256, 72
    %2373 = vbcast.lane.b32.xlu0 %v2335, %s2372
    %v2374 = vpop.permute.xlu0 %2373
    %s2376 = sor.u32 256, 80
    %2377 = vbcast.lane.b32.xlu0 %v2335, %s2376
    %v2378 = vpop.permute.xlu0 %2377
    %s2380 = sor.u32 256, 88
    %2381 = vbcast.lane.b32.xlu0 %v2335, %s2380
    %v2382 = vpop.permute.xlu0 %2381
    %s2384 = sor.u32 256, 96
    %2385 = vbcast.lane.b32.xlu0 %v2335, %s2384
    %v2386 = vpop.permute.xlu0 %2385
    %s2388 = sor.u32 256, 104
    %2389 = vbcast.lane.b32.xlu0 %v2335, %s2388
    %v2390 = vpop.permute.xlu0 %2389
    %s2392 = sor.u32 256, 112
    %2393 = vbcast.lane.b32.xlu0 %v2335, %s2392
    %v2394 = vpop.permute.xlu0 %2393
    %s2396 = sor.u32 256, 120
    %2397 = vbcast.lane.b32.xlu0 %v2335, %s2396
    %v2398 = vpop.permute.xlu0 %2397
    %v2399 = vlaneseq
    %v2400 = vshrl.u32 %v2399, 7
    %v2401 = vsub.s32 1, %v2400
    %v2402 = vrot.slane %v2331, %v2401
    %2404 = vbcast.lane.b32.xlu0 %v2402, 256
    %v2405 = vpop.permute.xlu0 %2404
    %s2407 = sor.u32 256, 8
    %2408 = vbcast.lane.b32.xlu0 %v2402, %s2407
    %v2409 = vpop.permute.xlu0 %2408
    %s2411 = sor.u32 256, 16
    %2412 = vbcast.lane.b32.xlu0 %v2402, %s2411
    %v2413 = vpop.permute.xlu0 %2412
    %s2415 = sor.u32 256, 24
    %2416 = vbcast.lane.b32.xlu0 %v2402, %s2415
    %v2417 = vpop.permute.xlu0 %2416
    %s2419 = sor.u32 256, 32
    %2420 = vbcast.lane.b32.xlu0 %v2402, %s2419
    %v2421 = vpop.permute.xlu0 %2420
    %s2423 = sor.u32 256, 40
    %2424 = vbcast.lane.b32.xlu0 %v2402, %s2423
    %v2425 = vpop.permute.xlu0 %2424
    %s2427 = sor.u32 256, 48
    %2428 = vbcast.lane.b32.xlu0 %v2402, %s2427
    %v2429 = vpop.permute.xlu0 %2428
    %s2431 = sor.u32 256, 56
    %2432 = vbcast.lane.b32.xlu0 %v2402, %s2431
    %v2433 = vpop.permute.xlu0 %2432
    %s2435 = sor.u32 256, 64
    %2436 = vbcast.lane.b32.xlu0 %v2402, %s2435
    %v2437 = vpop.permute.xlu0 %2436
    %s2439 = sor.u32 256, 72
    %2440 = vbcast.lane.b32.xlu0 %v2402, %s2439
    %v2441 = vpop.permute.xlu0 %2440
    %s2443 = sor.u32 256, 80
    %2444 = vbcast.lane.b32.xlu0 %v2402, %s2443
    %v2445 = vpop.permute.xlu0 %2444
    %s2447 = sor.u32 256, 88
    %2448 = vbcast.lane.b32.xlu0 %v2402, %s2447
    %v2449 = vpop.permute.xlu0 %2448
    %s2451 = sor.u32 256, 96
    %2452 = vbcast.lane.b32.xlu0 %v2402, %s2451
    %v2453 = vpop.permute.xlu0 %2452
    %s2455 = sor.u32 256, 104
    %2456 = vbcast.lane.b32.xlu0 %v2402, %s2455
    %v2457 = vpop.permute.xlu0 %2456
    %s2459 = sor.u32 256, 112
    %2460 = vbcast.lane.b32.xlu0 %v2402, %s2459
    %v2461 = vpop.permute.xlu0 %2460
    %s2463 = sor.u32 256, 120
    %2464 = vbcast.lane.b32.xlu0 %v2402, %s2463
    %v2465 = vpop.permute.xlu0 %2464
    %v2466 = vlaneseq
    %v2467 = vshrl.u32 %v2466, 7
    %v2468 = vsub.s32 2, %v2467
    %v2469 = vrot.slane %v2331, %v2468
    %2471 = vbcast.lane.b32.xlu0 %v2469, 256
    %v2472 = vpop.permute.xlu0 %2471
    %s2474 = sor.u32 256, 8
    %2475 = vbcast.lane.b32.xlu0 %v2469, %s2474
    %v2476 = vpop.permute.xlu0 %2475
    %s2478 = sor.u32 256, 16
    %2479 = vbcast.lane.b32.xlu0 %v2469, %s2478
    %v2480 = vpop.permute.xlu0 %2479
    %s2482 = sor.u32 256, 24
    %2483 = vbcast.lane.b32.xlu0 %v2469, %s2482
    %v2484 = vpop.permute.xlu0 %2483
    %s2486 = sor.u32 256, 32
    %2487 = vbcast.lane.b32.xlu0 %v2469, %s2486
    %v2488 = vpop.permute.xlu0 %2487
    %s2490 = sor.u32 256, 40
    %2491 = vbcast.lane.b32.xlu0 %v2469, %s2490
    %v2492 = vpop.permute.xlu0 %2491
    %s2494 = sor.u32 256, 48
    %2495 = vbcast.lane.b32.xlu0 %v2469, %s2494
    %v2496 = vpop.permute.xlu0 %2495
    %s2498 = sor.u32 256, 56
    %2499 = vbcast.lane.b32.xlu0 %v2469, %s2498
    %v2500 = vpop.permute.xlu0 %2499
    %s2502 = sor.u32 256, 64
    %2503 = vbcast.lane.b32.xlu0 %v2469, %s2502
    %v2504 = vpop.permute.xlu0 %2503
    %s2506 = sor.u32 256, 72
    %2507 = vbcast.lane.b32.xlu0 %v2469, %s2506
    %v2508 = vpop.permute.xlu0 %2507
    %s2510 = sor.u32 256, 80
    %2511 = vbcast.lane.b32.xlu0 %v2469, %s2510
    %v2512 = vpop.permute.xlu0 %2511
    %s2514 = sor.u32 256, 88
    %2515 = vbcast.lane.b32.xlu0 %v2469, %s2514
    %v2516 = vpop.permute.xlu0 %2515
    %s2518 = sor.u32 256, 96
    %2519 = vbcast.lane.b32.xlu0 %v2469, %s2518
    %v2520 = vpop.permute.xlu0 %2519
    %s2522 = sor.u32 256, 104
    %2523 = vbcast.lane.b32.xlu0 %v2469, %s2522
    %v2524 = vpop.permute.xlu0 %2523
    %s2526 = sor.u32 256, 112
    %2527 = vbcast.lane.b32.xlu0 %v2469, %s2526
    %v2528 = vpop.permute.xlu0 %2527
    %s2530 = sor.u32 256, 120
    %2531 = vbcast.lane.b32.xlu0 %v2469, %s2530
    %v2532 = vpop.permute.xlu0 %2531
    %v2533 = vlaneseq
    %v2534 = vshrl.u32 %v2533, 7
    %v2535 = vsub.s32 3, %v2534
    %v2536 = vrot.slane %v2331, %v2535
    %2538 = vbcast.lane.b32.xlu0 %v2536, 256
    %v2539 = vpop.permute.xlu0 %2538
    %s2541 = sor.u32 256, 8
    %2542 = vbcast.lane.b32.xlu0 %v2536, %s2541
    %v2543 = vpop.permute.xlu0 %2542
    %s2545 = sor.u32 256, 16
    %2546 = vbcast.lane.b32.xlu0 %v2536, %s2545
    %v2547 = vpop.permute.xlu0 %2546
    %s2549 = sor.u32 256, 24
    %2550 = vbcast.lane.b32.xlu0 %v2536, %s2549
    %v2551 = vpop.permute.xlu0 %2550
    %s2553 = sor.u32 256, 32
    %2554 = vbcast.lane.b32.xlu0 %v2536, %s2553
    %v2555 = vpop.permute.xlu0 %2554
    %s2557 = sor.u32 256, 40
    %2558 = vbcast.lane.b32.xlu0 %v2536, %s2557
    %v2559 = vpop.permute.xlu0 %2558
    %s2561 = sor.u32 256, 48
    %2562 = vbcast.lane.b32.xlu0 %v2536, %s2561
    %v2563 = vpop.permute.xlu0 %2562
    %s2565 = sor.u32 256, 56
    %2566 = vbcast.lane.b32.xlu0 %v2536, %s2565
    %v2567 = vpop.permute.xlu0 %2566
    %s2569 = sor.u32 256, 64
    %2570 = vbcast.lane.b32.xlu0 %v2536, %s2569
    %v2571 = vpop.permute.xlu0 %2570
    %s2573 = sor.u32 256, 72
    %2574 = vbcast.lane.b32.xlu0 %v2536, %s2573
    %v2575 = vpop.permute.xlu0 %2574
    %s2577 = sor.u32 256, 80
    %2578 = vbcast.lane.b32.xlu0 %v2536, %s2577
    %v2579 = vpop.permute.xlu0 %2578
    %s2581 = sor.u32 256, 88
    %2582 = vbcast.lane.b32.xlu0 %v2536, %s2581
    %v2583 = vpop.permute.xlu0 %2582
    %s2585 = sor.u32 256, 96
    %2586 = vbcast.lane.b32.xlu0 %v2536, %s2585
    %v2587 = vpop.permute.xlu0 %2586
    %s2589 = sor.u32 256, 104
    %2590 = vbcast.lane.b32.xlu0 %v2536, %s2589
    %v2591 = vpop.permute.xlu0 %2590
    %s2593 = sor.u32 256, 112
    %2594 = vbcast.lane.b32.xlu0 %v2536, %s2593
    %v2595 = vpop.permute.xlu0 %2594
    %s2597 = sor.u32 256, 120
    %2598 = vbcast.lane.b32.xlu0 %v2536, %s2597
    %v2599 = vpop.permute.xlu0 %2598
    %v2600 = vlaneseq
    %v2601 = vshrl.u32 %v2600, 7
    %v2602 = vsub.s32 4, %v2601
    %v2603 = vrot.slane %v2331, %v2602
    %2605 = vbcast.lane.b32.xlu0 %v2603, 256
    %v2606 = vpop.permute.xlu0 %2605
    %s2608 = sor.u32 256, 8
    %2609 = vbcast.lane.b32.xlu0 %v2603, %s2608
    %v2610 = vpop.permute.xlu0 %2609
    %s2612 = sor.u32 256, 16
    %2613 = vbcast.lane.b32.xlu0 %v2603, %s2612
    %v2614 = vpop.permute.xlu0 %2613
    %s2616 = sor.u32 256, 24
    %2617 = vbcast.lane.b32.xlu0 %v2603, %s2616
    %v2618 = vpop.permute.xlu0 %2617
    %s2620 = sor.u32 256, 32
    %2621 = vbcast.lane.b32.xlu0 %v2603, %s2620
    %v2622 = vpop.permute.xlu0 %2621
    %s2624 = sor.u32 256, 40
    %2625 = vbcast.lane.b32.xlu0 %v2603, %s2624
    %v2626 = vpop.permute.xlu0 %2625
    %s2628 = sor.u32 256, 48
    %2629 = vbcast.lane.b32.xlu0 %v2603, %s2628
    %v2630 = vpop.permute.xlu0 %2629
    %s2632 = sor.u32 256, 56
    %2633 = vbcast.lane.b32.xlu0 %v2603, %s2632
    %v2634 = vpop.permute.xlu0 %2633
    %s2636 = sor.u32 256, 64
    %2637 = vbcast.lane.b32.xlu0 %v2603, %s2636
    %v2638 = vpop.permute.xlu0 %2637
    %s2640 = sor.u32 256, 72
    %2641 = vbcast.lane.b32.xlu0 %v2603, %s2640
    %v2642 = vpop.permute.xlu0 %2641
    %s2644 = sor.u32 256, 80
    %2645 = vbcast.lane.b32.xlu0 %v2603, %s2644
    %v2646 = vpop.permute.xlu0 %2645
    %s2648 = sor.u32 256, 88
    %2649 = vbcast.lane.b32.xlu0 %v2603, %s2648
    %v2650 = vpop.permute.xlu0 %2649
    %s2652 = sor.u32 256, 96
    %2653 = vbcast.lane.b32.xlu0 %v2603, %s2652
    %v2654 = vpop.permute.xlu0 %2653
    %s2656 = sor.u32 256, 104
    %2657 = vbcast.lane.b32.xlu0 %v2603, %s2656
    %v2658 = vpop.permute.xlu0 %2657
    %s2660 = sor.u32 256, 112
    %2661 = vbcast.lane.b32.xlu0 %v2603, %s2660
    %v2662 = vpop.permute.xlu0 %2661
    %s2664 = sor.u32 256, 120
    %2665 = vbcast.lane.b32.xlu0 %v2603, %s2664
    %v2666 = vpop.permute.xlu0 %2665
    %v2667 = vlaneseq
    %v2668 = vshrl.u32 %v2667, 7
    %v2669 = vsub.s32 5, %v2668
    %v2670 = vrot.slane %v2331, %v2669
    %2672 = vbcast.lane.b32.xlu0 %v2670, 256
    %v2673 = vpop.permute.xlu0 %2672
    %s2675 = sor.u32 256, 8
    %2676 = vbcast.lane.b32.xlu0 %v2670, %s2675
    %v2677 = vpop.permute.xlu0 %2676
    %s2679 = sor.u32 256, 16
    %2680 = vbcast.lane.b32.xlu0 %v2670, %s2679
    %v2681 = vpop.permute.xlu0 %2680
    %s2683 = sor.u32 256, 24
    %2684 = vbcast.lane.b32.xlu0 %v2670, %s2683
    %v2685 = vpop.permute.xlu0 %2684
    %s2687 = sor.u32 256, 32
    %2688 = vbcast.lane.b32.xlu0 %v2670, %s2687
    %v2689 = vpop.permute.xlu0 %2688
    %s2691 = sor.u32 256, 40
    %2692 = vbcast.lane.b32.xlu0 %v2670, %s2691
    %v2693 = vpop.permute.xlu0 %2692
    %s2695 = sor.u32 256, 48
    %2696 = vbcast.lane.b32.xlu0 %v2670, %s2695
    %v2697 = vpop.permute.xlu0 %2696
    %s2699 = sor.u32 256, 56
    %2700 = vbcast.lane.b32.xlu0 %v2670, %s2699
    %v2701 = vpop.permute.xlu0 %2700
    %s2703 = sor.u32 256, 64
    %2704 = vbcast.lane.b32.xlu0 %v2670, %s2703
    %v2705 = vpop.permute.xlu0 %2704
    %s2707 = sor.u32 256, 72
    %2708 = vbcast.lane.b32.xlu0 %v2670, %s2707
    %v2709 = vpop.permute.xlu0 %2708
    %s2711 = sor.u32 256, 80
    %2712 = vbcast.lane.b32.xlu0 %v2670, %s2711
    %v2713 = vpop.permute.xlu0 %2712
    %s2715 = sor.u32 256, 88
    %2716 = vbcast.lane.b32.xlu0 %v2670, %s2715
    %v2717 = vpop.permute.xlu0 %2716
    %s2719 = sor.u32 256, 96
    %2720 = vbcast.lane.b32.xlu0 %v2670, %s2719
    %v2721 = vpop.permute.xlu0 %2720
    %s2723 = sor.u32 256, 104
    %2724 = vbcast.lane.b32.xlu0 %v2670, %s2723
    %v2725 = vpop.permute.xlu0 %2724
    %s2727 = sor.u32 256, 112
    %2728 = vbcast.lane.b32.xlu0 %v2670, %s2727
    %v2729 = vpop.permute.xlu0 %2728
    %s2731 = sor.u32 256, 120
    %2732 = vbcast.lane.b32.xlu0 %v2670, %s2731
    %v2733 = vpop.permute.xlu0 %2732
    %v2734 = vlaneseq
    %v2735 = vshrl.u32 %v2734, 7
    %v2736 = vsub.s32 6, %v2735
    %v2737 = vrot.slane %v2331, %v2736
    %2739 = vbcast.lane.b32.xlu0 %v2737, 256
    %v2740 = vpop.permute.xlu0 %2739
    %s2742 = sor.u32 256, 8
    %2743 = vbcast.lane.b32.xlu0 %v2737, %s2742
    %v2744 = vpop.permute.xlu0 %2743
    %s2746 = sor.u32 256, 16
    %2747 = vbcast.lane.b32.xlu0 %v2737, %s2746
    %v2748 = vpop.permute.xlu0 %2747
    %s2750 = sor.u32 256, 24
    %2751 = vbcast.lane.b32.xlu0 %v2737, %s2750
    %v2752 = vpop.permute.xlu0 %2751
    %s2754 = sor.u32 256, 32
    %2755 = vbcast.lane.b32.xlu0 %v2737, %s2754
    %v2756 = vpop.permute.xlu0 %2755
    %s2758 = sor.u32 256, 40
    %2759 = vbcast.lane.b32.xlu0 %v2737, %s2758
    %v2760 = vpop.permute.xlu0 %2759
    %s2762 = sor.u32 256, 48
    %2763 = vbcast.lane.b32.xlu0 %v2737, %s2762
    %v2764 = vpop.permute.xlu0 %2763
    %s2766 = sor.u32 256, 56
    %2767 = vbcast.lane.b32.xlu0 %v2737, %s2766
    %v2768 = vpop.permute.xlu0 %2767
    %s2770 = sor.u32 256, 64
    %2771 = vbcast.lane.b32.xlu0 %v2737, %s2770
    %v2772 = vpop.permute.xlu0 %2771
    %s2774 = sor.u32 256, 72
    %2775 = vbcast.lane.b32.xlu0 %v2737, %s2774
    %v2776 = vpop.permute.xlu0 %2775
    %s2778 = sor.u32 256, 80
    %2779 = vbcast.lane.b32.xlu0 %v2737, %s2778
    %v2780 = vpop.permute.xlu0 %2779
    %s2782 = sor.u32 256, 88
    %2783 = vbcast.lane.b32.xlu0 %v2737, %s2782
    %v2784 = vpop.permute.xlu0 %2783
    %s2786 = sor.u32 256, 96
    %2787 = vbcast.lane.b32.xlu0 %v2737, %s2786
    %v2788 = vpop.permute.xlu0 %2787
    %s2790 = sor.u32 256, 104
    %2791 = vbcast.lane.b32.xlu0 %v2737, %s2790
    %v2792 = vpop.permute.xlu0 %2791
    %s2794 = sor.u32 256, 112
    %2795 = vbcast.lane.b32.xlu0 %v2737, %s2794
    %v2796 = vpop.permute.xlu0 %2795
    %s2798 = sor.u32 256, 120
    %2799 = vbcast.lane.b32.xlu0 %v2737, %s2798
    %v2800 = vpop.permute.xlu0 %2799
    %v2801 = vlaneseq
    %v2802 = vshrl.u32 %v2801, 7
    %v2803 = vsub.s32 7, %v2802
    %v2804 = vrot.slane %v2331, %v2803
    %2806 = vbcast.lane.b32.xlu0 %v2804, 256
    %v2807 = vpop.permute.xlu0 %2806
    %s2809 = sor.u32 256, 8
    %2810 = vbcast.lane.b32.xlu0 %v2804, %s2809
    %v2811 = vpop.permute.xlu0 %2810
    %s2813 = sor.u32 256, 16
    %2814 = vbcast.lane.b32.xlu0 %v2804, %s2813
    %v2815 = vpop.permute.xlu0 %2814
    %s2817 = sor.u32 256, 24
    %2818 = vbcast.lane.b32.xlu0 %v2804, %s2817
    %v2819 = vpop.permute.xlu0 %2818
    %s2821 = sor.u32 256, 32
    %2822 = vbcast.lane.b32.xlu0 %v2804, %s2821
    %v2823 = vpop.permute.xlu0 %2822
    %s2825 = sor.u32 256, 40
    %2826 = vbcast.lane.b32.xlu0 %v2804, %s2825
    %v2827 = vpop.permute.xlu0 %2826
    %s2829 = sor.u32 256, 48
    %2830 = vbcast.lane.b32.xlu0 %v2804, %s2829
    %v2831 = vpop.permute.xlu0 %2830
    %s2833 = sor.u32 256, 56
    %2834 = vbcast.lane.b32.xlu0 %v2804, %s2833
    %v2835 = vpop.permute.xlu0 %2834
    %s2837 = sor.u32 256, 64
    %2838 = vbcast.lane.b32.xlu0 %v2804, %s2837
    %v2839 = vpop.permute.xlu0 %2838
    %s2841 = sor.u32 256, 72
    %2842 = vbcast.lane.b32.xlu0 %v2804, %s2841
    %v2843 = vpop.permute.xlu0 %2842
    %s2845 = sor.u32 256, 80
    %2846 = vbcast.lane.b32.xlu0 %v2804, %s2845
    %v2847 = vpop.permute.xlu0 %2846
    %s2849 = sor.u32 256, 88
    %2850 = vbcast.lane.b32.xlu0 %v2804, %s2849
    %v2851 = vpop.permute.xlu0 %2850
    %s2853 = sor.u32 256, 96
    %2854 = vbcast.lane.b32.xlu0 %v2804, %s2853
    %v2855 = vpop.permute.xlu0 %2854
    %s2857 = sor.u32 256, 104
    %2858 = vbcast.lane.b32.xlu0 %v2804, %s2857
    %v2859 = vpop.permute.xlu0 %2858
    %s2861 = sor.u32 256, 112
    %2862 = vbcast.lane.b32.xlu0 %v2804, %s2861
    %v2863 = vpop.permute.xlu0 %2862
    %s2865 = sor.u32 256, 120
    %2866 = vbcast.lane.b32.xlu0 %v2804, %s2865
    %v2867 = vpop.permute.xlu0 %2866
    %s2868 = sshra.s32 %s2326, 7
    %s2869 = sand.u32 %s2326, 127
    %s2870 = smul.addr %s2868, 8
    %s2871 = scalar_lea.vmem [#allocation3], %s2870
    %v2872 = vld [vmem:[%s2871] sm:$0xff]
    %v2874 = vcombine.high %v2872, %v2872
    %v2876 = vunpack.c.l.s4 1966171168
    %v2877 = vunpack.c.0.s8 %v2876
    %v2878 = vlaneseq
    %v2879 = vshrl.u32 %v2878, 7
    %v2880 = vsub.s32 %v2877, %v2879
    %v2881 = vrot.slane %v2872, %v2880
    %v2883 = vunpack.c.l.s4 1966171168
    %v2884 = vunpack.c.0.s8 %v2883
    %v2885 = vlaneseq
    %v2886 = vshrl.u32 %v2885, 7
    %v2887 = vsub.s32 %v2884, %v2886
    %v2888 = vrot.slane %v2874, %v2887
    %v2889 = vcombine.high %v2881, %v2881
    %v2890 = vcombine.high %v2888, %v2888
    %v2892 = vunpack.c.l.s4 1966171168
    %v2893 = vunpack.c.0.s8 %v2892
    %v2894 = vlaneseq
    %v2895 = vshrl.u32 %v2894, 7
    %v2896 = vsub.s32 %v2893, %v2895
    %v2897 = vrot.slane %v2881, %v2896
    %v2899 = vunpack.c.l.s4 1966171168
    %v2900 = vunpack.c.0.s8 %v2899
    %v2901 = vlaneseq
    %v2902 = vshrl.u32 %v2901, 7
    %v2903 = vsub.s32 %v2900, %v2902
    %v2904 = vrot.slane %v2888, %v2903
    %v2906 = vunpack.c.l.s4 1966171168
    %v2907 = vunpack.c.0.s8 %v2906
    %v2908 = vlaneseq
    %v2909 = vshrl.u32 %v2908, 7
    %v2910 = vsub.s32 %v2907, %v2909
    %v2911 = vrot.slane %v2889, %v2910
    %v2913 = vunpack.c.l.s4 1966171168
    %v2914 = vunpack.c.0.s8 %v2913
    %v2915 = vlaneseq
    %v2916 = vshrl.u32 %v2915, 7
    %v2917 = vsub.s32 %v2914, %v2916
    %v2918 = vrot.slane %v2890, %v2917
    %v2919 = vcombine.high %v2897, %v2897
    %v2920 = vcombine.high %v2904, %v2904
    %v2921 = vcombine.high %v2911, %v2911
    %v2922 = vcombine.high %v2918, %v2918
    %vm2923 = vcmask 7168
    %v2924 = vsel %vm2923, %v536, %v1142
    %v2925 = vsel %vm2923, %v540, %v1146
    %v2926 = vsel %vm2923, %v544, %v1150
    %v2927 = vsel %vm2923, %v548, %v1154
    %v2928 = vsel %vm2923, %v552, %v1158
    %v2929 = vsel %vm2923, %v556, %v1162
    %v2930 = vsel %vm2923, %v560, %v1166
    %v2931 = vsel %vm2923, %v564, %v1170
    %v2932 = vsel %vm2923, %v568, %v1174
    %v2933 = vsel %vm2923, %v572, %v1178
    %v2934 = vsel %vm2923, %v576, %v1182
    %v2935 = vsel %vm2923, %v580, %v1186
    %v2936 = vsel %vm2923, %v584, %v1190
    %v2937 = vsel %vm2923, %v588, %v1194
    %v2938 = vsel %vm2923, %v592, %v1198
    %v2939 = vsel %vm2923, %v596, %v1202
    %v2940 = vsel %vm2923, %v603, %v1209
    %v2941 = vsel %vm2923, %v607, %v1213
    %v2942 = vsel %vm2923, %v611, %v1217
    %v2943 = vsel %vm2923, %v615, %v1221
    %v2944 = vsel %vm2923, %v619, %v1225
    %v2945 = vsel %vm2923, %v623, %v1229
    %v2946 = vsel %vm2923, %v627, %v1233
    %v2947 = vsel %vm2923, %v631, %v1237
    %v2948 = vsel %vm2923, %v635, %v1241
    %v2949 = vsel %vm2923, %v639, %v1245
    %v2950 = vsel %vm2923, %v643, %v1249
    %v2951 = vsel %vm2923, %v647, %v1253
    %v2952 = vsel %vm2923, %v651, %v1257
    %v2953 = vsel %vm2923, %v655, %v1261
    %v2954 = vsel %vm2923, %v659, %v1265
    %v2955 = vsel %vm2923, %v663, %v1269
    %v2956 = vsel %vm2923, %v670, %v1276
    %v2957 = vsel %vm2923, %v674, %v1280
    %v2958 = vsel %vm2923, %v678, %v1284
    %v2959 = vsel %vm2923, %v682, %v1288
    %v2960 = vsel %vm2923, %v686, %v1292
    %v2961 = vsel %vm2923, %v690, %v1296
    %v2962 = vsel %vm2923, %v694, %v1300
    %v2963 = vsel %vm2923, %v698, %v1304
    %v2964 = vsel %vm2923, %v702, %v1308
    %v2965 = vsel %vm2923, %v706, %v1312
    %v2966 = vsel %vm2923, %v710, %v1316
    %v2967 = vsel %vm2923, %v714, %v1320
    %v2968 = vsel %vm2923, %v718, %v1324
    %v2969 = vsel %vm2923, %v722, %v1328
    %v2970 = vsel %vm2923, %v726, %v1332
    %v2971 = vsel %vm2923, %v730, %v1336
    %v2972 = vsel %vm2923, %v737, %v1343
    %v2973 = vsel %vm2923, %v741, %v1347
    %v2974 = vsel %vm2923, %v745, %v1351
    %v2975 = vsel %vm2923, %v749, %v1355
    %v2976 = vsel %vm2923, %v753, %v1359
    %v2977 = vsel %vm2923, %v757, %v1363
    %v2978 = vsel %vm2923, %v761, %v1367
    %v2979 = vsel %vm2923, %v765, %v1371
    %v2980 = vsel %vm2923, %v769, %v1375
    %v2981 = vsel %vm2923, %v773, %v1379
    %v2982 = vsel %vm2923, %v777, %v1383
    %v2983 = vsel %vm2923, %v781, %v1387
    %v2984 = vsel %vm2923, %v785, %v1391
    %v2985 = vsel %vm2923, %v789, %v1395
    %v2986 = vsel %vm2923, %v793, %v1399
    %v2987 = vsel %vm2923, %v797, %v1403
    %v2988 = vsel %vm2923, %v804, %v1410
    %v2989 = vsel %vm2923, %v808, %v1414
    %v2990 = vsel %vm2923, %v812, %v1418
    %v2991 = vsel %vm2923, %v816, %v1422
    %v2992 = vsel %vm2923, %v820, %v1426
    %v2993 = vsel %vm2923, %v824, %v1430
    %v2994 = vsel %vm2923, %v828, %v1434
    %v2995 = vsel %vm2923, %v832, %v1438
    %v2996 = vsel %vm2923, %v836, %v1442
    %v2997 = vsel %vm2923, %v840, %v1446
    %v2998 = vsel %vm2923, %v844, %v1450
    %v2999 = vsel %vm2923, %v848, %v1454
    %v3000 = vsel %vm2923, %v852, %v1458
    %v3001 = vsel %vm2923, %v856, %v1462
    %v3002 = vsel %vm2923, %v860, %v1466
    %v3003 = vsel %vm2923, %v864, %v1470
    %v3004 = vsel %vm2923, %v871, %v1477
    %v3005 = vsel %vm2923, %v875, %v1481
    %v3006 = vsel %vm2923, %v879, %v1485
    %v3007 = vsel %vm2923, %v883, %v1489
    %v3008 = vsel %vm2923, %v887, %v1493
    %v3009 = vsel %vm2923, %v891, %v1497
    %v3010 = vsel %vm2923, %v895, %v1501
    %v3011 = vsel %vm2923, %v899, %v1505
    %v3012 = vsel %vm2923, %v903, %v1509
    %v3013 = vsel %vm2923, %v907, %v1513
    %v3014 = vsel %vm2923, %v911, %v1517
    %v3015 = vsel %vm2923, %v915, %v1521
    %v3016 = vsel %vm2923, %v919, %v1525
    %v3017 = vsel %vm2923, %v923, %v1529
    %v3018 = vsel %vm2923, %v927, %v1533
    %v3019 = vsel %vm2923, %v931, %v1537
    %v3020 = vsel %vm2923, %v938, %v1544
    %v3021 = vsel %vm2923, %v942, %v1548
    %v3022 = vsel %vm2923, %v946, %v1552
    %v3023 = vsel %vm2923, %v950, %v1556
    %v3024 = vsel %vm2923, %v954, %v1560
    %v3025 = vsel %vm2923, %v958, %v1564
    %v3026 = vsel %vm2923, %v962, %v1568
    %v3027 = vsel %vm2923, %v966, %v1572
    %v3028 = vsel %vm2923, %v970, %v1576
    %v3029 = vsel %vm2923, %v974, %v1580
    %v3030 = vsel %vm2923, %v978, %v1584
    %v3031 = vsel %vm2923, %v982, %v1588
    %v3032 = vsel %vm2923, %v986, %v1592
    %v3033 = vsel %vm2923, %v990, %v1596
    %v3034 = vsel %vm2923, %v994, %v1600
    %v3035 = vsel %vm2923, %v998, %v1604
    %v3036 = vsel %vm2923, %v1005, %v1611
    %v3037 = vsel %vm2923, %v1009, %v1615
    %v3038 = vsel %vm2923, %v1013, %v1619
    %v3039 = vsel %vm2923, %v1017, %v1623
    %v3040 = vsel %vm2923, %v1021, %v1627
    %v3041 = vsel %vm2923, %v1025, %v1631
    %v3042 = vsel %vm2923, %v1029, %v1635
    %v3043 = vsel %vm2923, %v1033, %v1639
    %v3044 = vsel %vm2923, %v1037, %v1643
    %v3045 = vsel %vm2923, %v1041, %v1647
    %v3046 = vsel %vm2923, %v1045, %v1651
    %v3047 = vsel %vm2923, %v1049, %v1655
    %v3048 = vsel %vm2923, %v1053, %v1659
    %v3049 = vsel %vm2923, %v1057, %v1663
    %v3050 = vsel %vm2923, %v1061, %v1667
    %v3051 = vsel %vm2923, %v1065, %v1671
    %vm3052 = vcmask 15360
    %v3053 = vsel %vm3052, %v2924, %v1740
    %v3054 = vsel %vm3052, %v2925, %v1744
    %v3055 = vsel %vm3052, %v2926, %v1748
    %v3056 = vsel %vm3052, %v2927, %v1752
    %v3057 = vsel %vm3052, %v2928, %v1756
    %v3058 = vsel %vm3052, %v2929, %v1760
    %v3059 = vsel %vm3052, %v2930, %v1764
    %v3060 = vsel %vm3052, %v2931, %v1768
    %v3061 = vsel %vm3052, %v2932, %v1772
    %v3062 = vsel %vm3052, %v2933, %v1776
    %v3063 = vsel %vm3052, %v2934, %v1780
    %v3064 = vsel %vm3052, %v2935, %v1784
    %v3065 = vsel %vm3052, %v2936, %v1788
    %v3066 = vsel %vm3052, %v2937, %v1792
    %v3067 = vsel %vm3052, %v2938, %v1796
    %v3068 = vsel %vm3052, %v2939, %v1800
    %v3069 = vsel %vm3052, %v2940, %v1807
    %v3070 = vsel %vm3052, %v2941, %v1811
    %v3071 = vsel %vm3052, %v2942, %v1815
    %v3072 = vsel %vm3052, %v2943, %v1819
    %v3073 = vsel %vm3052, %v2944, %v1823
    %v3074 = vsel %vm3052, %v2945, %v1827
    %v3075 = vsel %vm3052, %v2946, %v1831
    %v3076 = vsel %vm3052, %v2947, %v1835
    %v3077 = vsel %vm3052, %v2948, %v1839
    %v3078 = vsel %vm3052, %v2949, %v1843
    %v3079 = vsel %vm3052, %v2950, %v1847
    %v3080 = vsel %vm3052, %v2951, %v1851
    %v3081 = vsel %vm3052, %v2952, %v1855
    %v3082 = vsel %vm3052, %v2953, %v1859
    %v3083 = vsel %vm3052, %v2954, %v1863
    %v3084 = vsel %vm3052, %v2955, %v1867
    %v3085 = vsel %vm3052, %v2956, %v1874
    %v3086 = vsel %vm3052, %v2957, %v1878
    %v3087 = vsel %vm3052, %v2958, %v1882
    %v3088 = vsel %vm3052, %v2959, %v1886
    %v3089 = vsel %vm3052, %v2960, %v1890
    %v3090 = vsel %vm3052, %v2961, %v1894
    %v3091 = vsel %vm3052, %v2962, %v1898
    %v3092 = vsel %vm3052, %v2963, %v1902
    %v3093 = vsel %vm3052, %v2964, %v1906
    %v3094 = vsel %vm3052, %v2965, %v1910
    %v3095 = vsel %vm3052, %v2966, %v1914
    %v3096 = vsel %vm3052, %v2967, %v1918
    %v3097 = vsel %vm3052, %v2968, %v1922
    %v3098 = vsel %vm3052, %v2969, %v1926
    %v3099 = vsel %vm3052, %v2970, %v1930
    %v3100 = vsel %vm3052, %v2971, %v1934
    %v3101 = vsel %vm3052, %v2972, %v1941
    %v3102 = vsel %vm3052, %v2973, %v1945
    %v3103 = vsel %vm3052, %v2974, %v1949
    %v3104 = vsel %vm3052, %v2975, %v1953
    %v3105 = vsel %vm3052, %v2976, %v1957
    %v3106 = vsel %vm3052, %v2977, %v1961
    %v3107 = vsel %vm3052, %v2978, %v1965
    %v3108 = vsel %vm3052, %v2979, %v1969
    %v3109 = vsel %vm3052, %v2980, %v1973
    %v3110 = vsel %vm3052, %v2981, %v1977
    %v3111 = vsel %vm3052, %v2982, %v1981
    %v3112 = vsel %vm3052, %v2983, %v1985
    %v3113 = vsel %vm3052, %v2984, %v1989
    %v3114 = vsel %vm3052, %v2985, %v1993
    %v3115 = vsel %vm3052, %v2986, %v1997
    %v3116 = vsel %vm3052, %v2987, %v2001
    %v3117 = vsel %vm3052, %v2988, %v2008
    %v3118 = vsel %vm3052, %v2989, %v2012
    %v3119 = vsel %vm3052, %v2990, %v2016
    %v3120 = vsel %vm3052, %v2991, %v2020
    %v3121 = vsel %vm3052, %v2992, %v2024
    %v3122 = vsel %vm3052, %v2993, %v2028
    %v3123 = vsel %vm3052, %v2994, %v2032
    %v3124 = vsel %vm3052, %v2995, %v2036
    %v3125 = vsel %vm3052, %v2996, %v2040
    %v3126 = vsel %vm3052, %v2997, %v2044
    %v3127 = vsel %vm3052, %v2998, %v2048
    %v3128 = vsel %vm3052, %v2999, %v2052
    %v3129 = vsel %vm3052, %v3000, %v2056
    %v3130 = vsel %vm3052, %v3001, %v2060
    %v3131 = vsel %vm3052, %v3002, %v2064
    %v3132 = vsel %vm3052, %v3003, %v2068
    %v3133 = vsel %vm3052, %v3004, %v2075
    %v3134 = vsel %vm3052, %v3005, %v2079
    %v3135 = vsel %vm3052, %v3006, %v2083
    %v3136 = vsel %vm3052, %v3007, %v2087
    %v3137 = vsel %vm3052, %v3008, %v2091
    %v3138 = vsel %vm3052, %v3009, %v2095
    %v3139 = vsel %vm3052, %v3010, %v2099
    %v3140 = vsel %vm3052, %v3011, %v2103
    %v3141 = vsel %vm3052, %v3012, %v2107
    %v3142 = vsel %vm3052, %v3013, %v2111
    %v3143 = vsel %vm3052, %v3014, %v2115
    %v3144 = vsel %vm3052, %v3015, %v2119
    %v3145 = vsel %vm3052, %v3016, %v2123
    %v3146 = vsel %vm3052, %v3017, %v2127
    %v3147 = vsel %vm3052, %v3018, %v2131
    %v3148 = vsel %vm3052, %v3019, %v2135
    %v3149 = vsel %vm3052, %v3020, %v2142
    %v3150 = vsel %vm3052, %v3021, %v2146
    %v3151 = vsel %vm3052, %v3022, %v2150
    %v3152 = vsel %vm3052, %v3023, %v2154
    %v3153 = vsel %vm3052, %v3024, %v2158
    %v3154 = vsel %vm3052, %v3025, %v2162
    %v3155 = vsel %vm3052, %v3026, %v2166
    %v3156 = vsel %vm3052, %v3027, %v2170
    %v3157 = vsel %vm3052, %v3028, %v2174
    %v3158 = vsel %vm3052, %v3029, %v2178
    %v3159 = vsel %vm3052, %v3030, %v2182
    %v3160 = vsel %vm3052, %v3031, %v2186
    %v3161 = vsel %vm3052, %v3032, %v2190
    %v3162 = vsel %vm3052, %v3033, %v2194
    %v3163 = vsel %vm3052, %v3034, %v2198
    %v3164 = vsel %vm3052, %v3035, %v2202
    %v3165 = vsel %vm3052, %v3036, %v2209
    %v3166 = vsel %vm3052, %v3037, %v2213
    %v3167 = vsel %vm3052, %v3038, %v2217
    %v3168 = vsel %vm3052, %v3039, %v2221
    %v3169 = vsel %vm3052, %v3040, %v2225
    %v3170 = vsel %vm3052, %v3041, %v2229
    %v3171 = vsel %vm3052, %v3042, %v2233
    %v3172 = vsel %vm3052, %v3043, %v2237
    %v3173 = vsel %vm3052, %v3044, %v2241
    %v3174 = vsel %vm3052, %v3045, %v2245
    %v3175 = vsel %vm3052, %v3046, %v2249
    %v3176 = vsel %vm3052, %v3047, %v2253
    %v3177 = vsel %vm3052, %v3048, %v2257
    %v3178 = vsel %vm3052, %v3049, %v2261
    %v3179 = vsel %vm3052, %v3050, %v2265
    %v3180 = vsel %vm3052, %v3051, %v2269
    %vm3181 = vcmask 23552
    %v3182 = vsel %vm3181, %v3053, %v2338
    %v3183 = vsel %vm3181, %v3054, %v2342
    %v3184 = vsel %vm3181, %v3055, %v2346
    %v3185 = vsel %vm3181, %v3056, %v2350
    %v3186 = vsel %vm3181, %v3057, %v2354
    %v3187 = vsel %vm3181, %v3058, %v2358
    %v3188 = vsel %vm3181, %v3059, %v2362
    %v3189 = vsel %vm3181, %v3060, %v2366
    %v3190 = vsel %vm3181, %v3061, %v2370
    %v3191 = vsel %vm3181, %v3062, %v2374
    %v3192 = vsel %vm3181, %v3063, %v2378
    %v3193 = vsel %vm3181, %v3064, %v2382
    %v3194 = vsel %vm3181, %v3065, %v2386
    %v3195 = vsel %vm3181, %v3066, %v2390
    %v3196 = vsel %vm3181, %v3067, %v2394
    %v3197 = vsel %vm3181, %v3068, %v2398
    %v3198 = vsel %vm3181, %v3069, %v2405
    %v3199 = vsel %vm3181, %v3070, %v2409
    %v3200 = vsel %vm3181, %v3071, %v2413
    %v3201 = vsel %vm3181, %v3072, %v2417
    %v3202 = vsel %vm3181, %v3073, %v2421
    %v3203 = vsel %vm3181, %v3074, %v2425
    %v3204 = vsel %vm3181, %v3075, %v2429
    %v3205 = vsel %vm3181, %v3076, %v2433
    %v3206 = vsel %vm3181, %v3077, %v2437
    %v3207 = vsel %vm3181, %v3078, %v2441
    %v3208 = vsel %vm3181, %v3079, %v2445
    %v3209 = vsel %vm3181, %v3080, %v2449
    %v3210 = vsel %vm3181, %v3081, %v2453
    %v3211 = vsel %vm3181, %v3082, %v2457
    %v3212 = vsel %vm3181, %v3083, %v2461
    %v3213 = vsel %vm3181, %v3084, %v2465
    %v3214 = vsel %vm3181, %v3085, %v2472
    %v3215 = vsel %vm3181, %v3086, %v2476
    %v3216 = vsel %vm3181, %v3087, %v2480
    %v3217 = vsel %vm3181, %v3088, %v2484
    %v3218 = vsel %vm3181, %v3089, %v2488
    %v3219 = vsel %vm3181, %v3090, %v2492
    %v3220 = vsel %vm3181, %v3091, %v2496
    %v3221 = vsel %vm3181, %v3092, %v2500
    %v3222 = vsel %vm3181, %v3093, %v2504
    %v3223 = vsel %vm3181, %v3094, %v2508
    %v3224 = vsel %vm3181, %v3095, %v2512
    %v3225 = vsel %vm3181, %v3096, %v2516
    %v3226 = vsel %vm3181, %v3097, %v2520
    %v3227 = vsel %vm3181, %v3098, %v2524
    %v3228 = vsel %vm3181, %v3099, %v2528
    %v3229 = vsel %vm3181, %v3100, %v2532
    %v3230 = vsel %vm3181, %v3101, %v2539
    %v3231 = vsel %vm3181, %v3102, %v2543
    %v3232 = vsel %vm3181, %v3103, %v2547
    %v3233 = vsel %vm3181, %v3104, %v2551
    %v3234 = vsel %vm3181, %v3105, %v2555
    %v3235 = vsel %vm3181, %v3106, %v2559
    %v3236 = vsel %vm3181, %v3107, %v2563
    %v3237 = vsel %vm3181, %v3108, %v2567
    %v3238 = vsel %vm3181, %v3109, %v2571
    %v3239 = vsel %vm3181, %v3110, %v2575
    %v3240 = vsel %vm3181, %v3111, %v2579
    %v3241 = vsel %vm3181, %v3112, %v2583
    %v3242 = vsel %vm3181, %v3113, %v2587
    %v3243 = vsel %vm3181, %v3114, %v2591
    %v3244 = vsel %vm3181, %v3115, %v2595
    %v3245 = vsel %vm3181, %v3116, %v2599
    %v3246 = vsel %vm3181, %v3117, %v2606
    %v3247 = vsel %vm3181, %v3118, %v2610
    %v3248 = vsel %vm3181, %v3119, %v2614
    %v3249 = vsel %vm3181, %v3120, %v2618
    %v3250 = vsel %vm3181, %v3121, %v2622
    %v3251 = vsel %vm3181, %v3122, %v2626
    %v3252 = vsel %vm3181, %v3123, %v2630
    %v3253 = vsel %vm3181, %v3124, %v2634
    %v3254 = vsel %vm3181, %v3125, %v2638
    %v3255 = vsel %vm3181, %v3126, %v2642
    %v3256 = vsel %vm3181, %v3127, %v2646
    %v3257 = vsel %vm3181, %v3128, %v2650
    %v3258 = vsel %vm3181, %v3129, %v2654
    %v3259 = vsel %vm3181, %v3130, %v2658
    %v3260 = vsel %vm3181, %v3131, %v2662
    %v3261 = vsel %vm3181, %v3132, %v2666
    %v3262 = vsel %vm3181, %v3133, %v2673
    %v3263 = vsel %vm3181, %v3134, %v2677
    %v3264 = vsel %vm3181, %v3135, %v2681
    %v3265 = vsel %vm3181, %v3136, %v2685
    %v3266 = vsel %vm3181, %v3137, %v2689
    %v3267 = vsel %vm3181, %v3138, %v2693
    %v3268 = vsel %vm3181, %v3139, %v2697
    %v3269 = vsel %vm3181, %v3140, %v2701
    %v3270 = vsel %vm3181, %v3141, %v2705
    %v3271 = vsel %vm3181, %v3142, %v2709
    %v3272 = vsel %vm3181, %v3143, %v2713
    %v3273 = vsel %vm3181, %v3144, %v2717
    %v3274 = vsel %vm3181, %v3145, %v2721
    %v3275 = vsel %vm3181, %v3146, %v2725
    %v3276 = vsel %vm3181, %v3147, %v2729
    %v3277 = vsel %vm3181, %v3148, %v2733
    %v3278 = vsel %vm3181, %v3149, %v2740
    %v3279 = vsel %vm3181, %v3150, %v2744
    %v3280 = vsel %vm3181, %v3151, %v2748
    %v3281 = vsel %vm3181, %v3152, %v2752
    %v3282 = vsel %vm3181, %v3153, %v2756
    %v3283 = vsel %vm3181, %v3154, %v2760
    %v3284 = vsel %vm3181, %v3155, %v2764
    %v3285 = vsel %vm3181, %v3156, %v2768
    %v3286 = vsel %vm3181, %v3157, %v2772
    %v3287 = vsel %vm3181, %v3158, %v2776
    %v3288 = vsel %vm3181, %v3159, %v2780
    %v3289 = vsel %vm3181, %v3160, %v2784
    %v3290 = vsel %vm3181, %v3161, %v2788
    %v3291 = vsel %vm3181, %v3162, %v2792
    %v3292 = vsel %vm3181, %v3163, %v2796
    %v3293 = vsel %vm3181, %v3164, %v2800
    %v3294 = vsel %vm3181, %v3165, %v2807
    %v3295 = vsel %vm3181, %v3166, %v2811
    %v3296 = vsel %vm3181, %v3167, %v2815
    %v3297 = vsel %vm3181, %v3168, %v2819
    %v3298 = vsel %vm3181, %v3169, %v2823
    %v3299 = vsel %vm3181, %v3170, %v2827
    %v3300 = vsel %vm3181, %v3171, %v2831
    %v3301 = vsel %vm3181, %v3172, %v2835
    %v3302 = vsel %vm3181, %v3173, %v2839
    %v3303 = vsel %vm3181, %v3174, %v2843
    %v3304 = vsel %vm3181, %v3175, %v2847
    %v3305 = vsel %vm3181, %v3176, %v2851
    %v3306 = vsel %vm3181, %v3177, %v2855
    %v3307 = vsel %vm3181, %v3178, %v2859
    %v3308 = vsel %vm3181, %v3179, %v2863
    %v3309 = vsel %vm3181, %v3180, %v2867
    %v3310 = vlaneseq
    %v3311 = vshrl.u32 %v3310, 7
    %v3312 = vsub.s32 0, %v3311
    %v3313 = vrot.slane %v1701, %v3312
    %v3314 = vlaneseq
    %v3315 = vshrl.u32 %v3314, 7
    %v3316 = vsub.s32 0, %v3315
    %v3317 = vrot.slane %v1715, %v3316
    %v3318 = vlaneseq
    %v3319 = vshrl.u32 %v3318, 7
    %v3320 = vsub.s32 0, %v3319
    %v3321 = vrot.slane %v1723, %v3320
    %v3322 = vlaneseq
    %v3323 = vshrl.u32 %v3322, 7
    %v3324 = vsub.s32 0, %v3323
    %v3325 = vrot.slane %v1725, %v3324
    %v3326 = vlaneseq
    %v3327 = vshrl.u32 %v3326, 7
    %v3328 = vsub.s32 0, %v3327
    %v3329 = vrot.slane %v1708, %v3328
    %v3330 = vlaneseq
    %v3331 = vshrl.u32 %v3330, 7
    %v3332 = vsub.s32 0, %v3331
    %v3333 = vrot.slane %v1722, %v3332
    %v3334 = vlaneseq
    %v3335 = vshrl.u32 %v3334, 7
    %v3336 = vsub.s32 0, %v3335
    %v3337 = vrot.slane %v1724, %v3336
    %v3338 = vlaneseq
    %v3339 = vshrl.u32 %v3338, 7
    %v3340 = vsub.s32 0, %v3339
    %v3341 = vrot.slane %v1726, %v3340
    %v3350 = vlaneseq
    %v3351 = vshrl.u32 %v3350, 7
    %v3352 = vsub.s32 0, %v3351
    %v3353 = vrot.slane %v2299, %v3352
    %v3354 = vlaneseq
    %v3355 = vshrl.u32 %v3354, 7
    %v3356 = vsub.s32 0, %v3355
    %v3357 = vrot.slane %v2313, %v3356
    %v3358 = vlaneseq
    %v3359 = vshrl.u32 %v3358, 7
    %v3360 = vsub.s32 0, %v3359
    %v3361 = vrot.slane %v2321, %v3360
    %v3362 = vlaneseq
    %v3363 = vshrl.u32 %v3362, 7
    %v3364 = vsub.s32 0, %v3363
    %v3365 = vrot.slane %v2323, %v3364
    %v3366 = vlaneseq
    %v3367 = vshrl.u32 %v3366, 7
    %v3368 = vsub.s32 0, %v3367
    %v3369 = vrot.slane %v2306, %v3368
    %v3370 = vlaneseq
    %v3371 = vshrl.u32 %v3370, 7
    %v3372 = vsub.s32 0, %v3371
    %v3373 = vrot.slane %v2320, %v3372
    %v3374 = vlaneseq
    %v3375 = vshrl.u32 %v3374, 7
    %v3376 = vsub.s32 0, %v3375
    %v3377 = vrot.slane %v2322, %v3376
    %v3378 = vlaneseq
    %v3379 = vshrl.u32 %v3378, 7
    %v3380 = vsub.s32 0, %v3379
    %v3381 = vrot.slane %v2324, %v3380
    %v3390 = vlaneseq
    %v3391 = vshrl.u32 %v3390, 7
    %v3392 = vsub.s32 0, %v3391
    %v3393 = vrot.slane %v2897, %v3392
    %v3394 = vlaneseq
    %v3395 = vshrl.u32 %v3394, 7
    %v3396 = vsub.s32 0, %v3395
    %v3397 = vrot.slane %v2911, %v3396
    %v3398 = vlaneseq
    %v3399 = vshrl.u32 %v3398, 7
    %v3400 = vsub.s32 0, %v3399
    %v3401 = vrot.slane %v2919, %v3400
    %v3402 = vlaneseq
    %v3403 = vshrl.u32 %v3402, 7
    %v3404 = vsub.s32 0, %v3403
    %v3405 = vrot.slane %v2921, %v3404
    %v3406 = vlaneseq
    %v3407 = vshrl.u32 %v3406, 7
    %v3408 = vsub.s32 0, %v3407
    %v3409 = vrot.slane %v2904, %v3408
    %v3410 = vlaneseq
    %v3411 = vshrl.u32 %v3410, 7
    %v3412 = vsub.s32 0, %v3411
    %v3413 = vrot.slane %v2918, %v3412
    %v3414 = vlaneseq
    %v3415 = vshrl.u32 %v3414, 7
    %v3416 = vsub.s32 0, %v3415
    %v3417 = vrot.slane %v2920, %v3416
    %v3418 = vlaneseq
    %v3419 = vshrl.u32 %v3418, 7
    %v3420 = vsub.s32 0, %v3419
    %v3421 = vrot.slane %v2922, %v3420
    %vm3430 = vcmask 1040384
    %v3431 = vsel %vm3430, %v1095, %v3313
    %v3432 = vsel %vm3430, %v1109, %v3317
    %v3433 = vsel %vm3430, %v1117, %v3321
    %v3434 = vsel %vm3430, %v1119, %v3325
    %v3435 = vsel %vm3430, %v1102, %v3329
    %v3436 = vsel %vm3430, %v1116, %v3333
    %v3437 = vsel %vm3430, %v1118, %v3337
    %v3438 = vsel %vm3430, %v1120, %v3341
    %vm3439 = vcmask 1041408
    %v3440 = vsel %vm3439, %v3431, %v3353
    %v3441 = vsel %vm3439, %v3432, %v3357
    %v3442 = vsel %vm3439, %v3433, %v3361
    %v3443 = vsel %vm3439, %v3434, %v3365
    %v3444 = vsel %vm3439, %v3435, %v3369
    %v3445 = vsel %vm3439, %v3436, %v3373
    %v3446 = vsel %vm3439, %v3437, %v3377
    %v3447 = vsel %vm3439, %v3438, %v3381
    %vm3448 = vcmask 1042432
    %v3449 = vsel %vm3448, %v3440, %v3393
    %v3450 = vsel %vm3448, %v3441, %v3397
    %v3451 = vsel %vm3448, %v3442, %v3401
    %v3452 = vsel %vm3448, %v3443, %v3405
    %v3453 = vsel %vm3448, %v3444, %v3409
    %v3454 = vsel %vm3448, %v3445, %v3413
    %v3455 = vsel %vm3448, %v3446, %v3417
    %v3456 = vsel %vm3448, %v3447, %v3421
    %vm3457 = vcmask 31744
    %v3459 = vsel %vm3457, %v3182, 0
    %v3462 = vsel %vm3457, %v3183, 0
    %v3465 = vsel %vm3457, %v3184, 0
    %v3468 = vsel %vm3457, %v3185, 0
    %v3471 = vsel %vm3457, %v3186, 0
    %v3474 = vsel %vm3457, %v3187, 0
    %v3477 = vsel %vm3457, %v3188, 0
    %v3480 = vsel %vm3457, %v3189, 0
    %v3483 = vsel %vm3457, %v3190, 0
    %v3486 = vsel %vm3457, %v3191, 0
    %v3489 = vsel %vm3457, %v3192, 0
    %v3492 = vsel %vm3457, %v3193, 0
    %v3495 = vsel %vm3457, %v3194, 0
    %v3498 = vsel %vm3457, %v3195, 0
    %v3501 = vsel %vm3457, %v3196, 0
    %v3504 = vsel %vm3457, %v3197, 0
    %vm3506 = vcmask 1043456
    %v3508 = vsel %vm3506, %v3449, 0
    %3510 = vmatprep.subr.mxu0 0.0
    %3511 = vmatpush1.msra.mxu0 0.0
    %3512 = vmatprep.subr.mxu0 0.0
    %3513 = vmatpush1.msra.mxu0 0.0
    %3514 = vmatprep.subr.mxu0 0.0
    %3515 = vmatpush1.msra.mxu0 0.0
    %3516 = vmatprep.subr.mxu0 0.0
    %3517 = vmatpush1.msra.mxu0 0.0
    %3518 = vmatprep.subr.mxu0 0.0
    %3519 = vmatpush1.msra.mxu0 0.0
    %3520 = vmatprep.subr.mxu0 0.0
    %3521 = vmatpush1.msra.mxu0 0.0
    %3522 = vmatprep.subr.mxu0 0.0
    %3523 = vmatpush1.msra.mxu0 0.0
    %3524 = vmatprep.subr.mxu0 0.0
    %3525 = vmatpush1.msra.mxu0 0.0
    %3526 = vmatprep.subr.mxu0 0.0
    %3527 = vmatpush1.msra.mxu0 0.0
    %3528 = vmatprep.subr.mxu0 0.0
    %3529 = vmatpush1.msra.mxu0 0.0
    %3530 = vmatprep.subr.mxu0 0.0
    %3531 = vmatpush1.msra.mxu0 0.0
    %3532 = vmatprep.subr.mxu0 0.0
    %3533 = vmatpush1.msra.mxu0 0.0
    %3534 = vmatprep.subr.mxu0 0.0
    %3535 = vmatpush1.msra.mxu0 0.0
    %3536 = vmatprep.subr.mxu0 0.0
    %3537 = vmatpush1.msra.mxu0 0.0
    %3538 = vmatprep.subr.mxu0 0.0
    %3539 = vmatpush1.msra.mxu0 0.0
    %3540 = vmatprep.subr.mxu0 0.0
    %3541 = vmatpush1.msra.mxu0 %v3508
    %3542 = vmatprep.subr.mxu0 0.0
    %3543 = vmatpush2.msra.mxu0 0.0
    %3544 = vmatprep.subr.mxu0 0.0
    %3545 = vmatpush2.msra.mxu0 0.0
    %3546 = vmatprep.subr.mxu0 0.0
    %3547 = vmatpush2.msra.mxu0 0.0
    %3548 = vmatprep.subr.mxu0 0.0
    %3549 = vmatpush2.msra.mxu0 0.0
    %3550 = vmatprep.subr.mxu0 0.0
    %3551 = vmatpush2.msra.mxu0 0.0
    %3552 = vmatprep.subr.mxu0 0.0
    %3553 = vmatpush2.msra.mxu0 0.0
    %3554 = vmatprep.subr.mxu0 0.0
    %3555 = vmatpush2.msra.mxu0 0.0
    %3556 = vmatprep.subr.mxu0 0.0
    %3557 = vmatpush2.msra.mxu0 0.0
    %3558 = vmatprep.subr.mxu0 0.0
    %3559 = vmatpush2.msra.mxu0 0.0
    %3560 = vmatprep.subr.mxu0 0.0
    %3561 = vmatpush2.msra.mxu0 0.0
    %3562 = vmatprep.subr.mxu0 0.0
    %3563 = vmatpush2.msra.mxu0 0.0
    %3564 = vmatprep.subr.mxu0 0.0
    %3565 = vmatpush2.msra.mxu0 0.0
    %3566 = vmatprep.subr.mxu0 0.0
    %3567 = vmatpush2.msra.mxu0 0.0
    %3568 = vmatprep.subr.mxu0 0.0
    %3569 = vmatpush2.msra.mxu0 0.0
    %3570 = vmatprep.subr.mxu0 0.0
    %3571 = vmatpush2.msra.mxu0 0.0
    %3572 = vmatprep.subr.mxu0 0.0
    %3573 = vmatpush2.msra.mxu0 0.0
    %3574 = vmatprep.mubr.f32.mxu0 0.0
    %3575 = vmatmul.mubr.f32.gmra.mxu0 %v3459
    %v3576 = vpop.f32.mrf.mxu0
    %v3577 = vadd.f32 0.0, %v3576
    %v3578 = vpop.f32.mrf.mxu0
    %3579 = vmatprep.mubr.f32.mxu0 0.0
    %3580 = vmatmul.mubr.f32.gmra.mxu0 %v3462
    %v3581 = vpop.f32.mrf.mxu0
    %v3582 = vadd.f32 0.0, %v3581
    %v3583 = vpop.f32.mrf.mxu0
    %3584 = vmatprep.mubr.f32.mxu0 0.0
    %3585 = vmatmul.mubr.f32.gmra.mxu0 %v3465
    %v3586 = vpop.f32.mrf.mxu0
    %v3587 = vadd.f32 0.0, %v3586
    %v3588 = vpop.f32.mrf.mxu0
    %3589 = vmatprep.mubr.f32.mxu0 0.0
    %3590 = vmatmul.mubr.f32.gmra.mxu0 %v3468
    %v3591 = vpop.f32.mrf.mxu0
    %v3592 = vadd.f32 0.0, %v3591
    %v3593 = vpop.f32.mrf.mxu0
    %3594 = vmatprep.mubr.f32.mxu0 0.0
    %3595 = vmatmul.mubr.f32.gmra.mxu0 %v3471
    %v3596 = vpop.f32.mrf.mxu0
    %v3597 = vadd.f32 0.0, %v3596
    %v3598 = vpop.f32.mrf.mxu0
    %3599 = vmatprep.mubr.f32.mxu0 0.0
    %3600 = vmatmul.mubr.f32.gmra.mxu0 %v3474
    %v3601 = vpop.f32.mrf.mxu0
    %v3602 = vadd.f32 0.0, %v3601
    %v3603 = vpop.f32.mrf.mxu0
    %3604 = vmatprep.mubr.f32.mxu0 0.0
    %3605 = vmatmul.mubr.f32.gmra.mxu0 %v3477
    %v3606 = vpop.f32.mrf.mxu0
    %v3607 = vadd.f32 0.0, %v3606
    %v3608 = vpop.f32.mrf.mxu0
    %3609 = vmatprep.mubr.f32.mxu0 0.0
    %3610 = vmatmul.mubr.f32.gmra.mxu0 %v3480
    %v3611 = vpop.f32.mrf.mxu0
    %v3612 = vadd.f32 0.0, %v3611
    %v3613 = vpop.f32.mrf.mxu0
    %3614 = vmatprep.mubr.f32.mxu0 0.0
    %3615 = vmatmul.mubr.f32.gmra.mxu0 %v3483
    %v3616 = vpop.f32.mrf.mxu0
    %v3617 = vadd.f32 0.0, %v3616
    %v3618 = vpop.f32.mrf.mxu0
    %3619 = vmatprep.mubr.f32.mxu0 0.0
    %3620 = vmatmul.mubr.f32.gmra.mxu0 %v3486
    %v3621 = vpop.f32.mrf.mxu0
    %v3622 = vadd.f32 0.0, %v3621
    %v3623 = vpop.f32.mrf.mxu0
    %3624 = vmatprep.mubr.f32.mxu0 0.0
    %3625 = vmatmul.mubr.f32.gmra.mxu0 %v3489
    %v3626 = vpop.f32.mrf.mxu0
    %v3627 = vadd.f32 0.0, %v3626
    %v3628 = vpop.f32.mrf.mxu0
    %3629 = vmatprep.mubr.f32.mxu0 0.0
    %3630 = vmatmul.mubr.f32.gmra.mxu0 %v3492
    %v3631 = vpop.f32.mrf.mxu0
    %v3632 = vadd.f32 0.0, %v3631
    %v3633 = vpop.f32.mrf.mxu0
    %3634 = vmatprep.mubr.f32.mxu0 0.0
    %3635 = vmatmul.mubr.f32.gmra.mxu0 %v3495
    %v3636 = vpop.f32.mrf.mxu0
    %v3637 = vadd.f32 0.0, %v3636
    %v3638 = vpop.f32.mrf.mxu0
    %3639 = vmatprep.mubr.f32.mxu0 0.0
    %3640 = vmatmul.mubr.f32.gmra.mxu0 %v3498
    %v3641 = vpop.f32.mrf.mxu0
    %v3642 = vadd.f32 0.0, %v3641
    %v3643 = vpop.f32.mrf.mxu0
    %3644 = vmatprep.mubr.f32.mxu0 0.0
    %3645 = vmatmul.mubr.f32.gmra.mxu0 %v3501
    %v3646 = vpop.f32.mrf.mxu0
    %v3647 = vadd.f32 0.0, %v3646
    %v3648 = vpop.f32.mrf.mxu0
    %3649 = vmatprep.mubr.f32.mxu0 0.0
    %3650 = vmatmul.mubr.f32.gmra.mxu0 %v3504
    %v3651 = vpop.f32.mrf.mxu0
    %v3652 = vadd.f32 0.0, %v3651
    %v3653 = vpop.f32.mrf.mxu0
    %3654 = vdwg.mxu0
    %v3656 = vsel %vm3457, %v3198, 0
    %v3659 = vsel %vm3457, %v3199, 0
    %v3662 = vsel %vm3457, %v3200, 0
    %v3665 = vsel %vm3457, %v3201, 0
    %v3668 = vsel %vm3457, %v3202, 0
    %v3671 = vsel %vm3457, %v3203, 0
    %v3674 = vsel %vm3457, %v3204, 0
    %v3677 = vsel %vm3457, %v3205, 0
    %v3680 = vsel %vm3457, %v3206, 0
    %v3683 = vsel %vm3457, %v3207, 0
    %v3686 = vsel %vm3457, %v3208, 0
    %v3689 = vsel %vm3457, %v3209, 0
    %v3692 = vsel %vm3457, %v3210, 0
    %v3695 = vsel %vm3457, %v3211, 0
    %v3698 = vsel %vm3457, %v3212, 0
    %v3701 = vsel %vm3457, %v3213, 0
    %v3704 = vsel %vm3506, %v3450, 0
    %3706 = vmatprep.subr.mxu0 0.0
    %3707 = vmatpush1.msra.mxu0 0.0
    %3708 = vmatprep.subr.mxu0 0.0
    %3709 = vmatpush1.msra.mxu0 0.0
    %3710 = vmatprep.subr.mxu0 0.0
    %3711 = vmatpush1.msra.mxu0 0.0
    %3712 = vmatprep.subr.mxu0 0.0
    %3713 = vmatpush1.msra.mxu0 0.0
    %3714 = vmatprep.subr.mxu0 0.0
    %3715 = vmatpush1.msra.mxu0 0.0
    %3716 = vmatprep.subr.mxu0 0.0
    %3717 = vmatpush1.msra.mxu0 0.0
    %3718 = vmatprep.subr.mxu0 0.0
    %3719 = vmatpush1.msra.mxu0 0.0
    %3720 = vmatprep.subr.mxu0 0.0
    %3721 = vmatpush1.msra.mxu0 0.0
    %3722 = vmatprep.subr.mxu0 0.0
    %3723 = vmatpush1.msra.mxu0 0.0
    %3724 = vmatprep.subr.mxu0 0.0
    %3725 = vmatpush1.msra.mxu0 0.0
    %3726 = vmatprep.subr.mxu0 0.0
    %3727 = vmatpush1.msra.mxu0 0.0
    %3728 = vmatprep.subr.mxu0 0.0
    %3729 = vmatpush1.msra.mxu0 0.0
    %3730 = vmatprep.subr.mxu0 0.0
    %3731 = vmatpush1.msra.mxu0 0.0
    %3732 = vmatprep.subr.mxu0 0.0
    %3733 = vmatpush1.msra.mxu0 0.0
    %3734 = vmatprep.subr.mxu0 0.0
    %3735 = vmatpush1.msra.mxu0 0.0
    %3736 = vmatprep.subr.mxu0 0.0
    %3737 = vmatpush1.msra.mxu0 %v3704
    %3738 = vmatprep.subr.mxu0 0.0
    %3739 = vmatpush2.msra.mxu0 0.0
    %3740 = vmatprep.subr.mxu0 0.0
    %3741 = vmatpush2.msra.mxu0 0.0
    %3742 = vmatprep.subr.mxu0 0.0
    %3743 = vmatpush2.msra.mxu0 0.0
    %3744 = vmatprep.subr.mxu0 0.0
    %3745 = vmatpush2.msra.mxu0 0.0
    %3746 = vmatprep.subr.mxu0 0.0
    %3747 = vmatpush2.msra.mxu0 0.0
    %3748 = vmatprep.subr.mxu0 0.0
    %3749 = vmatpush2.msra.mxu0 0.0
    %3750 = vmatprep.subr.mxu0 0.0
    %3751 = vmatpush2.msra.mxu0 0.0
    %3752 = vmatprep.subr.mxu0 0.0
    %3753 = vmatpush2.msra.mxu0 0.0
    %3754 = vmatprep.subr.mxu0 0.0
    %3755 = vmatpush2.msra.mxu0 0.0
    %3756 = vmatprep.subr.mxu0 0.0
    %3757 = vmatpush2.msra.mxu0 0.0
    %3758 = vmatprep.subr.mxu0 0.0
    %3759 = vmatpush2.msra.mxu0 0.0
    %3760 = vmatprep.subr.mxu0 0.0
    %3761 = vmatpush2.msra.mxu0 0.0
    %3762 = vmatprep.subr.mxu0 0.0
    %3763 = vmatpush2.msra.mxu0 0.0
    %3764 = vmatprep.subr.mxu0 0.0
    %3765 = vmatpush2.msra.mxu0 0.0
    %3766 = vmatprep.subr.mxu0 0.0
    %3767 = vmatpush2.msra.mxu0 0.0
    %3768 = vmatprep.subr.mxu0 0.0
    %3769 = vmatpush2.msra.mxu0 0.0
    %3770 = vmatprep.mubr.f32.mxu0 0.0
    %3771 = vmatmul.mubr.f32.gmra.mxu0 %v3656
    %v3772 = vpop.f32.mrf.mxu0
    %v3773 = vadd.f32 0.0, %v3772
    %v3774 = vpop.f32.mrf.mxu0
    %3775 = vmatprep.mubr.f32.mxu0 0.0
    %3776 = vmatmul.mubr.f32.gmra.mxu0 %v3659
    %v3777 = vpop.f32.mrf.mxu0
    %v3778 = vadd.f32 0.0, %v3777
    %v3779 = vpop.f32.mrf.mxu0
    %3780 = vmatprep.mubr.f32.mxu0 0.0
    %3781 = vmatmul.mubr.f32.gmra.mxu0 %v3662
    %v3782 = vpop.f32.mrf.mxu0
    %v3783 = vadd.f32 0.0, %v3782
    %v3784 = vpop.f32.mrf.mxu0
    %3785 = vmatprep.mubr.f32.mxu0 0.0
    %3786 = vmatmul.mubr.f32.gmra.mxu0 %v3665
    %v3787 = vpop.f32.mrf.mxu0
    %v3788 = vadd.f32 0.0, %v3787
    %v3789 = vpop.f32.mrf.mxu0
    %3790 = vmatprep.mubr.f32.mxu0 0.0
    %3791 = vmatmul.mubr.f32.gmra.mxu0 %v3668
    %v3792 = vpop.f32.mrf.mxu0
    %v3793 = vadd.f32 0.0, %v3792
    %v3794 = vpop.f32.mrf.mxu0
    %3795 = vmatprep.mubr.f32.mxu0 0.0
    %3796 = vmatmul.mubr.f32.gmra.mxu0 %v3671
    %v3797 = vpop.f32.mrf.mxu0
    %v3798 = vadd.f32 0.0, %v3797
    %v3799 = vpop.f32.mrf.mxu0
    %3800 = vmatprep.mubr.f32.mxu0 0.0
    %3801 = vmatmul.mubr.f32.gmra.mxu0 %v3674
    %v3802 = vpop.f32.mrf.mxu0
    %v3803 = vadd.f32 0.0, %v3802
    %v3804 = vpop.f32.mrf.mxu0
    %3805 = vmatprep.mubr.f32.mxu0 0.0
    %3806 = vmatmul.mubr.f32.gmra.mxu0 %v3677
    %v3807 = vpop.f32.mrf.mxu0
    %v3808 = vadd.f32 0.0, %v3807
    %v3809 = vpop.f32.mrf.mxu0
    %3810 = vmatprep.mubr.f32.mxu0 0.0
    %3811 = vmatmul.mubr.f32.gmra.mxu0 %v3680
    %v3812 = vpop.f32.mrf.mxu0
    %v3813 = vadd.f32 0.0, %v3812
    %v3814 = vpop.f32.mrf.mxu0
    %3815 = vmatprep.mubr.f32.mxu0 0.0
    %3816 = vmatmul.mubr.f32.gmra.mxu0 %v3683
    %v3817 = vpop.f32.mrf.mxu0
    %v3818 = vadd.f32 0.0, %v3817
    %v3819 = vpop.f32.mrf.mxu0
    %3820 = vmatprep.mubr.f32.mxu0 0.0
    %3821 = vmatmul.mubr.f32.gmra.mxu0 %v3686
    %v3822 = vpop.f32.mrf.mxu0
    %v3823 = vadd.f32 0.0, %v3822
    %v3824 = vpop.f32.mrf.mxu0
    %3825 = vmatprep.mubr.f32.mxu0 0.0
    %3826 = vmatmul.mubr.f32.gmra.mxu0 %v3689
    %v3827 = vpop.f32.mrf.mxu0
    %v3828 = vadd.f32 0.0, %v3827
    %v3829 = vpop.f32.mrf.mxu0
    %3830 = vmatprep.mubr.f32.mxu0 0.0
    %3831 = vmatmul.mubr.f32.gmra.mxu0 %v3692
    %v3832 = vpop.f32.mrf.mxu0
    %v3833 = vadd.f32 0.0, %v3832
    %v3834 = vpop.f32.mrf.mxu0
    %3835 = vmatprep.mubr.f32.mxu0 0.0
    %3836 = vmatmul.mubr.f32.gmra.mxu0 %v3695
    %v3837 = vpop.f32.mrf.mxu0
    %v3838 = vadd.f32 0.0, %v3837
    %v3839 = vpop.f32.mrf.mxu0
    %3840 = vmatprep.mubr.f32.mxu0 0.0
    %3841 = vmatmul.mubr.f32.gmra.mxu0 %v3698
    %v3842 = vpop.f32.mrf.mxu0
    %v3843 = vadd.f32 0.0, %v3842
    %v3844 = vpop.f32.mrf.mxu0
    %3845 = vmatprep.mubr.f32.mxu0 0.0
    %3846 = vmatmul.mubr.f32.gmra.mxu0 %v3701
    %v3847 = vpop.f32.mrf.mxu0
    %v3848 = vadd.f32 0.0, %v3847
    %v3849 = vpop.f32.mrf.mxu0
    %3850 = vdwg.mxu0
    %v3852 = vsel %vm3457, %v3214, 0
    %v3855 = vsel %vm3457, %v3215, 0
    %v3858 = vsel %vm3457, %v3216, 0
    %v3861 = vsel %vm3457, %v3217, 0
    %v3864 = vsel %vm3457, %v3218, 0
    %v3867 = vsel %vm3457, %v3219, 0
    %v3870 = vsel %vm3457, %v3220, 0
    %v3873 = vsel %vm3457, %v3221, 0
    %v3876 = vsel %vm3457, %v3222, 0
    %v3879 = vsel %vm3457, %v3223, 0
    %v3882 = vsel %vm3457, %v3224, 0
    %v3885 = vsel %vm3457, %v3225, 0
    %v3888 = vsel %vm3457, %v3226, 0
    %v3891 = vsel %vm3457, %v3227, 0
    %v3894 = vsel %vm3457, %v3228, 0
    %v3897 = vsel %vm3457, %v3229, 0
    %v3900 = vsel %vm3506, %v3451, 0
    %3902 = vmatprep.subr.mxu0 0.0
    %3903 = vmatpush1.msra.mxu0 0.0
    %3904 = vmatprep.subr.mxu0 0.0
    %3905 = vmatpush1.msra.mxu0 0.0
    %3906 = vmatprep.subr.mxu0 0.0
    %3907 = vmatpush1.msra.mxu0 0.0
    %3908 = vmatprep.subr.mxu0 0.0
    %3909 = vmatpush1.msra.mxu0 0.0
    %3910 = vmatprep.subr.mxu0 0.0
    %3911 = vmatpush1.msra.mxu0 0.0
    %3912 = vmatprep.subr.mxu0 0.0
    %3913 = vmatpush1.msra.mxu0 0.0
    %3914 = vmatprep.subr.mxu0 0.0
    %3915 = vmatpush1.msra.mxu0 0.0
    %3916 = vmatprep.subr.mxu0 0.0
    %3917 = vmatpush1.msra.mxu0 0.0
    %3918 = vmatprep.subr.mxu0 0.0
    %3919 = vmatpush1.msra.mxu0 0.0
    %3920 = vmatprep.subr.mxu0 0.0
    %3921 = vmatpush1.msra.mxu0 0.0
    %3922 = vmatprep.subr.mxu0 0.0
    %3923 = vmatpush1.msra.mxu0 0.0
    %3924 = vmatprep.subr.mxu0 0.0
    %3925 = vmatpush1.msra.mxu0 0.0
    %3926 = vmatprep.subr.mxu0 0.0
    %3927 = vmatpush1.msra.mxu0 0.0
    %3928 = vmatprep.subr.mxu0 0.0
    %3929 = vmatpush1.msra.mxu0 0.0
    %3930 = vmatprep.subr.mxu0 0.0
    %3931 = vmatpush1.msra.mxu0 0.0
    %3932 = vmatprep.subr.mxu0 0.0
    %3933 = vmatpush1.msra.mxu0 %v3900
    %3934 = vmatprep.subr.mxu0 0.0
    %3935 = vmatpush2.msra.mxu0 0.0
    %3936 = vmatprep.subr.mxu0 0.0
    %3937 = vmatpush2.msra.mxu0 0.0
    %3938 = vmatprep.subr.mxu0 0.0
    %3939 = vmatpush2.msra.mxu0 0.0
    %3940 = vmatprep.subr.mxu0 0.0
    %3941 = vmatpush2.msra.mxu0 0.0
    %3942 = vmatprep.subr.mxu0 0.0
    %3943 = vmatpush2.msra.mxu0 0.0
    %3944 = vmatprep.subr.mxu0 0.0
    %3945 = vmatpush2.msra.mxu0 0.0
    %3946 = vmatprep.subr.mxu0 0.0
    %3947 = vmatpush2.msra.mxu0 0.0
    %3948 = vmatprep.subr.mxu0 0.0
    %3949 = vmatpush2.msra.mxu0 0.0
    %3950 = vmatprep.subr.mxu0 0.0
    %3951 = vmatpush2.msra.mxu0 0.0
    %3952 = vmatprep.subr.mxu0 0.0
    %3953 = vmatpush2.msra.mxu0 0.0
    %3954 = vmatprep.subr.mxu0 0.0
    %3955 = vmatpush2.msra.mxu0 0.0
    %3956 = vmatprep.subr.mxu0 0.0
    %3957 = vmatpush2.msra.mxu0 0.0
    %3958 = vmatprep.subr.mxu0 0.0
    %3959 = vmatpush2.msra.mxu0 0.0
    %3960 = vmatprep.subr.mxu0 0.0
    %3961 = vmatpush2.msra.mxu0 0.0
    %3962 = vmatprep.subr.mxu0 0.0
    %3963 = vmatpush2.msra.mxu0 0.0
    %3964 = vmatprep.subr.mxu0 0.0
    %3965 = vmatpush2.msra.mxu0 0.0
    %3966 = vmatprep.mubr.f32.mxu0 0.0
    %3967 = vmatmul.mubr.f32.gmra.mxu0 %v3852
    %v3968 = vpop.f32.mrf.mxu0
    %v3969 = vadd.f32 0.0, %v3968
    %v3970 = vpop.f32.mrf.mxu0
    %3971 = vmatprep.mubr.f32.mxu0 0.0
    %3972 = vmatmul.mubr.f32.gmra.mxu0 %v3855
    %v3973 = vpop.f32.mrf.mxu0
    %v3974 = vadd.f32 0.0, %v3973
    %v3975 = vpop.f32.mrf.mxu0
    %3976 = vmatprep.mubr.f32.mxu0 0.0
    %3977 = vmatmul.mubr.f32.gmra.mxu0 %v3858
    %v3978 = vpop.f32.mrf.mxu0
    %v3979 = vadd.f32 0.0, %v3978
    %v3980 = vpop.f32.mrf.mxu0
    %3981 = vmatprep.mubr.f32.mxu0 0.0
    %3982 = vmatmul.mubr.f32.gmra.mxu0 %v3861
    %v3983 = vpop.f32.mrf.mxu0
    %v3984 = vadd.f32 0.0, %v3983
    %v3985 = vpop.f32.mrf.mxu0
    %3986 = vmatprep.mubr.f32.mxu0 0.0
    %3987 = vmatmul.mubr.f32.gmra.mxu0 %v3864
    %v3988 = vpop.f32.mrf.mxu0
    %v3989 = vadd.f32 0.0, %v3988
    %v3990 = vpop.f32.mrf.mxu0
    %3991 = vmatprep.mubr.f32.mxu0 0.0
    %3992 = vmatmul.mubr.f32.gmra.mxu0 %v3867
    %v3993 = vpop.f32.mrf.mxu0
    %v3994 = vadd.f32 0.0, %v3993
    %v3995 = vpop.f32.mrf.mxu0
    %3996 = vmatprep.mubr.f32.mxu0 0.0
    %3997 = vmatmul.mubr.f32.gmra.mxu0 %v3870
    %v3998 = vpop.f32.mrf.mxu0
    %v3999 = vadd.f32 0.0, %v3998
    %v4000 = vpop.f32.mrf.mxu0
    %4001 = vmatprep.mubr.f32.mxu0 0.0
    %4002 = vmatmul.mubr.f32.gmra.mxu0 %v3873
    %v4003 = vpop.f32.mrf.mxu0
    %v4004 = vadd.f32 0.0, %v4003
    %v4005 = vpop.f32.mrf.mxu0
    %4006 = vmatprep.mubr.f32.mxu0 0.0
    %4007 = vmatmul.mubr.f32.gmra.mxu0 %v3876
    %v4008 = vpop.f32.mrf.mxu0
    %v4009 = vadd.f32 0.0, %v4008
    %v4010 = vpop.f32.mrf.mxu0
    %4011 = vmatprep.mubr.f32.mxu0 0.0
    %4012 = vmatmul.mubr.f32.gmra.mxu0 %v3879
    %v4013 = vpop.f32.mrf.mxu0
    %v4014 = vadd.f32 0.0, %v4013
    %v4015 = vpop.f32.mrf.mxu0
    %4016 = vmatprep.mubr.f32.mxu0 0.0
    %4017 = vmatmul.mubr.f32.gmra.mxu0 %v3882
    %v4018 = vpop.f32.mrf.mxu0
    %v4019 = vadd.f32 0.0, %v4018
    %v4020 = vpop.f32.mrf.mxu0
    %4021 = vmatprep.mubr.f32.mxu0 0.0
    %4022 = vmatmul.mubr.f32.gmra.mxu0 %v3885
    %v4023 = vpop.f32.mrf.mxu0
    %v4024 = vadd.f32 0.0, %v4023
    %v4025 = vpop.f32.mrf.mxu0
    %4026 = vmatprep.mubr.f32.mxu0 0.0
    %4027 = vmatmul.mubr.f32.gmra.mxu0 %v3888
    %v4028 = vpop.f32.mrf.mxu0
    %v4029 = vadd.f32 0.0, %v4028
    %v4030 = vpop.f32.mrf.mxu0
    %4031 = vmatprep.mubr.f32.mxu0 0.0
    %4032 = vmatmul.mubr.f32.gmra.mxu0 %v3891
    %v4033 = vpop.f32.mrf.mxu0
    %v4034 = vadd.f32 0.0, %v4033
    %v4035 = vpop.f32.mrf.mxu0
    %4036 = vmatprep.mubr.f32.mxu0 0.0
    %4037 = vmatmul.mubr.f32.gmra.mxu0 %v3894
    %v4038 = vpop.f32.mrf.mxu0
    %v4039 = vadd.f32 0.0, %v4038
    %v4040 = vpop.f32.mrf.mxu0
    %4041 = vmatprep.mubr.f32.mxu0 0.0
    %4042 = vmatmul.mubr.f32.gmra.mxu0 %v3897
    %v4043 = vpop.f32.mrf.mxu0
    %v4044 = vadd.f32 0.0, %v4043
    %v4045 = vpop.f32.mrf.mxu0
    %4046 = vdwg.mxu0
    %v4048 = vsel %vm3457, %v3230, 0
    %v4051 = vsel %vm3457, %v3231, 0
    %v4054 = vsel %vm3457, %v3232, 0
    %v4057 = vsel %vm3457, %v3233, 0
    %v4060 = vsel %vm3457, %v3234, 0
    %v4063 = vsel %vm3457, %v3235, 0
    %v4066 = vsel %vm3457, %v3236, 0
    %v4069 = vsel %vm3457, %v3237, 0
    %v4072 = vsel %vm3457, %v3238, 0
    %v4075 = vsel %vm3457, %v3239, 0
    %v4078 = vsel %vm3457, %v3240, 0
    %v4081 = vsel %vm3457, %v3241, 0
    %v4084 = vsel %vm3457, %v3242, 0
    %v4087 = vsel %vm3457, %v3243, 0
    %v4090 = vsel %vm3457, %v3244, 0
    %v4093 = vsel %vm3457, %v3245, 0
    %v4096 = vsel %vm3506, %v3452, 0
    %4098 = vmatprep.subr.mxu0 0.0
    %4099 = vmatpush1.msra.mxu0 0.0
    %4100 = vmatprep.subr.mxu0 0.0
    %4101 = vmatpush1.msra.mxu0 0.0
    %4102 = vmatprep.subr.mxu0 0.0
    %4103 = vmatpush1.msra.mxu0 0.0
    %4104 = vmatprep.subr.mxu0 0.0
    %4105 = vmatpush1.msra.mxu0 0.0
    %4106 = vmatprep.subr.mxu0 0.0
    %4107 = vmatpush1.msra.mxu0 0.0
    %4108 = vmatprep.subr.mxu0 0.0
    %4109 = vmatpush1.msra.mxu0 0.0
    %4110 = vmatprep.subr.mxu0 0.0
    %4111 = vmatpush1.msra.mxu0 0.0
    %4112 = vmatprep.subr.mxu0 0.0
    %4113 = vmatpush1.msra.mxu0 0.0
    %4114 = vmatprep.subr.mxu0 0.0
    %4115 = vmatpush1.msra.mxu0 0.0
    %4116 = vmatprep.subr.mxu0 0.0
    %4117 = vmatpush1.msra.mxu0 0.0
    %4118 = vmatprep.subr.mxu0 0.0
    %4119 = vmatpush1.msra.mxu0 0.0
    %4120 = vmatprep.subr.mxu0 0.0
    %4121 = vmatpush1.msra.mxu0 0.0
    %4122 = vmatprep.subr.mxu0 0.0
    %4123 = vmatpush1.msra.mxu0 0.0
    %4124 = vmatprep.subr.mxu0 0.0
    %4125 = vmatpush1.msra.mxu0 0.0
    %4126 = vmatprep.subr.mxu0 0.0
    %4127 = vmatpush1.msra.mxu0 0.0
    %4128 = vmatprep.subr.mxu0 0.0
    %4129 = vmatpush1.msra.mxu0 %v4096
    %4130 = vmatprep.subr.mxu0 0.0
    %4131 = vmatpush2.msra.mxu0 0.0
    %4132 = vmatprep.subr.mxu0 0.0
    %4133 = vmatpush2.msra.mxu0 0.0
    %4134 = vmatprep.subr.mxu0 0.0
    %4135 = vmatpush2.msra.mxu0 0.0
    %4136 = vmatprep.subr.mxu0 0.0
    %4137 = vmatpush2.msra.mxu0 0.0
    %4138 = vmatprep.subr.mxu0 0.0
    %4139 = vmatpush2.msra.mxu0 0.0
    %4140 = vmatprep.subr.mxu0 0.0
    %4141 = vmatpush2.msra.mxu0 0.0
    %4142 = vmatprep.subr.mxu0 0.0
    %4143 = vmatpush2.msra.mxu0 0.0
    %4144 = vmatprep.subr.mxu0 0.0
    %4145 = vmatpush2.msra.mxu0 0.0
    %4146 = vmatprep.subr.mxu0 0.0
    %4147 = vmatpush2.msra.mxu0 0.0
    %4148 = vmatprep.subr.mxu0 0.0
    %4149 = vmatpush2.msra.mxu0 0.0
    %4150 = vmatprep.subr.mxu0 0.0
    %4151 = vmatpush2.msra.mxu0 0.0
    %4152 = vmatprep.subr.mxu0 0.0
    %4153 = vmatpush2.msra.mxu0 0.0
    %4154 = vmatprep.subr.mxu0 0.0
    %4155 = vmatpush2.msra.mxu0 0.0
    %4156 = vmatprep.subr.mxu0 0.0
    %4157 = vmatpush2.msra.mxu0 0.0
    %4158 = vmatprep.subr.mxu0 0.0
    %4159 = vmatpush2.msra.mxu0 0.0
    %4160 = vmatprep.subr.mxu0 0.0
    %4161 = vmatpush2.msra.mxu0 0.0
    %4162 = vmatprep.mubr.f32.mxu0 0.0
    %4163 = vmatmul.mubr.f32.gmra.mxu0 %v4048
    %v4164 = vpop.f32.mrf.mxu0
    %v4165 = vadd.f32 0.0, %v4164
    %v4166 = vpop.f32.mrf.mxu0
    %4167 = vmatprep.mubr.f32.mxu0 0.0
    %4168 = vmatmul.mubr.f32.gmra.mxu0 %v4051
    %v4169 = vpop.f32.mrf.mxu0
    %v4170 = vadd.f32 0.0, %v4169
    %v4171 = vpop.f32.mrf.mxu0
    %4172 = vmatprep.mubr.f32.mxu0 0.0
    %4173 = vmatmul.mubr.f32.gmra.mxu0 %v4054
    %v4174 = vpop.f32.mrf.mxu0
    %v4175 = vadd.f32 0.0, %v4174
    %v4176 = vpop.f32.mrf.mxu0
    %4177 = vmatprep.mubr.f32.mxu0 0.0
    %4178 = vmatmul.mubr.f32.gmra.mxu0 %v4057
    %v4179 = vpop.f32.mrf.mxu0
    %v4180 = vadd.f32 0.0, %v4179
    %v4181 = vpop.f32.mrf.mxu0
    %4182 = vmatprep.mubr.f32.mxu0 0.0
    %4183 = vmatmul.mubr.f32.gmra.mxu0 %v4060
    %v4184 = vpop.f32.mrf.mxu0
    %v4185 = vadd.f32 0.0, %v4184
    %v4186 = vpop.f32.mrf.mxu0
    %4187 = vmatprep.mubr.f32.mxu0 0.0
    %4188 = vmatmul.mubr.f32.gmra.mxu0 %v4063
    %v4189 = vpop.f32.mrf.mxu0
    %v4190 = vadd.f32 0.0, %v4189
    %v4191 = vpop.f32.mrf.mxu0
    %4192 = vmatprep.mubr.f32.mxu0 0.0
    %4193 = vmatmul.mubr.f32.gmra.mxu0 %v4066
    %v4194 = vpop.f32.mrf.mxu0
    %v4195 = vadd.f32 0.0, %v4194
    %v4196 = vpop.f32.mrf.mxu0
    %4197 = vmatprep.mubr.f32.mxu0 0.0
    %4198 = vmatmul.mubr.f32.gmra.mxu0 %v4069
    %v4199 = vpop.f32.mrf.mxu0
    %v4200 = vadd.f32 0.0, %v4199
    %v4201 = vpop.f32.mrf.mxu0
    %4202 = vmatprep.mubr.f32.mxu0 0.0
    %4203 = vmatmul.mubr.f32.gmra.mxu0 %v4072
    %v4204 = vpop.f32.mrf.mxu0
    %v4205 = vadd.f32 0.0, %v4204
    %v4206 = vpop.f32.mrf.mxu0
    %4207 = vmatprep.mubr.f32.mxu0 0.0
    %4208 = vmatmul.mubr.f32.gmra.mxu0 %v4075
    %v4209 = vpop.f32.mrf.mxu0
    %v4210 = vadd.f32 0.0, %v4209
    %v4211 = vpop.f32.mrf.mxu0
    %4212 = vmatprep.mubr.f32.mxu0 0.0
    %4213 = vmatmul.mubr.f32.gmra.mxu0 %v4078
    %v4214 = vpop.f32.mrf.mxu0
    %v4215 = vadd.f32 0.0, %v4214
    %v4216 = vpop.f32.mrf.mxu0
    %4217 = vmatprep.mubr.f32.mxu0 0.0
    %4218 = vmatmul.mubr.f32.gmra.mxu0 %v4081
    %v4219 = vpop.f32.mrf.mxu0
    %v4220 = vadd.f32 0.0, %v4219
    %v4221 = vpop.f32.mrf.mxu0
    %4222 = vmatprep.mubr.f32.mxu0 0.0
    %4223 = vmatmul.mubr.f32.gmra.mxu0 %v4084
    %v4224 = vpop.f32.mrf.mxu0
    %v4225 = vadd.f32 0.0, %v4224
    %v4226 = vpop.f32.mrf.mxu0
    %4227 = vmatprep.mubr.f32.mxu0 0.0
    %4228 = vmatmul.mubr.f32.gmra.mxu0 %v4087
    %v4229 = vpop.f32.mrf.mxu0
    %v4230 = vadd.f32 0.0, %v4229
    %v4231 = vpop.f32.mrf.mxu0
    %4232 = vmatprep.mubr.f32.mxu0 0.0
    %4233 = vmatmul.mubr.f32.gmra.mxu0 %v4090
    %v4234 = vpop.f32.mrf.mxu0
    %v4235 = vadd.f32 0.0, %v4234
    %v4236 = vpop.f32.mrf.mxu0
    %4237 = vmatprep.mubr.f32.mxu0 0.0
    %4238 = vmatmul.mubr.f32.gmra.mxu0 %v4093
    %v4239 = vpop.f32.mrf.mxu0
    %v4240 = vadd.f32 0.0, %v4239
    %v4241 = vpop.f32.mrf.mxu0
    %4242 = vdwg.mxu0
    %v4244 = vsel %vm3457, %v3246, 0
    %v4247 = vsel %vm3457, %v3247, 0
    %v4250 = vsel %vm3457, %v3248, 0
    %v4253 = vsel %vm3457, %v3249, 0
    %v4256 = vsel %vm3457, %v3250, 0
    %v4259 = vsel %vm3457, %v3251, 0
    %v4262 = vsel %vm3457, %v3252, 0
    %v4265 = vsel %vm3457, %v3253, 0
    %v4268 = vsel %vm3457, %v3254, 0
    %v4271 = vsel %vm3457, %v3255, 0
    %v4274 = vsel %vm3457, %v3256, 0
    %v4277 = vsel %vm3457, %v3257, 0
    %v4280 = vsel %vm3457, %v3258, 0
    %v4283 = vsel %vm3457, %v3259, 0
    %v4286 = vsel %vm3457, %v3260, 0
    %v4289 = vsel %vm3457, %v3261, 0
    %v4292 = vsel %vm3506, %v3453, 0
    %4294 = vmatprep.subr.mxu0 0.0
    %4295 = vmatpush1.msra.mxu0 0.0
    %4296 = vmatprep.subr.mxu0 0.0
    %4297 = vmatpush1.msra.mxu0 0.0
    %4298 = vmatprep.subr.mxu0 0.0
    %4299 = vmatpush1.msra.mxu0 0.0
    %4300 = vmatprep.subr.mxu0 0.0
    %4301 = vmatpush1.msra.mxu0 0.0
    %4302 = vmatprep.subr.mxu0 0.0
    %4303 = vmatpush1.msra.mxu0 0.0
    %4304 = vmatprep.subr.mxu0 0.0
    %4305 = vmatpush1.msra.mxu0 0.0
    %4306 = vmatprep.subr.mxu0 0.0
    %4307 = vmatpush1.msra.mxu0 0.0
    %4308 = vmatprep.subr.mxu0 0.0
    %4309 = vmatpush1.msra.mxu0 0.0
    %4310 = vmatprep.subr.mxu0 0.0
    %4311 = vmatpush1.msra.mxu0 0.0
    %4312 = vmatprep.subr.mxu0 0.0
    %4313 = vmatpush1.msra.mxu0 0.0
    %4314 = vmatprep.subr.mxu0 0.0
    %4315 = vmatpush1.msra.mxu0 0.0
    %4316 = vmatprep.subr.mxu0 0.0
    %4317 = vmatpush1.msra.mxu0 0.0
    %4318 = vmatprep.subr.mxu0 0.0
    %4319 = vmatpush1.msra.mxu0 0.0
    %4320 = vmatprep.subr.mxu0 0.0
    %4321 = vmatpush1.msra.mxu0 0.0
    %4322 = vmatprep.subr.mxu0 0.0
    %4323 = vmatpush1.msra.mxu0 0.0
    %4324 = vmatprep.subr.mxu0 0.0
    %4325 = vmatpush1.msra.mxu0 %v4292
    %4326 = vmatprep.subr.mxu0 0.0
    %4327 = vmatpush2.msra.mxu0 0.0
    %4328 = vmatprep.subr.mxu0 0.0
    %4329 = vmatpush2.msra.mxu0 0.0
    %4330 = vmatprep.subr.mxu0 0.0
    %4331 = vmatpush2.msra.mxu0 0.0
    %4332 = vmatprep.subr.mxu0 0.0
    %4333 = vmatpush2.msra.mxu0 0.0
    %4334 = vmatprep.subr.mxu0 0.0
    %4335 = vmatpush2.msra.mxu0 0.0
    %4336 = vmatprep.subr.mxu0 0.0
    %4337 = vmatpush2.msra.mxu0 0.0
    %4338 = vmatprep.subr.mxu0 0.0
    %4339 = vmatpush2.msra.mxu0 0.0
    %4340 = vmatprep.subr.mxu0 0.0
    %4341 = vmatpush2.msra.mxu0 0.0
    %4342 = vmatprep.subr.mxu0 0.0
    %4343 = vmatpush2.msra.mxu0 0.0
    %4344 = vmatprep.subr.mxu0 0.0
    %4345 = vmatpush2.msra.mxu0 0.0
    %4346 = vmatprep.subr.mxu0 0.0
    %4347 = vmatpush2.msra.mxu0 0.0
    %4348 = vmatprep.subr.mxu0 0.0
    %4349 = vmatpush2.msra.mxu0 0.0
    %4350 = vmatprep.subr.mxu0 0.0
    %4351 = vmatpush2.msra.mxu0 0.0
    %4352 = vmatprep.subr.mxu0 0.0
    %4353 = vmatpush2.msra.mxu0 0.0
    %4354 = vmatprep.subr.mxu0 0.0
    %4355 = vmatpush2.msra.mxu0 0.0
    %4356 = vmatprep.subr.mxu0 0.0
    %4357 = vmatpush2.msra.mxu0 0.0
    %4358 = vmatprep.mubr.f32.mxu0 0.0
    %4359 = vmatmul.mubr.f32.gmra.mxu0 %v4244
    %v4360 = vpop.f32.mrf.mxu0
    %v4361 = vadd.f32 0.0, %v4360
    %v4362 = vpop.f32.mrf.mxu0
    %4363 = vmatprep.mubr.f32.mxu0 0.0
    %4364 = vmatmul.mubr.f32.gmra.mxu0 %v4247
    %v4365 = vpop.f32.mrf.mxu0
    %v4366 = vadd.f32 0.0, %v4365
    %v4367 = vpop.f32.mrf.mxu0
    %4368 = vmatprep.mubr.f32.mxu0 0.0
    %4369 = vmatmul.mubr.f32.gmra.mxu0 %v4250
    %v4370 = vpop.f32.mrf.mxu0
    %v4371 = vadd.f32 0.0, %v4370
    %v4372 = vpop.f32.mrf.mxu0
    %4373 = vmatprep.mubr.f32.mxu0 0.0
    %4374 = vmatmul.mubr.f32.gmra.mxu0 %v4253
    %v4375 = vpop.f32.mrf.mxu0
    %v4376 = vadd.f32 0.0, %v4375
    %v4377 = vpop.f32.mrf.mxu0
    %4378 = vmatprep.mubr.f32.mxu0 0.0
    %4379 = vmatmul.mubr.f32.gmra.mxu0 %v4256
    %v4380 = vpop.f32.mrf.mxu0
    %v4381 = vadd.f32 0.0, %v4380
    %v4382 = vpop.f32.mrf.mxu0
    %4383 = vmatprep.mubr.f32.mxu0 0.0
    %4384 = vmatmul.mubr.f32.gmra.mxu0 %v4259
    %v4385 = vpop.f32.mrf.mxu0
    %v4386 = vadd.f32 0.0, %v4385
    %v4387 = vpop.f32.mrf.mxu0
    %4388 = vmatprep.mubr.f32.mxu0 0.0
    %4389 = vmatmul.mubr.f32.gmra.mxu0 %v4262
    %v4390 = vpop.f32.mrf.mxu0
    %v4391 = vadd.f32 0.0, %v4390
    %v4392 = vpop.f32.mrf.mxu0
    %4393 = vmatprep.mubr.f32.mxu0 0.0
    %4394 = vmatmul.mubr.f32.gmra.mxu0 %v4265
    %v4395 = vpop.f32.mrf.mxu0
    %v4396 = vadd.f32 0.0, %v4395
    %v4397 = vpop.f32.mrf.mxu0
    %4398 = vmatprep.mubr.f32.mxu0 0.0
    %4399 = vmatmul.mubr.f32.gmra.mxu0 %v4268
    %v4400 = vpop.f32.mrf.mxu0
    %v4401 = vadd.f32 0.0, %v4400
    %v4402 = vpop.f32.mrf.mxu0
    %4403 = vmatprep.mubr.f32.mxu0 0.0
    %4404 = vmatmul.mubr.f32.gmra.mxu0 %v4271
    %v4405 = vpop.f32.mrf.mxu0
    %v4406 = vadd.f32 0.0, %v4405
    %v4407 = vpop.f32.mrf.mxu0
    %4408 = vmatprep.mubr.f32.mxu0 0.0
    %4409 = vmatmul.mubr.f32.gmra.mxu0 %v4274
    %v4410 = vpop.f32.mrf.mxu0
    %v4411 = vadd.f32 0.0, %v4410
    %v4412 = vpop.f32.mrf.mxu0
    %4413 = vmatprep.mubr.f32.mxu0 0.0
    %4414 = vmatmul.mubr.f32.gmra.mxu0 %v4277
    %v4415 = vpop.f32.mrf.mxu0
    %v4416 = vadd.f32 0.0, %v4415
    %v4417 = vpop.f32.mrf.mxu0
    %4418 = vmatprep.mubr.f32.mxu0 0.0
    %4419 = vmatmul.mubr.f32.gmra.mxu0 %v4280
    %v4420 = vpop.f32.mrf.mxu0
    %v4421 = vadd.f32 0.0, %v4420
    %v4422 = vpop.f32.mrf.mxu0
    %4423 = vmatprep.mubr.f32.mxu0 0.0
    %4424 = vmatmul.mubr.f32.gmra.mxu0 %v4283
    %v4425 = vpop.f32.mrf.mxu0
    %v4426 = vadd.f32 0.0, %v4425
    %v4427 = vpop.f32.mrf.mxu0
    %4428 = vmatprep.mubr.f32.mxu0 0.0
    %4429 = vmatmul.mubr.f32.gmra.mxu0 %v4286
    %v4430 = vpop.f32.mrf.mxu0
    %v4431 = vadd.f32 0.0, %v4430
    %v4432 = vpop.f32.mrf.mxu0
    %4433 = vmatprep.mubr.f32.mxu0 0.0
    %4434 = vmatmul.mubr.f32.gmra.mxu0 %v4289
    %v4435 = vpop.f32.mrf.mxu0
    %v4436 = vadd.f32 0.0, %v4435
    %v4437 = vpop.f32.mrf.mxu0
    %4438 = vdwg.mxu0
    %v4440 = vsel %vm3457, %v3262, 0
    %v4443 = vsel %vm3457, %v3263, 0
    %v4446 = vsel %vm3457, %v3264, 0
    %v4449 = vsel %vm3457, %v3265, 0
    %v4452 = vsel %vm3457, %v3266, 0
    %v4455 = vsel %vm3457, %v3267, 0
    %v4458 = vsel %vm3457, %v3268, 0
    %v4461 = vsel %vm3457, %v3269, 0
    %v4464 = vsel %vm3457, %v3270, 0
    %v4467 = vsel %vm3457, %v3271, 0
    %v4470 = vsel %vm3457, %v3272, 0
    %v4473 = vsel %vm3457, %v3273, 0
    %v4476 = vsel %vm3457, %v3274, 0
    %v4479 = vsel %vm3457, %v3275, 0
    %v4482 = vsel %vm3457, %v3276, 0
    %v4485 = vsel %vm3457, %v3277, 0
    %v4488 = vsel %vm3506, %v3454, 0
    %4490 = vmatprep.subr.mxu0 0.0
    %4491 = vmatpush1.msra.mxu0 0.0
    %4492 = vmatprep.subr.mxu0 0.0
    %4493 = vmatpush1.msra.mxu0 0.0
    %4494 = vmatprep.subr.mxu0 0.0
    %4495 = vmatpush1.msra.mxu0 0.0
    %4496 = vmatprep.subr.mxu0 0.0
    %4497 = vmatpush1.msra.mxu0 0.0
    %4498 = vmatprep.subr.mxu0 0.0
    %4499 = vmatpush1.msra.mxu0 0.0
    %4500 = vmatprep.subr.mxu0 0.0
    %4501 = vmatpush1.msra.mxu0 0.0
    %4502 = vmatprep.subr.mxu0 0.0
    %4503 = vmatpush1.msra.mxu0 0.0
    %4504 = vmatprep.subr.mxu0 0.0
    %4505 = vmatpush1.msra.mxu0 0.0
    %4506 = vmatprep.subr.mxu0 0.0
    %4507 = vmatpush1.msra.mxu0 0.0
    %4508 = vmatprep.subr.mxu0 0.0
    %4509 = vmatpush1.msra.mxu0 0.0
    %4510 = vmatprep.subr.mxu0 0.0
    %4511 = vmatpush1.msra.mxu0 0.0
    %4512 = vmatprep.subr.mxu0 0.0
    %4513 = vmatpush1.msra.mxu0 0.0
    %4514 = vmatprep.subr.mxu0 0.0
    %4515 = vmatpush1.msra.mxu0 0.0
    %4516 = vmatprep.subr.mxu0 0.0
    %4517 = vmatpush1.msra.mxu0 0.0
    %4518 = vmatprep.subr.mxu0 0.0
    %4519 = vmatpush1.msra.mxu0 0.0
    %4520 = vmatprep.subr.mxu0 0.0
    %4521 = vmatpush1.msra.mxu0 %v4488
    %4522 = vmatprep.subr.mxu0 0.0
    %4523 = vmatpush2.msra.mxu0 0.0
    %4524 = vmatprep.subr.mxu0 0.0
    %4525 = vmatpush2.msra.mxu0 0.0
    %4526 = vmatprep.subr.mxu0 0.0
    %4527 = vmatpush2.msra.mxu0 0.0
    %4528 = vmatprep.subr.mxu0 0.0
    %4529 = vmatpush2.msra.mxu0 0.0
    %4530 = vmatprep.subr.mxu0 0.0
    %4531 = vmatpush2.msra.mxu0 0.0
    %4532 = vmatprep.subr.mxu0 0.0
    %4533 = vmatpush2.msra.mxu0 0.0
    %4534 = vmatprep.subr.mxu0 0.0
    %4535 = vmatpush2.msra.mxu0 0.0
    %4536 = vmatprep.subr.mxu0 0.0
    %4537 = vmatpush2.msra.mxu0 0.0
    %4538 = vmatprep.subr.mxu0 0.0
    %4539 = vmatpush2.msra.mxu0 0.0
    %4540 = vmatprep.subr.mxu0 0.0
    %4541 = vmatpush2.msra.mxu0 0.0
    %4542 = vmatprep.subr.mxu0 0.0
    %4543 = vmatpush2.msra.mxu0 0.0
    %4544 = vmatprep.subr.mxu0 0.0
    %4545 = vmatpush2.msra.mxu0 0.0
    %4546 = vmatprep.subr.mxu0 0.0
    %4547 = vmatpush2.msra.mxu0 0.0
    %4548 = vmatprep.subr.mxu0 0.0
    %4549 = vmatpush2.msra.mxu0 0.0
    %4550 = vmatprep.subr.mxu0 0.0
    %4551 = vmatpush2.msra.mxu0 0.0
    %4552 = vmatprep.subr.mxu0 0.0
    %4553 = vmatpush2.msra.mxu0 0.0
    %4554 = vmatprep.mubr.f32.mxu0 0.0
    %4555 = vmatmul.mubr.f32.gmra.mxu0 %v4440
    %v4556 = vpop.f32.mrf.mxu0
    %v4557 = vadd.f32 0.0, %v4556
    %v4558 = vpop.f32.mrf.mxu0
    %4559 = vmatprep.mubr.f32.mxu0 0.0
    %4560 = vmatmul.mubr.f32.gmra.mxu0 %v4443
    %v4561 = vpop.f32.mrf.mxu0
    %v4562 = vadd.f32 0.0, %v4561
    %v4563 = vpop.f32.mrf.mxu0
    %4564 = vmatprep.mubr.f32.mxu0 0.0
    %4565 = vmatmul.mubr.f32.gmra.mxu0 %v4446
    %v4566 = vpop.f32.mrf.mxu0
    %v4567 = vadd.f32 0.0, %v4566
    %v4568 = vpop.f32.mrf.mxu0
    %4569 = vmatprep.mubr.f32.mxu0 0.0
    %4570 = vmatmul.mubr.f32.gmra.mxu0 %v4449
    %v4571 = vpop.f32.mrf.mxu0
    %v4572 = vadd.f32 0.0, %v4571
    %v4573 = vpop.f32.mrf.mxu0
    %4574 = vmatprep.mubr.f32.mxu0 0.0
    %4575 = vmatmul.mubr.f32.gmra.mxu0 %v4452
    %v4576 = vpop.f32.mrf.mxu0
    %v4577 = vadd.f32 0.0, %v4576
    %v4578 = vpop.f32.mrf.mxu0
    %4579 = vmatprep.mubr.f32.mxu0 0.0
    %4580 = vmatmul.mubr.f32.gmra.mxu0 %v4455
    %v4581 = vpop.f32.mrf.mxu0
    %v4582 = vadd.f32 0.0, %v4581
    %v4583 = vpop.f32.mrf.mxu0
    %4584 = vmatprep.mubr.f32.mxu0 0.0
    %4585 = vmatmul.mubr.f32.gmra.mxu0 %v4458
    %v4586 = vpop.f32.mrf.mxu0
    %v4587 = vadd.f32 0.0, %v4586
    %v4588 = vpop.f32.mrf.mxu0
    %4589 = vmatprep.mubr.f32.mxu0 0.0
    %4590 = vmatmul.mubr.f32.gmra.mxu0 %v4461
    %v4591 = vpop.f32.mrf.mxu0
    %v4592 = vadd.f32 0.0, %v4591
    %v4593 = vpop.f32.mrf.mxu0
    %4594 = vmatprep.mubr.f32.mxu0 0.0
    %4595 = vmatmul.mubr.f32.gmra.mxu0 %v4464
    %v4596 = vpop.f32.mrf.mxu0
    %v4597 = vadd.f32 0.0, %v4596
    %v4598 = vpop.f32.mrf.mxu0
    %4599 = vmatprep.mubr.f32.mxu0 0.0
    %4600 = vmatmul.mubr.f32.gmra.mxu0 %v4467
    %v4601 = vpop.f32.mrf.mxu0
    %v4602 = vadd.f32 0.0, %v4601
    %v4603 = vpop.f32.mrf.mxu0
    %4604 = vmatprep.mubr.f32.mxu0 0.0
    %4605 = vmatmul.mubr.f32.gmra.mxu0 %v4470
    %v4606 = vpop.f32.mrf.mxu0
    %v4607 = vadd.f32 0.0, %v4606
    %v4608 = vpop.f32.mrf.mxu0
    %4609 = vmatprep.mubr.f32.mxu0 0.0
    %4610 = vmatmul.mubr.f32.gmra.mxu0 %v4473
    %v4611 = vpop.f32.mrf.mxu0
    %v4612 = vadd.f32 0.0, %v4611
    %v4613 = vpop.f32.mrf.mxu0
    %4614 = vmatprep.mubr.f32.mxu0 0.0
    %4615 = vmatmul.mubr.f32.gmra.mxu0 %v4476
    %v4616 = vpop.f32.mrf.mxu0
    %v4617 = vadd.f32 0.0, %v4616
    %v4618 = vpop.f32.mrf.mxu0
    %4619 = vmatprep.mubr.f32.mxu0 0.0
    %4620 = vmatmul.mubr.f32.gmra.mxu0 %v4479
    %v4621 = vpop.f32.mrf.mxu0
    %v4622 = vadd.f32 0.0, %v4621
    %v4623 = vpop.f32.mrf.mxu0
    %4624 = vmatprep.mubr.f32.mxu0 0.0
    %4625 = vmatmul.mubr.f32.gmra.mxu0 %v4482
    %v4626 = vpop.f32.mrf.mxu0
    %v4627 = vadd.f32 0.0, %v4626
    %v4628 = vpop.f32.mrf.mxu0
    %4629 = vmatprep.mubr.f32.mxu0 0.0
    %4630 = vmatmul.mubr.f32.gmra.mxu0 %v4485
    %v4631 = vpop.f32.mrf.mxu0
    %v4632 = vadd.f32 0.0, %v4631
    %v4633 = vpop.f32.mrf.mxu0
    %4634 = vdwg.mxu0
    %v4636 = vsel %vm3457, %v3278, 0
    %v4639 = vsel %vm3457, %v3279, 0
    %v4642 = vsel %vm3457, %v3280, 0
    %v4645 = vsel %vm3457, %v3281, 0
    %v4648 = vsel %vm3457, %v3282, 0
    %v4651 = vsel %vm3457, %v3283, 0
    %v4654 = vsel %vm3457, %v3284, 0
    %v4657 = vsel %vm3457, %v3285, 0
    %v4660 = vsel %vm3457, %v3286, 0
    %v4663 = vsel %vm3457, %v3287, 0
    %v4666 = vsel %vm3457, %v3288, 0
    %v4669 = vsel %vm3457, %v3289, 0
    %v4672 = vsel %vm3457, %v3290, 0
    %v4675 = vsel %vm3457, %v3291, 0
    %v4678 = vsel %vm3457, %v3292, 0
    %v4681 = vsel %vm3457, %v3293, 0
    %v4684 = vsel %vm3506, %v3455, 0
    %4686 = vmatprep.subr.mxu0 0.0
    %4687 = vmatpush1.msra.mxu0 0.0
    %4688 = vmatprep.subr.mxu0 0.0
    %4689 = vmatpush1.msra.mxu0 0.0
    %4690 = vmatprep.subr.mxu0 0.0
    %4691 = vmatpush1.msra.mxu0 0.0
    %4692 = vmatprep.subr.mxu0 0.0
    %4693 = vmatpush1.msra.mxu0 0.0
    %4694 = vmatprep.subr.mxu0 0.0
    %4695 = vmatpush1.msra.mxu0 0.0
    %4696 = vmatprep.subr.mxu0 0.0
    %4697 = vmatpush1.msra.mxu0 0.0
    %4698 = vmatprep.subr.mxu0 0.0
    %4699 = vmatpush1.msra.mxu0 0.0
    %4700 = vmatprep.subr.mxu0 0.0
    %4701 = vmatpush1.msra.mxu0 0.0
    %4702 = vmatprep.subr.mxu0 0.0
    %4703 = vmatpush1.msra.mxu0 0.0
    %4704 = vmatprep.subr.mxu0 0.0
    %4705 = vmatpush1.msra.mxu0 0.0
    %4706 = vmatprep.subr.mxu0 0.0
    %4707 = vmatpush1.msra.mxu0 0.0
    %4708 = vmatprep.subr.mxu0 0.0
    %4709 = vmatpush1.msra.mxu0 0.0
    %4710 = vmatprep.subr.mxu0 0.0
    %4711 = vmatpush1.msra.mxu0 0.0
    %4712 = vmatprep.subr.mxu0 0.0
    %4713 = vmatpush1.msra.mxu0 0.0
    %4714 = vmatprep.subr.mxu0 0.0
    %4715 = vmatpush1.msra.mxu0 0.0
    %4716 = vmatprep.subr.mxu0 0.0
    %4717 = vmatpush1.msra.mxu0 %v4684
    %4718 = vmatprep.subr.mxu0 0.0
    %4719 = vmatpush2.msra.mxu0 0.0
    %4720 = vmatprep.subr.mxu0 0.0
    %4721 = vmatpush2.msra.mxu0 0.0
    %4722 = vmatprep.subr.mxu0 0.0
    %4723 = vmatpush2.msra.mxu0 0.0
    %4724 = vmatprep.subr.mxu0 0.0
    %4725 = vmatpush2.msra.mxu0 0.0
    %4726 = vmatprep.subr.mxu0 0.0
    %4727 = vmatpush2.msra.mxu0 0.0
    %4728 = vmatprep.subr.mxu0 0.0
    %4729 = vmatpush2.msra.mxu0 0.0
    %4730 = vmatprep.subr.mxu0 0.0
    %4731 = vmatpush2.msra.mxu0 0.0
    %4732 = vmatprep.subr.mxu0 0.0
    %4733 = vmatpush2.msra.mxu0 0.0
    %4734 = vmatprep.subr.mxu0 0.0
    %4735 = vmatpush2.msra.mxu0 0.0
    %4736 = vmatprep.subr.mxu0 0.0
    %4737 = vmatpush2.msra.mxu0 0.0
    %4738 = vmatprep.subr.mxu0 0.0
    %4739 = vmatpush2.msra.mxu0 0.0
    %4740 = vmatprep.subr.mxu0 0.0
    %4741 = vmatpush2.msra.mxu0 0.0
    %4742 = vmatprep.subr.mxu0 0.0
    %4743 = vmatpush2.msra.mxu0 0.0
    %4744 = vmatprep.subr.mxu0 0.0
    %4745 = vmatpush2.msra.mxu0 0.0
    %4746 = vmatprep.subr.mxu0 0.0
    %4747 = vmatpush2.msra.mxu0 0.0
    %4748 = vmatprep.subr.mxu0 0.0
    %4749 = vmatpush2.msra.mxu0 0.0
    %4750 = vmatprep.mubr.f32.mxu0 0.0
    %4751 = vmatmul.mubr.f32.gmra.mxu0 %v4636
    %v4752 = vpop.f32.mrf.mxu0
    %v4753 = vadd.f32 0.0, %v4752
    %v4754 = vpop.f32.mrf.mxu0
    %4755 = vmatprep.mubr.f32.mxu0 0.0
    %4756 = vmatmul.mubr.f32.gmra.mxu0 %v4639
    %v4757 = vpop.f32.mrf.mxu0
    %v4758 = vadd.f32 0.0, %v4757
    %v4759 = vpop.f32.mrf.mxu0
    %4760 = vmatprep.mubr.f32.mxu0 0.0
    %4761 = vmatmul.mubr.f32.gmra.mxu0 %v4642
    %v4762 = vpop.f32.mrf.mxu0
    %v4763 = vadd.f32 0.0, %v4762
    %v4764 = vpop.f32.mrf.mxu0
    %4765 = vmatprep.mubr.f32.mxu0 0.0
    %4766 = vmatmul.mubr.f32.gmra.mxu0 %v4645
    %v4767 = vpop.f32.mrf.mxu0
    %v4768 = vadd.f32 0.0, %v4767
    %v4769 = vpop.f32.mrf.mxu0
    %4770 = vmatprep.mubr.f32.mxu0 0.0
    %4771 = vmatmul.mubr.f32.gmra.mxu0 %v4648
    %v4772 = vpop.f32.mrf.mxu0
    %v4773 = vadd.f32 0.0, %v4772
    %v4774 = vpop.f32.mrf.mxu0
    %4775 = vmatprep.mubr.f32.mxu0 0.0
    %4776 = vmatmul.mubr.f32.gmra.mxu0 %v4651
    %v4777 = vpop.f32.mrf.mxu0
    %v4778 = vadd.f32 0.0, %v4777
    %v4779 = vpop.f32.mrf.mxu0
    %4780 = vmatprep.mubr.f32.mxu0 0.0
    %4781 = vmatmul.mubr.f32.gmra.mxu0 %v4654
    %v4782 = vpop.f32.mrf.mxu0
    %v4783 = vadd.f32 0.0, %v4782
    %v4784 = vpop.f32.mrf.mxu0
    %4785 = vmatprep.mubr.f32.mxu0 0.0
    %4786 = vmatmul.mubr.f32.gmra.mxu0 %v4657
    %v4787 = vpop.f32.mrf.mxu0
    %v4788 = vadd.f32 0.0, %v4787
    %v4789 = vpop.f32.mrf.mxu0
    %4790 = vmatprep.mubr.f32.mxu0 0.0
    %4791 = vmatmul.mubr.f32.gmra.mxu0 %v4660
    %v4792 = vpop.f32.mrf.mxu0
    %v4793 = vadd.f32 0.0, %v4792
    %v4794 = vpop.f32.mrf.mxu0
    %4795 = vmatprep.mubr.f32.mxu0 0.0
    %4796 = vmatmul.mubr.f32.gmra.mxu0 %v4663
    %v4797 = vpop.f32.mrf.mxu0
    %v4798 = vadd.f32 0.0, %v4797
    %v4799 = vpop.f32.mrf.mxu0
    %4800 = vmatprep.mubr.f32.mxu0 0.0
    %4801 = vmatmul.mubr.f32.gmra.mxu0 %v4666
    %v4802 = vpop.f32.mrf.mxu0
    %v4803 = vadd.f32 0.0, %v4802
    %v4804 = vpop.f32.mrf.mxu0
    %4805 = vmatprep.mubr.f32.mxu0 0.0
    %4806 = vmatmul.mubr.f32.gmra.mxu0 %v4669
    %v4807 = vpop.f32.mrf.mxu0
    %v4808 = vadd.f32 0.0, %v4807
    %v4809 = vpop.f32.mrf.mxu0
    %4810 = vmatprep.mubr.f32.mxu0 0.0
    %4811 = vmatmul.mubr.f32.gmra.mxu0 %v4672
    %v4812 = vpop.f32.mrf.mxu0
    %v4813 = vadd.f32 0.0, %v4812
    %v4814 = vpop.f32.mrf.mxu0
    %4815 = vmatprep.mubr.f32.mxu0 0.0
    %4816 = vmatmul.mubr.f32.gmra.mxu0 %v4675
    %v4817 = vpop.f32.mrf.mxu0
    %v4818 = vadd.f32 0.0, %v4817
    %v4819 = vpop.f32.mrf.mxu0
    %4820 = vmatprep.mubr.f32.mxu0 0.0
    %4821 = vmatmul.mubr.f32.gmra.mxu0 %v4678
    %v4822 = vpop.f32.mrf.mxu0
    %v4823 = vadd.f32 0.0, %v4822
    %v4824 = vpop.f32.mrf.mxu0
    %4825 = vmatprep.mubr.f32.mxu0 0.0
    %4826 = vmatmul.mubr.f32.gmra.mxu0 %v4681
    %v4827 = vpop.f32.mrf.mxu0
    %v4828 = vadd.f32 0.0, %v4827
    %v4829 = vpop.f32.mrf.mxu0
    %4830 = vdwg.mxu0
    %v4832 = vsel %vm3457, %v3294, 0
    %v4835 = vsel %vm3457, %v3295, 0
    %v4838 = vsel %vm3457, %v3296, 0
    %v4841 = vsel %vm3457, %v3297, 0
    %v4844 = vsel %vm3457, %v3298, 0
    %v4847 = vsel %vm3457, %v3299, 0
    %v4850 = vsel %vm3457, %v3300, 0
    %v4853 = vsel %vm3457, %v3301, 0
    %v4856 = vsel %vm3457, %v3302, 0
    %v4859 = vsel %vm3457, %v3303, 0
    %v4862 = vsel %vm3457, %v3304, 0
    %v4865 = vsel %vm3457, %v3305, 0
    %v4868 = vsel %vm3457, %v3306, 0
    %v4871 = vsel %vm3457, %v3307, 0
    %v4874 = vsel %vm3457, %v3308, 0
    %v4877 = vsel %vm3457, %v3309, 0
    %v4880 = vsel %vm3506, %v3456, 0
    %4882 = vmatprep.subr.mxu0 0.0
    %4883 = vmatpush1.msra.mxu0 0.0
    %4884 = vmatprep.subr.mxu0 0.0
    %4885 = vmatpush1.msra.mxu0 0.0
    %4886 = vmatprep.subr.mxu0 0.0
    %4887 = vmatpush1.msra.mxu0 0.0
    %4888 = vmatprep.subr.mxu0 0.0
    %4889 = vmatpush1.msra.mxu0 0.0
    %4890 = vmatprep.subr.mxu0 0.0
    %4891 = vmatpush1.msra.mxu0 0.0
    %4892 = vmatprep.subr.mxu0 0.0
    %4893 = vmatpush1.msra.mxu0 0.0
    %4894 = vmatprep.subr.mxu0 0.0
    %4895 = vmatpush1.msra.mxu0 0.0
    %4896 = vmatprep.subr.mxu0 0.0
    %4897 = vmatpush1.msra.mxu0 0.0
    %4898 = vmatprep.subr.mxu0 0.0
    %4899 = vmatpush1.msra.mxu0 0.0
    %4900 = vmatprep.subr.mxu0 0.0
    %4901 = vmatpush1.msra.mxu0 0.0
    %4902 = vmatprep.subr.mxu0 0.0
    %4903 = vmatpush1.msra.mxu0 0.0
    %4904 = vmatprep.subr.mxu0 0.0
    %4905 = vmatpush1.msra.mxu0 0.0
    %4906 = vmatprep.subr.mxu0 0.0
    %4907 = vmatpush1.msra.mxu0 0.0
    %4908 = vmatprep.subr.mxu0 0.0
    %4909 = vmatpush1.msra.mxu0 0.0
    %4910 = vmatprep.subr.mxu0 0.0
    %4911 = vmatpush1.msra.mxu0 0.0
    %4912 = vmatprep.subr.mxu0 0.0
    %4913 = vmatpush1.msra.mxu0 %v4880
    %4914 = vmatprep.subr.mxu0 0.0
    %4915 = vmatpush2.msra.mxu0 0.0
    %4916 = vmatprep.subr.mxu0 0.0
    %4917 = vmatpush2.msra.mxu0 0.0
    %4918 = vmatprep.subr.mxu0 0.0
    %4919 = vmatpush2.msra.mxu0 0.0
    %4920 = vmatprep.subr.mxu0 0.0
    %4921 = vmatpush2.msra.mxu0 0.0
    %4922 = vmatprep.subr.mxu0 0.0
    %4923 = vmatpush2.msra.mxu0 0.0
    %4924 = vmatprep.subr.mxu0 0.0
    %4925 = vmatpush2.msra.mxu0 0.0
    %4926 = vmatprep.subr.mxu0 0.0
    %4927 = vmatpush2.msra.mxu0 0.0
    %4928 = vmatprep.subr.mxu0 0.0
    %4929 = vmatpush2.msra.mxu0 0.0
    %4930 = vmatprep.subr.mxu0 0.0
    %4931 = vmatpush2.msra.mxu0 0.0
    %4932 = vmatprep.subr.mxu0 0.0
    %4933 = vmatpush2.msra.mxu0 0.0
    %4934 = vmatprep.subr.mxu0 0.0
    %4935 = vmatpush2.msra.mxu0 0.0
    %4936 = vmatprep.subr.mxu0 0.0
    %4937 = vmatpush2.msra.mxu0 0.0
    %4938 = vmatprep.subr.mxu0 0.0
    %4939 = vmatpush2.msra.mxu0 0.0
    %4940 = vmatprep.subr.mxu0 0.0
    %4941 = vmatpush2.msra.mxu0 0.0
    %4942 = vmatprep.subr.mxu0 0.0
    %4943 = vmatpush2.msra.mxu0 0.0
    %4944 = vmatprep.subr.mxu0 0.0
    %4945 = vmatpush2.msra.mxu0 0.0
    %4946 = vmatprep.mubr.f32.mxu0 0.0
    %4947 = vmatmul.mubr.f32.gmra.mxu0 %v4832
    %v4948 = vpop.f32.mrf.mxu0
    %v4949 = vadd.f32 0.0, %v4948
    %v4950 = vpop.f32.mrf.mxu0
    %4951 = vmatprep.mubr.f32.mxu0 0.0
    %4952 = vmatmul.mubr.f32.gmra.mxu0 %v4835
    %v4953 = vpop.f32.mrf.mxu0
    %v4954 = vadd.f32 0.0, %v4953
    %v4955 = vpop.f32.mrf.mxu0
    %4956 = vmatprep.mubr.f32.mxu0 0.0
    %4957 = vmatmul.mubr.f32.gmra.mxu0 %v4838
    %v4958 = vpop.f32.mrf.mxu0
    %v4959 = vadd.f32 0.0, %v4958
    %v4960 = vpop.f32.mrf.mxu0
    %4961 = vmatprep.mubr.f32.mxu0 0.0
    %4962 = vmatmul.mubr.f32.gmra.mxu0 %v4841
    %v4963 = vpop.f32.mrf.mxu0
    %v4964 = vadd.f32 0.0, %v4963
    %v4965 = vpop.f32.mrf.mxu0
    %4966 = vmatprep.mubr.f32.mxu0 0.0
    %4967 = vmatmul.mubr.f32.gmra.mxu0 %v4844
    %v4968 = vpop.f32.mrf.mxu0
    %v4969 = vadd.f32 0.0, %v4968
    %v4970 = vpop.f32.mrf.mxu0
    %4971 = vmatprep.mubr.f32.mxu0 0.0
    %4972 = vmatmul.mubr.f32.gmra.mxu0 %v4847
    %v4973 = vpop.f32.mrf.mxu0
    %v4974 = vadd.f32 0.0, %v4973
    %v4975 = vpop.f32.mrf.mxu0
    %4976 = vmatprep.mubr.f32.mxu0 0.0
    %4977 = vmatmul.mubr.f32.gmra.mxu0 %v4850
    %v4978 = vpop.f32.mrf.mxu0
    %v4979 = vadd.f32 0.0, %v4978
    %v4980 = vpop.f32.mrf.mxu0
    %4981 = vmatprep.mubr.f32.mxu0 0.0
    %4982 = vmatmul.mubr.f32.gmra.mxu0 %v4853
    %v4983 = vpop.f32.mrf.mxu0
    %v4984 = vadd.f32 0.0, %v4983
    %v4985 = vpop.f32.mrf.mxu0
    %4986 = vmatprep.mubr.f32.mxu0 0.0
    %4987 = vmatmul.mubr.f32.gmra.mxu0 %v4856
    %v4988 = vpop.f32.mrf.mxu0
    %v4989 = vadd.f32 0.0, %v4988
    %v4990 = vpop.f32.mrf.mxu0
    %4991 = vmatprep.mubr.f32.mxu0 0.0
    %4992 = vmatmul.mubr.f32.gmra.mxu0 %v4859
    %v4993 = vpop.f32.mrf.mxu0
    %v4994 = vadd.f32 0.0, %v4993
    %v4995 = vpop.f32.mrf.mxu0
    %4996 = vmatprep.mubr.f32.mxu0 0.0
    %4997 = vmatmul.mubr.f32.gmra.mxu0 %v4862
    %v4998 = vpop.f32.mrf.mxu0
    %v4999 = vadd.f32 0.0, %v4998
    %v5000 = vpop.f32.mrf.mxu0
    %5001 = vmatprep.mubr.f32.mxu0 0.0
    %5002 = vmatmul.mubr.f32.gmra.mxu0 %v4865
    %v5003 = vpop.f32.mrf.mxu0
    %v5004 = vadd.f32 0.0, %v5003
    %v5005 = vpop.f32.mrf.mxu0
    %5006 = vmatprep.mubr.f32.mxu0 0.0
    %5007 = vmatmul.mubr.f32.gmra.mxu0 %v4868
    %v5008 = vpop.f32.mrf.mxu0
    %v5009 = vadd.f32 0.0, %v5008
    %v5010 = vpop.f32.mrf.mxu0
    %5011 = vmatprep.mubr.f32.mxu0 0.0
    %5012 = vmatmul.mubr.f32.gmra.mxu0 %v4871
    %v5013 = vpop.f32.mrf.mxu0
    %v5014 = vadd.f32 0.0, %v5013
    %v5015 = vpop.f32.mrf.mxu0
    %5016 = vmatprep.mubr.f32.mxu0 0.0
    %5017 = vmatmul.mubr.f32.gmra.mxu0 %v4874
    %v5018 = vpop.f32.mrf.mxu0
    %v5019 = vadd.f32 0.0, %v5018
    %v5020 = vpop.f32.mrf.mxu0
    %5021 = vmatprep.mubr.f32.mxu0 0.0
    %5022 = vmatmul.mubr.f32.gmra.mxu0 %v4877
    %v5023 = vpop.f32.mrf.mxu0
    %v5024 = vadd.f32 0.0, %v5023
    %v5025 = vpop.f32.mrf.mxu0
    %5026 = vdwg.mxu0
    %5027 = vst [vmem:[%s4] sm:$0xff] %v3577
    %5028 = vst [vmem:[%s4 + $0x8] sm:$0xff] %v3582
    %5029 = vst [vmem:[%s4 + $0x10] sm:$0xff] %v3587
    %5030 = vst [vmem:[%s4 + $0x18] sm:$0xff] %v3592
    %5031 = vst [vmem:[%s4 + $0x20] sm:$0xff] %v3597
    %5032 = vst [vmem:[%s4 + $0x28] sm:$0xff] %v3602
    %5033 = vst [vmem:[%s4 + $0x30] sm:$0xff] %v3607
    %5034 = vst [vmem:[%s4 + $0x38] sm:$0xff] %v3612
    %5035 = vst [vmem:[%s4 + $0x40] sm:$0xff] %v3617
    %5036 = vst [vmem:[%s4 + $0x48] sm:$0xff] %v3622
    %5037 = vst [vmem:[%s4 + $0x50] sm:$0xff] %v3627
    %5038 = vst [vmem:[%s4 + $0x58] sm:$0xff] %v3632
    %5039 = vst [vmem:[%s4 + $0x60] sm:$0xff] %v3637
    %5040 = vst [vmem:[%s4 + $0x68] sm:$0xff] %v3642
    %5041 = vst [vmem:[%s4 + $0x70] sm:$0xff] %v3647
    %5042 = vst [vmem:[%s4 + $0x78] sm:$0xff] %v3652
    %5043 = vst [vmem:[%s4 + $0x80] sm:$0xff] %v3773
    %5044 = vst [vmem:[%s4 + $0x88] sm:$0xff] %v3778
    %5045 = vst [vmem:[%s4 + $0x90] sm:$0xff] %v3783
    %5046 = vst [vmem:[%s4 + $0x98] sm:$0xff] %v3788
    %5047 = vst [vmem:[%s4 + $0xa0] sm:$0xff] %v3793
    %5048 = vst [vmem:[%s4 + $0xa8] sm:$0xff] %v3798
    %5049 = vst [vmem:[%s4 + $0xb0] sm:$0xff] %v3803
    %5050 = vst [vmem:[%s4 + $0xb8] sm:$0xff] %v3808
    %5051 = vst [vmem:[%s4 + $0xc0] sm:$0xff] %v3813
    %5052 = vst [vmem:[%s4 + $0xc8] sm:$0xff] %v3818
    %5053 = vst [vmem:[%s4 + $0xd0] sm:$0xff] %v3823
    %5054 = vst [vmem:[%s4 + $0xd8] sm:$0xff] %v3828
    %5055 = vst [vmem:[%s4 + $0xe0] sm:$0xff] %v3833
    %5056 = vst [vmem:[%s4 + $0xe8] sm:$0xff] %v3838
    %5057 = vst [vmem:[%s4 + $0xf0] sm:$0xff] %v3843
    %5058 = vst [vmem:[%s4 + $0xf8] sm:$0xff] %v3848
    %5059 = vst [vmem:[%s4 + $0x100] sm:$0xff] %v3969
    %5060 = vst [vmem:[%s4 + $0x108] sm:$0xff] %v3974
    %5061 = vst [vmem:[%s4 + $0x110] sm:$0xff] %v3979
    %5062 = vst [vmem:[%s4 + $0x118] sm:$0xff] %v3984
    %5063 = vst [vmem:[%s4 + $0x120] sm:$0xff] %v3989
    %5064 = vst [vmem:[%s4 + $0x128] sm:$0xff] %v3994
    %5065 = vst [vmem:[%s4 + $0x130] sm:$0xff] %v3999
    %5066 = vst [vmem:[%s4 + $0x138] sm:$0xff] %v4004
    %5067 = vst [vmem:[%s4 + $0x140] sm:$0xff] %v4009
    %5068 = vst [vmem:[%s4 + $0x148] sm:$0xff] %v4014
    %5069 = vst [vmem:[%s4 + $0x150] sm:$0xff] %v4019
    %5070 = vst [vmem:[%s4 + $0x158] sm:$0xff] %v4024
    %5071 = vst [vmem:[%s4 + $0x160] sm:$0xff] %v4029
    %5072 = vst [vmem:[%s4 + $0x168] sm:$0xff] %v4034
    %5073 = vst [vmem:[%s4 + $0x170] sm:$0xff] %v4039
    %5074 = vst [vmem:[%s4 + $0x178] sm:$0xff] %v4044
    %5075 = vst [vmem:[%s4 + $0x180] sm:$0xff] %v4165
    %5076 = vst [vmem:[%s4 + $0x188] sm:$0xff] %v4170
    %5077 = vst [vmem:[%s4 + $0x190] sm:$0xff] %v4175
    %5078 = vst [vmem:[%s4 + $0x198] sm:$0xff] %v4180
    %5079 = vst [vmem:[%s4 + $0x1a0] sm:$0xff] %v4185
    %5080 = vst [vmem:[%s4 + $0x1a8] sm:$0xff] %v4190
    %5081 = vst [vmem:[%s4 + $0x1b0] sm:$0xff] %v4195
    %5082 = vst [vmem:[%s4 + $0x1b8] sm:$0xff] %v4200
    %5083 = vst [vmem:[%s4 + $0x1c0] sm:$0xff] %v4205
    %5084 = vst [vmem:[%s4 + $0x1c8] sm:$0xff] %v4210
    %5085 = vst [vmem:[%s4 + $0x1d0] sm:$0xff] %v4215
    %5086 = vst [vmem:[%s4 + $0x1d8] sm:$0xff] %v4220
    %5087 = vst [vmem:[%s4 + $0x1e0] sm:$0xff] %v4225
    %5088 = vst [vmem:[%s4 + $0x1e8] sm:$0xff] %v4230
    %5089 = vst [vmem:[%s4 + $0x1f0] sm:$0xff] %v4235
    %5090 = vst [vmem:[%s4 + $0x1f8] sm:$0xff] %v4240
    %5091 = vst [vmem:[%s4 + $0x200] sm:$0xff] %v4361
    %5092 = vst [vmem:[%s4 + $0x208] sm:$0xff] %v4366
    %5093 = vst [vmem:[%s4 + $0x210] sm:$0xff] %v4371
    %5094 = vst [vmem:[%s4 + $0x218] sm:$0xff] %v4376
    %5095 = vst [vmem:[%s4 + $0x220] sm:$0xff] %v4381
    %5096 = vst [vmem:[%s4 + $0x228] sm:$0xff] %v4386
    %5097 = vst [vmem:[%s4 + $0x230] sm:$0xff] %v4391
    %5098 = vst [vmem:[%s4 + $0x238] sm:$0xff] %v4396
    %5099 = vst [vmem:[%s4 + $0x240] sm:$0xff] %v4401
    %5100 = vst [vmem:[%s4 + $0x248] sm:$0xff] %v4406
    %5101 = vst [vmem:[%s4 + $0x250] sm:$0xff] %v4411
    %5102 = vst [vmem:[%s4 + $0x258] sm:$0xff] %v4416
    %5103 = vst [vmem:[%s4 + $0x260] sm:$0xff] %v4421
    %5104 = vst [vmem:[%s4 + $0x268] sm:$0xff] %v4426
    %5105 = vst [vmem:[%s4 + $0x270] sm:$0xff] %v4431
    %5106 = vst [vmem:[%s4 + $0x278] sm:$0xff] %v4436
    %5107 = vst [vmem:[%s4 + $0x280] sm:$0xff] %v4557
    %5108 = vst [vmem:[%s4 + $0x288] sm:$0xff] %v4562
    %5109 = vst [vmem:[%s4 + $0x290] sm:$0xff] %v4567
    %5110 = vst [vmem:[%s4 + $0x298] sm:$0xff] %v4572
    %5111 = vst [vmem:[%s4 + $0x2a0] sm:$0xff] %v4577
    %5112 = vst [vmem:[%s4 + $0x2a8] sm:$0xff] %v4582
    %5113 = vst [vmem:[%s4 + $0x2b0] sm:$0xff] %v4587
    %5114 = vst [vmem:[%s4 + $0x2b8] sm:$0xff] %v4592
    %5115 = vst [vmem:[%s4 + $0x2c0] sm:$0xff] %v4597
    %5116 = vst [vmem:[%s4 + $0x2c8] sm:$0xff] %v4602
    %5117 = vst [vmem:[%s4 + $0x2d0] sm:$0xff] %v4607
    %5118 = vst [vmem:[%s4 + $0x2d8] sm:$0xff] %v4612
    %5119 = vst [vmem:[%s4 + $0x2e0] sm:$0xff] %v4617
    %5120 = vst [vmem:[%s4 + $0x2e8] sm:$0xff] %v4622
    %5121 = vst [vmem:[%s4 + $0x2f0] sm:$0xff] %v4627
    %5122 = vst [vmem:[%s4 + $0x2f8] sm:$0xff] %v4632
    %5123 = vst [vmem:[%s4 + $0x300] sm:$0xff] %v4753
    %5124 = vst [vmem:[%s4 + $0x308] sm:$0xff] %v4758
    %5125 = vst [vmem:[%s4 + $0x310] sm:$0xff] %v4763
    %5126 = vst [vmem:[%s4 + $0x318] sm:$0xff] %v4768
    %5127 = vst [vmem:[%s4 + $0x320] sm:$0xff] %v4773
    %5128 = vst [vmem:[%s4 + $0x328] sm:$0xff] %v4778
    %5129 = vst [vmem:[%s4 + $0x330] sm:$0xff] %v4783
    %5130 = vst [vmem:[%s4 + $0x338] sm:$0xff] %v4788
    %5131 = vst [vmem:[%s4 + $0x340] sm:$0xff] %v4793
    %5132 = vst [vmem:[%s4 + $0x348] sm:$0xff] %v4798
    %5133 = vst [vmem:[%s4 + $0x350] sm:$0xff] %v4803
    %5134 = vst [vmem:[%s4 + $0x358] sm:$0xff] %v4808
    %5135 = vst [vmem:[%s4 + $0x360] sm:$0xff] %v4813
    %5136 = vst [vmem:[%s4 + $0x368] sm:$0xff] %v4818
    %5137 = vst [vmem:[%s4 + $0x370] sm:$0xff] %v4823
    %5138 = vst [vmem:[%s4 + $0x378] sm:$0xff] %v4828
    %5139 = vst [vmem:[%s4 + $0x380] sm:$0xff] %v4949
    %5140 = vst [vmem:[%s4 + $0x388] sm:$0xff] %v4954
    %5141 = vst [vmem:[%s4 + $0x390] sm:$0xff] %v4959
    %5142 = vst [vmem:[%s4 + $0x398] sm:$0xff] %v4964
    %5143 = vst [vmem:[%s4 + $0x3a0] sm:$0xff] %v4969
    %5144 = vst [vmem:[%s4 + $0x3a8] sm:$0xff] %v4974
    %5145 = vst [vmem:[%s4 + $0x3b0] sm:$0xff] %v4979
    %5146 = vst [vmem:[%s4 + $0x3b8] sm:$0xff] %v4984
    %5147 = vst [vmem:[%s4 + $0x3c0] sm:$0xff] %v4989
    %5148 = vst [vmem:[%s4 + $0x3c8] sm:$0xff] %v4994
    %5149 = vst [vmem:[%s4 + $0x3d0] sm:$0xff] %v4999
    %5150 = vst [vmem:[%s4 + $0x3d8] sm:$0xff] %v5004
    %5151 = vst [vmem:[%s4 + $0x3e0] sm:$0xff] %v5009
    %5152 = vst [vmem:[%s4 + $0x3e8] sm:$0xff] %v5014
    %5153 = vst [vmem:[%s4 + $0x3f0] sm:$0xff] %v5019
    %5154 = vst [vmem:[%s4 + $0x3f8] sm:$0xff] %v5024
    // Predicated region
    $region26: #{_lora_hypnet_apply.1} parent=1 // pred_check
      _
    $region27: #{_lora_hypnet_apply.1} parent=1 // pred_check_branch
      %5156 = sbr.rel (0) target = $region29
    $region28: #{_lora_hypnet_apply.1} parent=1 // pred_region
      _
    $region29: #{_lora_hypnet_apply.1} parent=1 // pred_fallthru
      _
    // Predicated region
    $region30: #{_lora_hypnet_apply.1} parent=1 // pred_check
      _
    $region31: #{_lora_hypnet_apply.1} parent=1 // pred_check_branch
      %5158 = sbr.rel (0) target = $region33
    $region32: #{_lora_hypnet_apply.1} parent=1 // pred_region
      _
    $region33: #{_lora_hypnet_apply.1} parent=1 // pred_fallthru
      _
    // Predicated region
    $region34: #{_lora_hypnet_apply.1} parent=1 // pred_check
      _
    $region35: #{_lora_hypnet_apply.1} parent=1 // pred_check_branch
      %5160 = sbr.rel (0) target = $region37
    $region36: #{_lora_hypnet_apply.1} parent=1 // pred_region
      _
    $region37: #{_lora_hypnet_apply.1} parent=1 // pred_fallthru
      _
    // Predicated region
    $region38: #{_lora_hypnet_apply.1} parent=1 // pred_check
      _
    $region39: #{_lora_hypnet_apply.1} parent=1 // pred_check_branch
      %5162 = sbr.rel (0) target = $region41
    $region40: #{_lora_hypnet_apply.1} parent=1 // pred_region
      _
    $region41: #{_lora_hypnet_apply.1} parent=1 // pred_fallthru
      _
    %5163 = vsyncpa [#allocation7], 1
    %5164 = vsyncpa [#allocation9], 1

</llo_original>
